<compile_context>
chip_gen: v6e
topology: v6e:2x2x1
jax: 0.10.0
libtpu: 0.0.40
codegen_flags: <defaults>
</compile_context>

<pallas_src>
import functools
import math

import numpy as np
import jax
import jax.numpy as jnp
from jax.experimental import pallas as pl
from jax.experimental.pallas import tpu as pltpu

# ----------------------------- hyper-params ---------------------------------
VOCAB = 16
NUM_CLASSES = 5
HIDDEN = 32
NUM_LAYERS = 2
ATT_DIM = 64          # d_model
NHEAD = 8
HEAD_DIM = ATT_DIM // NHEAD
FFN = 256
PAD_IDX = 0
LN_EPS = 1e-5
OUT_PAD = 128         # lane-dense classifier output; wrapper slices to NUM_CLASSES
NEG_BIAS = 1e9        # masked-key bias (exp underflows to 0 after max-subtract)

# ------------------- single weight-slab layout (f32, 256 lanes) -------------
SLAB_W = 256
ROW_EMB = 0                              # emb_fused            [VOCAB, ATT_DIM]
ROW_LAYER0 = ROW_EMB + VOCAB             # 16
OFF_QKV = 0                              # (wq*s | wk | wv)^T   [ATT_DIM, 3*ATT_DIM] (lane-padded to 256)
OFF_WO = OFF_QKV + ATT_DIM               # wo^T                 [ATT_DIM, ATT_DIM]
OFF_W1 = OFF_WO + ATT_DIM                # w1^T                 [ATT_DIM, FFN]
OFF_W2 = OFF_W1 + ATT_DIM                # w2^T                 [FFN, ATT_DIM]
LAYER_ROWS = OFF_W2 + FFN                # 448 rows per layer
ROW_WOUT = ROW_LAYER0 + NUM_LAYERS * LAYER_ROWS   # 912: wout^T padded [ATT_DIM, OUT_PAD]
ROW_BIAS = ROW_WOUT + ATT_DIM                     # 976: bias rows, 8 per layer
BI_QKV, BI_B1, BI_BO, BI_N1W, BI_N1B, BI_B2, BI_N2W, BI_N2B = range(8)
ROW_BOUT = ROW_BIAS + NUM_LAYERS * 8              # 992
SLAB_ROWS = ROW_BOUT + 8                          # 1000 (8-row padded tail)


# ------------------------------- fused kernel --------------------------------
def _fused_forward_kernel(tok_ref, slab_ref, o_ref, *, B, S):
    BS = B * S

    def w(row, nrows, ncols):            # static VMEM window load from the slab
        return slab_ref[row:row + nrows, 0:ncols]

    def brow(row, ncols):                # [1, ncols] bias / LN row
        return slab_ref[row:row + 1, 0:ncols]

    def ln(v, g, b):
        mu = jnp.mean(v, axis=-1, keepdims=True)
        var = jnp.mean((v - mu) ** 2, axis=-1, keepdims=True)
        return (v - mu) * jax.lax.rsqrt(var + LN_EPS) * g + b

    def fseq(shape, dim):                # floor(index / S) via float ops (no int div)
        i = jax.lax.broadcasted_iota(jnp.int32, shape, dim).astype(jnp.float32)
        return jnp.floor(i / jnp.float32(S))

    tok = tok_ref[...]                                                   # [BS, 1] int32

    # ---- embedding ∘ linear_input as one fused [VOCAB, D] table --------------
    onehot = (jax.lax.broadcasted_iota(jnp.int32, (BS, VOCAB), 1) == tok).astype(jnp.float32)
    x = jnp.dot(onehot, w(ROW_EMB, VOCAB, ATT_DIM),
                preferred_element_type=jnp.float32)                      # [BS, D]

    # ---- attention bias over ALL BS keys: key valid AND same sequence --------
    # token_j == PAD as a lane-indexed matrix via one [BS,V]@[BS,V]^T matmul.
    padsel = (jax.lax.broadcasted_iota(jnp.int32, (BS, VOCAB), 1) == PAD_IDX).astype(jnp.float32)
    is_pad = jnp.einsum('iv,jv->ij', padsel, onehot,
                        preferred_element_type=jnp.float32)              # [BS,BS]: 1 if key j is PAD
    kv_lanes = 1.0 - is_pad
    same = (fseq((BS, BS), 0) == fseq((BS, BS), 1)).astype(jnp.float32)  # block-diagonal seq mask
    att_bias = jnp.broadcast_to(((same * kv_lanes) - 1.0) * jnp.float32(NEG_BIAS),
                                (NHEAD, BS, BS))                         # hoisted out of layer loop

    for l in range(NUM_LAYERS):          # static unroll; all weights resident in VMEM
        base = ROW_LAYER0 + l * LAYER_ROWS
        bb = ROW_BIAS + l * 8

        # -- fused QKV: ONE [BS,64]@[64,256] push (cols 192..255 are zero pad) --
        qkv = jnp.dot(x, w(base + OFF_QKV, ATT_DIM, SLAB_W),
                      preferred_element_type=jnp.float32) + brow(bb + BI_QKV, SLAB_W)
        # heads -> leading dim via static lane slices (lane-layout-safe)
        heads = jnp.stack([qkv[:, i * HEAD_DIM:(i + 1) * HEAD_DIM]
                           for i in range(3 * NHEAD)], axis=0)           # [24, BS, HD]
        q = heads[:NHEAD]
        k = heads[NHEAD:2 * NHEAD]
        v = heads[2 * NHEAD:3 * NHEAD]

        # -- scores over all BS keys; pad / cross-sequence keys masked out -----
        s = jnp.einsum('hqd,hkd->hqk', q, k,
                       preferred_element_type=jnp.float32) + att_bias    # [H, BS, BS]
        s = s - jnp.max(s, axis=-1, keepdims=True)
        e = jnp.exp(s)
        p = e / jnp.sum(e, axis=-1, keepdims=True)                       # exact division
        ctx = jnp.einsum('hqk,hkd->hqd', p, v,
                         preferred_element_type=jnp.float32)             # [H, BS, HD]

        # -- concat heads on lanes, ONE output-projection matmul ---------------
        ctx_flat = jnp.concatenate([ctx[h] for h in range(NHEAD)], axis=-1)  # [BS, D]
        attn = jnp.dot(ctx_flat, w(base + OFF_WO, ATT_DIM, ATT_DIM),
                       preferred_element_type=jnp.float32) + brow(bb + BI_BO, ATT_DIM)

        # -- post-norm residual 1, FFN (relu), post-norm residual 2 ------------
        y = ln(x + attn, brow(bb + BI_N1W, ATT_DIM), brow(bb + BI_N1B, ATT_DIM))
        hmid = jnp.maximum(
            jnp.dot(y, w(base + OFF_W1, ATT_DIM, FFN),
                    preferred_element_type=jnp.float32) + brow(bb + BI_B1, FFN), 0.0)
        ff = jnp.dot(hmid, w(base + OFF_W2, FFN, ATT_DIM),
                     preferred_element_type=jnp.float32) + brow(bb + BI_B2, ATT_DIM)
        x = ln(y + ff, brow(bb + BI_N2W, ATT_DIM), brow(bb + BI_N2B, ATT_DIM))

    # ---- masked mean pool per sequence + lane-padded classifier --------------
    sel = (fseq((B, BS), 1) ==
           jax.lax.broadcasted_iota(jnp.int32, (B, BS), 0).astype(jnp.float32)).astype(jnp.float32)
    pool_w = sel * kv_lanes[0:B, :]                                      # [B, BS]
    cnt = jnp.sum(pool_w, axis=-1, keepdims=True)                        # [B, 1]
    pooled = jnp.dot(pool_w, x, preferred_element_type=jnp.float32) / (cnt + 1e-9)
    o_ref[...] = (jnp.dot(pooled, w(ROW_WOUT, ATT_DIM, OUT_PAD),
                          preferred_element_type=jnp.float32) + brow(ROW_BOUT, OUT_PAD))


def model_forward(tokens, kp):
    """tokens: [B, S] int32; kp: kernel-layout params from prepare_params()."""
    B, S = tokens.shape
    tok_col = tokens.reshape(B * S, 1).astype(jnp.int32)   # free metadata reshape
    out = pl.pallas_call(
        functools.partial(_fused_forward_kernel, B=B, S=S),
        out_shape=jax.ShapeDtypeStruct((B, OUT_PAD), jnp.float32),
        in_specs=[pl.BlockSpec(memory_space=pltpu.MemorySpace.VMEM),
                  pl.BlockSpec(memory_space=pltpu.MemorySpace.VMEM)],
        out_specs=pl.BlockSpec(memory_space=pltpu.MemorySpace.VMEM),
    )(tok_col, kp['slab'])
    return out[:, :NUM_CLASSES]


# ------------------------------ parameters ----------------------------------
def init_params(key):
    """Torch-layout parameters (Linear weights are [out, in])."""
    ks = jax.random.split(key, 5 + NUM_LAYERS)

    def wr(k, shape, scale=0.05):
        return jax.random.normal(k, shape, jnp.float32) * scale

    emb = wr(ks[0], (VOCAB, HIDDEN), 0.1).at[PAD_IDX].set(0.0)
    params = dict(
        emb=emb,
        lin_in_w=wr(ks[1], (ATT_DIM, HIDDEN)),
        lin_in_b=wr(ks[2], (ATT_DIM,)),
        lin_out_w=wr(ks[3], (NUM_CLASSES, ATT_DIM)),
        lin_out_b=wr(ks[4], (NUM_CLASSES,)),
        layers=[],
    )
    for i in range(NUM_LAYERS):
        lk = jax.random.split(ks[5 + i], 10)
        params['layers'].append(dict(
            wq=wr(lk[0], (ATT_DIM, ATT_DIM)), bq=wr(lk[1], (ATT_DIM,)),
            wk=wr(lk[2], (ATT_DIM, ATT_DIM)), bk=wr(lk[3], (ATT_DIM,)),
            wv=wr(lk[4], (ATT_DIM, ATT_DIM)), bv=wr(lk[5], (ATT_DIM,)),
            wo=wr(lk[6], (ATT_DIM, ATT_DIM)), bo=jnp.zeros((ATT_DIM,), jnp.float32),
            n1w=jnp.ones((ATT_DIM,), jnp.float32), n1b=jnp.zeros((ATT_DIM,), jnp.float32),
            w1=wr(lk[7], (FFN, ATT_DIM)), b1=wr(lk[8], (FFN,)),
            w2=wr(lk[9], (ATT_DIM, FFN)), b2=jnp.zeros((ATT_DIM,), jnp.float32),
            n2w=jnp.ones((ATT_DIM,), jnp.float32), n2b=jnp.zeros((ATT_DIM,), jnp.float32),
        ))
    return params


def prepare_params(p):
    """One-time conversion to kernel layout: everything packed into a single
    f32 [SLAB_ROWS, 256] slab (fused emb∘linear_input table, fused QKV weight
    with 1/sqrt(HD) folded into the Q half, transposed [in,out] weights,
    biases as rows, lane-padded classifier head)."""
    scale = 1.0 / math.sqrt(HEAD_DIM)
    slab = jnp.zeros((SLAB_ROWS, SLAB_W), jnp.float32)

    def put(s, row, a):
        a = jnp.asarray(a, jnp.float32)
        return s.at[row:row + a.shape[0], 0:a.shape[1]].set(a)

    emb_fused = p['emb'] @ p['lin_in_w'].T + p['lin_in_b'][None, :]      # [VOCAB, D]
    slab = put(slab, ROW_EMB, emb_fused)

    for l, L in enumerate(p['layers']):
        base = ROW_LAYER0 + l * LAYER_ROWS
        bb = ROW_BIAS + l * 8
        wqkv_t = jnp.concatenate([L['wq'] * scale, L['wk'], L['wv']], axis=0).T   # [64, 192]
        bqkv = jnp.concatenate([L['bq'] * scale, L['bk'], L['bv']], axis=0)[None, :]
        slab = put(slab, base + OFF_QKV, wqkv_t)
        slab = put(slab, base + OFF_WO, L['wo'].T)
        slab = put(slab, base + OFF_W1, L['w1'].T)
        slab = put(slab, base + OFF_W2, L['w2'].T)
        slab = put(slab, bb + BI_QKV, bqkv)
        slab = put(slab, bb + BI_B1, L['b1'][None, :])
        slab = put(slab, bb + BI_BO, L['bo'][None, :])
        slab = put(slab, bb + BI_N1W, L['n1w'][None, :])
        slab = put(slab, bb + BI_N1B, L['n1b'][None, :])
        slab = put(slab, bb + BI_B2, L['b2'][None, :])
        slab = put(slab, bb + BI_N2W, L['n2w'][None, :])
        slab = put(slab, bb + BI_N2B, L['n2b'][None, :])

    wout_pad = jnp.zeros((ATT_DIM, OUT_PAD), jnp.float32).at[:, :NUM_CLASSES].set(p['lin_out_w'].T)
    bout_pad = jnp.zeros((1, OUT_PAD), jnp.float32).at[:, :NUM_CLASSES].set(p['lin_out_b'][None, :])
    slab = put(slab, ROW_WOUT, wout_pad)
    slab = put(slab, ROW_BOUT, bout_pad)
    return dict(slab=slab)


# ----------------------------- pure-JAX reference ----------------------------
def _ref_ln(v, g, b):
    mu = jnp.mean(v, axis=-1, keepdims=True)
    var = jnp.mean((v - mu) ** 2, axis=-1, keepdims=True)
    return (v - mu) * jax.lax.rsqrt(var + LN_EPS) * g + b


def _ref_layer(x, pad_f, L):
    B, S, D = x.shape
    q = (x @ L['wq'].T + L['bq']).reshape(B, S, NHEAD, HEAD_DIM)
    k = (x @ L['wk'].T + L['bk']).reshape(B, S, NHEAD, HEAD_DIM)
    v = (x @ L['wv'].T + L['bv']).reshape(B, S, NHEAD, HEAD_DIM)
    s = jnp.einsum('bqhd,bkhd->bhqk', q, k) / math.sqrt(HEAD_DIM)
    s = s + (pad_f * -1e30)[:, None, None, :]
    p = jax.nn.softmax(s, axis=-1)
    o = jnp.einsum('bhqk,bkhd->bqhd', p, v).reshape(B, S, D)
    o = o @ L['wo'].T + L['bo']
    x = _ref_ln(x + o, L['n1w'], L['n1b'])
    h = jax.nn.relu(x @ L['w1'].T + L['b1'])
    x = _ref_ln(x + (h @ L['w2'].T + L['b2']), L['n2w'], L['n2b'])
    return x


def reference_forward(tokens, params):
    pad = (tokens == PAD_IDX)
    pad_f = pad.astype(jnp.float32)
    x = params['emb'][tokens]
    x = x @ params['lin_in_w'].T + params['lin_in_b']
    for L in params['layers']:
        x = _ref_layer(x, pad_f, L)
    m = (~pad).astype(jnp.float32)[:, :, None]
    pooled = (x * m).sum(axis=1) / (m.sum(axis=1) + 1e-9)
    return pooled @ params['lin_out_w'].T + params['lin_out_b']


# ---------------------------------- main -------------------------------------
if __name__ == "__main__":
    key = jax.random.PRNGKey(0)
    pkey, tkey = jax.random.split(key)
    params = init_params(pkey)          # torch-layout (used by the reference)
    kparams = prepare_params(params)    # kernel-layout slab (built once)

    B, S = 2, 8
    content = jax.random.randint(tkey, (B, S), 1, VOCAB, dtype=jnp.int32)
    lengths = jnp.array([[6], [4]], dtype=jnp.int32)
    tokens = jnp.where(jnp.arange(S)[None, :] < lengths, content, PAD_IDX)

    fwd = jax.jit(model_forward)
    out = jax.block_until_ready(fwd(tokens, kparams))

    ref = reference_forward(tokens, params)
    np.testing.assert_allclose(np.asarray(out), np.asarray(ref),
                               rtol=2e-3, atol=2e-3)
    print("KERNEL_OK")
</pallas_src>

<mosaic_0001>
module attributes {stable_mosaic.version = 11 : i64} {
  func.func @_fused_forward_kernel(%arg0: memref<16x1xi32, #tpu.memory_space<vmem>>, %arg1: memref<1000x256xf32, #tpu.memory_space<vmem>>, %arg2: memref<2x128xf32, #tpu.memory_space<vmem>>) attributes {dimension_semantics = [], scalar_prefetch = 0 : i64, scratch_operands = 0 : i64, tpu.core_type = #tpu.core_type<tc>} {
    %c0 = arith.constant 0 : index
    %c0_0 = arith.constant 0 : index
    %0 = vector.load %arg0[%c0, %c0_0] : memref<16x1xi32, #tpu.memory_space<vmem>>, vector<16x1xi32>
    %1 = tpu.iota {dimensions = array<i32: 1>} : vector<16x16xi32>
    %2 = vector.broadcast %0 : vector<16x1xi32> to vector<16x16xi32>
    %3 = arith.cmpi eq, %1, %2 : vector<16x16xi32>
    %4 = arith.extui %3 : vector<16x16xi1> to vector<16x16xi32>
    %5 = arith.sitofp %4 : vector<16x16xi32> to vector<16x16xf32>
    %c0_1 = arith.constant 0 : index
    %c0_2 = arith.constant 0 : index
    %6 = vector.load %arg1[%c0_1, %c0_2] : memref<1000x256xf32, #tpu.memory_space<vmem>>, vector<16x64xf32>
    %cst = arith.constant dense<0.000000e+00> : vector<16x64xf32>
    %7 = tpu.matmul %5, %6, %cst {dimension_numbers = #tpu.dot_dimension_numbers<[1], [0], [0], [1], [0, 0, 1, 1], [], []>} : vector<16x16xf32>, vector<16x64xf32>, vector<16x64xf32> -> vector<16x64xf32>
    %8 = tpu.iota {dimensions = array<i32: 1>} : vector<16x16xi32>
    %c0_i32 = arith.constant 0 : i32
    %9 = vector.broadcast %c0_i32 : i32 to vector<16x16xi32>
    %10 = arith.cmpi eq, %8, %9 : vector<16x16xi32>
    %11 = arith.extui %10 : vector<16x16xi1> to vector<16x16xi32>
    %12 = arith.sitofp %11 : vector<16x16xi32> to vector<16x16xf32>
    "tpu.trace_start"() <{level = 10 : i32, message = "iv,jv->ij"}> : () -> ()
    %cst_3 = arith.constant dense<0.000000e+00> : vector<16x16xf32>
    %13 = tpu.matmul %12, %5, %cst_3 {dimension_numbers = #tpu.dot_dimension_numbers<[1], [1], [0], [0], [0, 0, 1, 0], [], []>} : vector<16x16xf32>, vector<16x16xf32>, vector<16x16xf32> -> vector<16x16xf32>
    "tpu.trace_stop"() : () -> ()
    %cst_4 = arith.constant 1.000000e+00 : f32
    %14 = vector.broadcast %cst_4 : f32 to vector<16x16xf32>
    %15 = arith.subf %14, %13 : vector<16x16xf32>
    %16 = tpu.iota {dimensions = array<i32: 0>} : vector<16x16xi32>
    %17 = arith.sitofp %16 : vector<16x16xi32> to vector<16x16xf32>
    %cst_5 = arith.constant 8.000000e+00 : f32
    %18 = vector.broadcast %cst_5 : f32 to vector<16x16xf32>
    %19 = arith.divf %17, %18 : vector<16x16xf32>
    %20 = math.floor %19 : vector<16x16xf32>
    %21 = tpu.iota {dimensions = array<i32: 1>} : vector<16x16xi32>
    %22 = arith.sitofp %21 : vector<16x16xi32> to vector<16x16xf32>
    %cst_6 = arith.constant 8.000000e+00 : f32
    %23 = vector.broadcast %cst_6 : f32 to vector<16x16xf32>
    %24 = arith.divf %22, %23 : vector<16x16xf32>
    %25 = math.floor %24 : vector<16x16xf32>
    %26 = arith.cmpf oeq, %20, %25 : vector<16x16xf32>
    %27 = arith.extui %26 : vector<16x16xi1> to vector<16x16xi32>
    %28 = arith.sitofp %27 : vector<16x16xi32> to vector<16x16xf32>
    %29 = arith.mulf %28, %15 : vector<16x16xf32>
    %cst_7 = arith.constant 1.000000e+00 : f32
    %30 = vector.broadcast %cst_7 : f32 to vector<16x16xf32>
    %31 = arith.subf %29, %30 : vector<16x16xf32>
    %cst_8 = arith.constant 1.000000e+09 : f32
    %32 = vector.broadcast %cst_8 : f32 to vector<16x16xf32>
    %33 = arith.mulf %31, %32 : vector<16x16xf32>
    %34 = vector.shape_cast %33 : vector<16x16xf32> to vector<1x16x16xf32>
    %35 = vector.broadcast %34 : vector<1x16x16xf32> to vector<8x16x16xf32>
    %c16 = arith.constant 16 : index
    %c0_9 = arith.constant 0 : index
    %36 = vector.load %arg1[%c16, %c0_9] : memref<1000x256xf32, #tpu.memory_space<vmem>>, vector<64x256xf32>
    %cst_10 = arith.constant dense<0.000000e+00> : vector<16x256xf32>
    %37 = tpu.matmul %7, %36, %cst_10 {dimension_numbers = #tpu.dot_dimension_numbers<[1], [0], [0], [1], [0, 0, 1, 1], [], []>} : vector<16x64xf32>, vector<64x256xf32>, vector<16x256xf32> -> vector<16x256xf32>
    %c976 = arith.constant 976 : index
    %c0_11 = arith.constant 0 : index
    %38 = vector.load %arg1[%c976, %c0_11] : memref<1000x256xf32, #tpu.memory_space<vmem>>, vector<1x256xf32>
    %39 = vector.broadcast %38 : vector<1x256xf32> to vector<16x256xf32>
    %40 = arith.addf %37, %39 : vector<16x256xf32>
    %41 = vector.extract_strided_slice %40 {offsets = [0, 0], sizes = [16, 8], strides = [1, 1]} : vector<16x256xf32> to vector<16x8xf32>
    %42 = vector.extract_strided_slice %40 {offsets = [0, 8], sizes = [16, 8], strides = [1, 1]} : vector<16x256xf32> to vector<16x8xf32>
    %43 = vector.extract_strided_slice %40 {offsets = [0, 16], sizes = [16, 8], strides = [1, 1]} : vector<16x256xf32> to vector<16x8xf32>
    %44 = vector.extract_strided_slice %40 {offsets = [0, 24], sizes = [16, 8], strides = [1, 1]} : vector<16x256xf32> to vector<16x8xf32>
    %45 = vector.extract_strided_slice %40 {offsets = [0, 32], sizes = [16, 8], strides = [1, 1]} : vector<16x256xf32> to vector<16x8xf32>
    %46 = vector.extract_strided_slice %40 {offsets = [0, 40], sizes = [16, 8], strides = [1, 1]} : vector<16x256xf32> to vector<16x8xf32>
    %47 = vector.extract_strided_slice %40 {offsets = [0, 48], sizes = [16, 8], strides = [1, 1]} : vector<16x256xf32> to vector<16x8xf32>
    %48 = vector.extract_strided_slice %40 {offsets = [0, 56], sizes = [16, 8], strides = [1, 1]} : vector<16x256xf32> to vector<16x8xf32>
    %49 = vector.extract_strided_slice %40 {offsets = [0, 64], sizes = [16, 8], strides = [1, 1]} : vector<16x256xf32> to vector<16x8xf32>
    %50 = vector.extract_strided_slice %40 {offsets = [0, 72], sizes = [16, 8], strides = [1, 1]} : vector<16x256xf32> to vector<16x8xf32>
    %51 = vector.extract_strided_slice %40 {offsets = [0, 80], sizes = [16, 8], strides = [1, 1]} : vector<16x256xf32> to vector<16x8xf32>
    %52 = vector.extract_strided_slice %40 {offsets = [0, 88], sizes = [16, 8], strides = [1, 1]} : vector<16x256xf32> to vector<16x8xf32>
    %53 = vector.extract_strided_slice %40 {offsets = [0, 96], sizes = [16, 8], strides = [1, 1]} : vector<16x256xf32> to vector<16x8xf32>
    %54 = vector.extract_strided_slice %40 {offsets = [0, 104], sizes = [16, 8], strides = [1, 1]} : vector<16x256xf32> to vector<16x8xf32>
    %55 = vector.extract_strided_slice %40 {offsets = [0, 112], sizes = [16, 8], strides = [1, 1]} : vector<16x256xf32> to vector<16x8xf32>
    %56 = vector.extract_strided_slice %40 {offsets = [0, 120], sizes = [16, 8], strides = [1, 1]} : vector<16x256xf32> to vector<16x8xf32>
    %57 = vector.extract_strided_slice %40 {offsets = [0, 128], sizes = [16, 8], strides = [1, 1]} : vector<16x256xf32> to vector<16x8xf32>
    %58 = vector.extract_strided_slice %40 {offsets = [0, 136], sizes = [16, 8], strides = [1, 1]} : vector<16x256xf32> to vector<16x8xf32>
    %59 = vector.extract_strided_slice %40 {offsets = [0, 144], sizes = [16, 8], strides = [1, 1]} : vector<16x256xf32> to vector<16x8xf32>
    %60 = vector.extract_strided_slice %40 {offsets = [0, 152], sizes = [16, 8], strides = [1, 1]} : vector<16x256xf32> to vector<16x8xf32>
    %61 = vector.extract_strided_slice %40 {offsets = [0, 160], sizes = [16, 8], strides = [1, 1]} : vector<16x256xf32> to vector<16x8xf32>
    %62 = vector.extract_strided_slice %40 {offsets = [0, 168], sizes = [16, 8], strides = [1, 1]} : vector<16x256xf32> to vector<16x8xf32>
    %63 = vector.extract_strided_slice %40 {offsets = [0, 176], sizes = [16, 8], strides = [1, 1]} : vector<16x256xf32> to vector<16x8xf32>
    %64 = vector.extract_strided_slice %40 {offsets = [0, 184], sizes = [16, 8], strides = [1, 1]} : vector<16x256xf32> to vector<16x8xf32>
    %65 = vector.shape_cast %41 : vector<16x8xf32> to vector<1x16x8xf32>
    %66 = vector.shape_cast %42 : vector<16x8xf32> to vector<1x16x8xf32>
    %67 = vector.shape_cast %43 : vector<16x8xf32> to vector<1x16x8xf32>
    %68 = vector.shape_cast %44 : vector<16x8xf32> to vector<1x16x8xf32>
    %69 = vector.shape_cast %45 : vector<16x8xf32> to vector<1x16x8xf32>
    %70 = vector.shape_cast %46 : vector<16x8xf32> to vector<1x16x8xf32>
    %71 = vector.shape_cast %47 : vector<16x8xf32> to vector<1x16x8xf32>
    %72 = vector.shape_cast %48 : vector<16x8xf32> to vector<1x16x8xf32>
    %73 = vector.shape_cast %49 : vector<16x8xf32> to vector<1x16x8xf32>
    %74 = vector.shape_cast %50 : vector<16x8xf32> to vector<1x16x8xf32>
    %75 = vector.shape_cast %51 : vector<16x8xf32> to vector<1x16x8xf32>
    %76 = vector.shape_cast %52 : vector<16x8xf32> to vector<1x16x8xf32>
    %77 = vector.shape_cast %53 : vector<16x8xf32> to vector<1x16x8xf32>
    %78 = vector.shape_cast %54 : vector<16x8xf32> to vector<1x16x8xf32>
    %79 = vector.shape_cast %55 : vector<16x8xf32> to vector<1x16x8xf32>
    %80 = vector.shape_cast %56 : vector<16x8xf32> to vector<1x16x8xf32>
    %81 = vector.shape_cast %57 : vector<16x8xf32> to vector<1x16x8xf32>
    %82 = vector.shape_cast %58 : vector<16x8xf32> to vector<1x16x8xf32>
    %83 = vector.shape_cast %59 : vector<16x8xf32> to vector<1x16x8xf32>
    %84 = vector.shape_cast %60 : vector<16x8xf32> to vector<1x16x8xf32>
    %85 = vector.shape_cast %61 : vector<16x8xf32> to vector<1x16x8xf32>
    %86 = vector.shape_cast %62 : vector<16x8xf32> to vector<1x16x8xf32>
    %87 = vector.shape_cast %63 : vector<16x8xf32> to vector<1x16x8xf32>
    %88 = vector.shape_cast %64 : vector<16x8xf32> to vector<1x16x8xf32>
    %89 = tpu.concatenate %65, %66, %67, %68, %69, %70, %71, %72, %73, %74, %75, %76, %77, %78, %79, %80 in 0 : vector<1x16x8xf32>, vector<1x16x8xf32>, vector<1x16x8xf32>, vector<1x16x8xf32>, vector<1x16x8xf32>, vector<1x16x8xf32>, vector<1x16x8xf32>, vector<1x16x8xf32>, vector<1x16x8xf32>, vector<1x16x8xf32>, vector<1x16x8xf32>, vector<1x16x8xf32>, vector<1x16x8xf32>, vector<1x16x8xf32>, vector<1x16x8xf32>, vector<1x16x8xf32> -> vector<16x16x8xf32>
    %90 = tpu.concatenate %81, %82, %83, %84, %85, %86, %87, %88 in 0 : vector<1x16x8xf32>, vector<1x16x8xf32>, vector<1x16x8xf32>, vector<1x16x8xf32>, vector<1x16x8xf32>, vector<1x16x8xf32>, vector<1x16x8xf32>, vector<1x16x8xf32> -> vector<8x16x8xf32>
    %91 = tpu.concatenate %89, %90 in 0 : vector<16x16x8xf32>, vector<8x16x8xf32> -> vector<24x16x8xf32>
    %92 = vector.extract_strided_slice %91 {offsets = [0, 0, 0], sizes = [8, 16, 8], strides = [1, 1, 1]} : vector<24x16x8xf32> to vector<8x16x8xf32>
    %93 = vector.extract_strided_slice %91 {offsets = [8, 0, 0], sizes = [8, 16, 8], strides = [1, 1, 1]} : vector<24x16x8xf32> to vector<8x16x8xf32>
    %94 = vector.extract_strided_slice %91 {offsets = [16, 0, 0], sizes = [8, 16, 8], strides = [1, 1, 1]} : vector<24x16x8xf32> to vector<8x16x8xf32>
    "tpu.trace_start"() <{level = 10 : i32, message = "hqd,hkd->hqk"}> : () -> ()
    %cst_12 = arith.constant dense<0.000000e+00> : vector<8x16x16xf32>
    %95 = tpu.matmul %92, %93, %cst_12 {dimension_numbers = #tpu.dot_dimension_numbers<[2], [2], [1], [1], [0, 0, 0, 1, 1, 1], [0], [0]>} : vector<8x16x8xf32>, vector<8x16x8xf32>, vector<8x16x16xf32> -> vector<8x16x16xf32>
    "tpu.trace_stop"() : () -> ()
    %96 = arith.addf %95, %35 : vector<8x16x16xf32>
    %cst_13 = arith.constant dense<0xFF800000> : vector<8x16xf32>
    %97 = vector.multi_reduction <maximumf>, %96, %cst_13 [2] : vector<8x16x16xf32> to vector<8x16xf32>
    %98 = vector.shape_cast %97 : vector<8x16xf32> to vector<8x16x1xf32>
    %99 = vector.broadcast %98 : vector<8x16x1xf32> to vector<8x16x16xf32>
    %100 = arith.subf %96, %99 : vector<8x16x16xf32>
    %101 = math.exp %100 : vector<8x16x16xf32>
    %cst_14 = arith.constant dense<0.000000e+00> : vector<8x16xf32>
    %102 = vector.multi_reduction <add>, %101, %cst_14 [2] : vector<8x16x16xf32> to vector<8x16xf32>
    %103 = vector.shape_cast %102 : vector<8x16xf32> to vector<8x16x1xf32>
    %104 = vector.broadcast %103 : vector<8x16x1xf32> to vector<8x16x16xf32>
    %105 = arith.divf %101, %104 : vector<8x16x16xf32>
    "tpu.trace_start"() <{level = 10 : i32, message = "hqk,hkd->hqd"}> : () -> ()
    %cst_15 = arith.constant dense<0.000000e+00> : vector<8x16x8xf32>
    %106 = tpu.matmul %105, %94, %cst_15 {dimension_numbers = #tpu.dot_dimension_numbers<[2], [1], [1], [2], [0, 0, 0, 1, 1, 2], [0], [0]>} : vector<8x16x16xf32>, vector<8x16x8xf32>, vector<8x16x8xf32> -> vector<8x16x8xf32>
    "tpu.trace_stop"() : () -> ()
    %107 = vector.extract_strided_slice %106 {offsets = [0, 0, 0], sizes = [1, 16, 8], strides = [1, 1, 1]} : vector<8x16x8xf32> to vector<1x16x8xf32>
    %108 = vector.shape_cast %107 : vector<1x16x8xf32> to vector<16x8xf32>
    %109 = vector.extract_strided_slice %106 {offsets = [1, 0, 0], sizes = [1, 16, 8], strides = [1, 1, 1]} : vector<8x16x8xf32> to vector<1x16x8xf32>
    %110 = vector.shape_cast %109 : vector<1x16x8xf32> to vector<16x8xf32>
    %111 = vector.extract_strided_slice %106 {offsets = [2, 0, 0], sizes = [1, 16, 8], strides = [1, 1, 1]} : vector<8x16x8xf32> to vector<1x16x8xf32>
    %112 = vector.shape_cast %111 : vector<1x16x8xf32> to vector<16x8xf32>
    %113 = vector.extract_strided_slice %106 {offsets = [3, 0, 0], sizes = [1, 16, 8], strides = [1, 1, 1]} : vector<8x16x8xf32> to vector<1x16x8xf32>
    %114 = vector.shape_cast %113 : vector<1x16x8xf32> to vector<16x8xf32>
    %115 = vector.extract_strided_slice %106 {offsets = [4, 0, 0], sizes = [1, 16, 8], strides = [1, 1, 1]} : vector<8x16x8xf32> to vector<1x16x8xf32>
    %116 = vector.shape_cast %115 : vector<1x16x8xf32> to vector<16x8xf32>
    %117 = vector.extract_strided_slice %106 {offsets = [5, 0, 0], sizes = [1, 16, 8], strides = [1, 1, 1]} : vector<8x16x8xf32> to vector<1x16x8xf32>
    %118 = vector.shape_cast %117 : vector<1x16x8xf32> to vector<16x8xf32>
    %119 = vector.extract_strided_slice %106 {offsets = [6, 0, 0], sizes = [1, 16, 8], strides = [1, 1, 1]} : vector<8x16x8xf32> to vector<1x16x8xf32>
    %120 = vector.shape_cast %119 : vector<1x16x8xf32> to vector<16x8xf32>
    %121 = vector.extract_strided_slice %106 {offsets = [7, 0, 0], sizes = [1, 16, 8], strides = [1, 1, 1]} : vector<8x16x8xf32> to vector<1x16x8xf32>
    %122 = vector.shape_cast %121 : vector<1x16x8xf32> to vector<16x8xf32>
    %123 = tpu.concatenate %108, %110, %112, %114, %116, %118, %120, %122 in 1 : vector<16x8xf32>, vector<16x8xf32>, vector<16x8xf32>, vector<16x8xf32>, vector<16x8xf32>, vector<16x8xf32>, vector<16x8xf32>, vector<16x8xf32> -> vector<16x64xf32>
    %c80 = arith.constant 80 : index
    %c0_16 = arith.constant 0 : index
    %124 = vector.load %arg1[%c80, %c0_16] : memref<1000x256xf32, #tpu.memory_space<vmem>>, vector<64x64xf32>
    %cst_17 = arith.constant dense<0.000000e+00> : vector<16x64xf32>
    %125 = tpu.matmul %123, %124, %cst_17 {dimension_numbers = #tpu.dot_dimension_numbers<[1], [0], [0], [1], [0, 0, 1, 1], [], []>} : vector<16x64xf32>, vector<64x64xf32>, vector<16x64xf32> -> vector<16x64xf32>
    %c978 = arith.constant 978 : index
    %c0_18 = arith.constant 0 : index
    %126 = vector.load %arg1[%c978, %c0_18] : memref<1000x256xf32, #tpu.memory_space<vmem>>, vector<1x64xf32>
    %127 = vector.broadcast %126 : vector<1x64xf32> to vector<16x64xf32>
    %128 = arith.addf %125, %127 : vector<16x64xf32>
    %129 = arith.addf %7, %128 : vector<16x64xf32>
    %c979 = arith.constant 979 : index
    %c0_19 = arith.constant 0 : index
    %130 = vector.load %arg1[%c979, %c0_19] : memref<1000x256xf32, #tpu.memory_space<vmem>>, vector<1x64xf32>
    %c980 = arith.constant 980 : index
    %c0_20 = arith.constant 0 : index
    %131 = vector.load %arg1[%c980, %c0_20] : memref<1000x256xf32, #tpu.memory_space<vmem>>, vector<1x64xf32>
    %cst_21 = arith.constant dense<0.000000e+00> : vector<16xf32>
    %132 = vector.multi_reduction <add>, %129, %cst_21 [1] : vector<16x64xf32> to vector<16xf32>
    %133 = vector.shape_cast %132 : vector<16xf32> to vector<16x1xf32>
    %cst_22 = arith.constant 6.400000e+01 : f32
    %134 = vector.broadcast %cst_22 : f32 to vector<16x1xf32>
    %135 = arith.divf %133, %134 : vector<16x1xf32>
    %136 = vector.broadcast %135 : vector<16x1xf32> to vector<16x64xf32>
    %137 = arith.subf %129, %136 : vector<16x64xf32>
    %138 = arith.mulf %137, %137 : vector<16x64xf32>
    %cst_23 = arith.constant dense<0.000000e+00> : vector<16xf32>
    %139 = vector.multi_reduction <add>, %138, %cst_23 [1] : vector<16x64xf32> to vector<16xf32>
    %140 = vector.shape_cast %139 : vector<16xf32> to vector<16x1xf32>
    %cst_24 = arith.constant 6.400000e+01 : f32
    %141 = vector.broadcast %cst_24 : f32 to vector<16x1xf32>
    %142 = arith.divf %140, %141 : vector<16x1xf32>
    %143 = vector.broadcast %135 : vector<16x1xf32> to vector<16x64xf32>
    %144 = arith.subf %129, %143 : vector<16x64xf32>
    %cst_25 = arith.constant 9.99999974E-6 : f32
    %145 = vector.broadcast %cst_25 : f32 to vector<16x1xf32>
    %146 = arith.addf %142, %145 : vector<16x1xf32>
    %147 = math.rsqrt %146 : vector<16x1xf32>
    %148 = vector.broadcast %147 : vector<16x1xf32> to vector<16x64xf32>
    %149 = arith.mulf %144, %148 : vector<16x64xf32>
    %150 = vector.broadcast %130 : vector<1x64xf32> to vector<16x64xf32>
    %151 = arith.mulf %149, %150 : vector<16x64xf32>
    %152 = vector.broadcast %131 : vector<1x64xf32> to vector<16x64xf32>
    %153 = arith.addf %151, %152 : vector<16x64xf32>
    %c144 = arith.constant 144 : index
    %c0_26 = arith.constant 0 : index
    %154 = vector.load %arg1[%c144, %c0_26] : memref<1000x256xf32, #tpu.memory_space<vmem>>, vector<64x256xf32>
    %cst_27 = arith.constant dense<0.000000e+00> : vector<16x256xf32>
    %155 = tpu.matmul %153, %154, %cst_27 {dimension_numbers = #tpu.dot_dimension_numbers<[1], [0], [0], [1], [0, 0, 1, 1], [], []>} : vector<16x64xf32>, vector<64x256xf32>, vector<16x256xf32> -> vector<16x256xf32>
    %c977 = arith.constant 977 : index
    %c0_28 = arith.constant 0 : index
    %156 = vector.load %arg1[%c977, %c0_28] : memref<1000x256xf32, #tpu.memory_space<vmem>>, vector<1x256xf32>
    %157 = vector.broadcast %156 : vector<1x256xf32> to vector<16x256xf32>
    %158 = arith.addf %155, %157 : vector<16x256xf32>
    %cst_29 = arith.constant 0.000000e+00 : f32
    %159 = vector.broadcast %cst_29 : f32 to vector<16x256xf32>
    %160 = arith.maximumf %158, %159 : vector<16x256xf32>
    %c208 = arith.constant 208 : index
    %c0_30 = arith.constant 0 : index
    %161 = vector.load %arg1[%c208, %c0_30] : memref<1000x256xf32, #tpu.memory_space<vmem>>, vector<256x64xf32>
    %cst_31 = arith.constant dense<0.000000e+00> : vector<16x64xf32>
    %162 = tpu.matmul %160, %161, %cst_31 {dimension_numbers = #tpu.dot_dimension_numbers<[1], [0], [0], [1], [0, 0, 1, 1], [], []>} : vector<16x256xf32>, vector<256x64xf32>, vector<16x64xf32> -> vector<16x64xf32>
    %c981 = arith.constant 981 : index
    %c0_32 = arith.constant 0 : index
    %163 = vector.load %arg1[%c981, %c0_32] : memref<1000x256xf32, #tpu.memory_space<vmem>>, vector<1x64xf32>
    %164 = vector.broadcast %163 : vector<1x64xf32> to vector<16x64xf32>
    %165 = arith.addf %162, %164 : vector<16x64xf32>
    %166 = arith.addf %153, %165 : vector<16x64xf32>
    %c982 = arith.constant 982 : index
    %c0_33 = arith.constant 0 : index
    %167 = vector.load %arg1[%c982, %c0_33] : memref<1000x256xf32, #tpu.memory_space<vmem>>, vector<1x64xf32>
    %c983 = arith.constant 983 : index
    %c0_34 = arith.constant 0 : index
    %168 = vector.load %arg1[%c983, %c0_34] : memref<1000x256xf32, #tpu.memory_space<vmem>>, vector<1x64xf32>
    %cst_35 = arith.constant dense<0.000000e+00> : vector<16xf32>
    %169 = vector.multi_reduction <add>, %166, %cst_35 [1] : vector<16x64xf32> to vector<16xf32>
    %170 = vector.shape_cast %169 : vector<16xf32> to vector<16x1xf32>
    %cst_36 = arith.constant 6.400000e+01 : f32
    %171 = vector.broadcast %cst_36 : f32 to vector<16x1xf32>
    %172 = arith.divf %170, %171 : vector<16x1xf32>
    %173 = vector.broadcast %172 : vector<16x1xf32> to vector<16x64xf32>
    %174 = arith.subf %166, %173 : vector<16x64xf32>
    %175 = arith.mulf %174, %174 : vector<16x64xf32>
    %cst_37 = arith.constant dense<0.000000e+00> : vector<16xf32>
    %176 = vector.multi_reduction <add>, %175, %cst_37 [1] : vector<16x64xf32> to vector<16xf32>
    %177 = vector.shape_cast %176 : vector<16xf32> to vector<16x1xf32>
    %cst_38 = arith.constant 6.400000e+01 : f32
    %178 = vector.broadcast %cst_38 : f32 to vector<16x1xf32>
    %179 = arith.divf %177, %178 : vector<16x1xf32>
    %180 = vector.broadcast %172 : vector<16x1xf32> to vector<16x64xf32>
    %181 = arith.subf %166, %180 : vector<16x64xf32>
    %cst_39 = arith.constant 9.99999974E-6 : f32
    %182 = vector.broadcast %cst_39 : f32 to vector<16x1xf32>
    %183 = arith.addf %179, %182 : vector<16x1xf32>
    %184 = math.rsqrt %183 : vector<16x1xf32>
    %185 = vector.broadcast %184 : vector<16x1xf32> to vector<16x64xf32>
    %186 = arith.mulf %181, %185 : vector<16x64xf32>
    %187 = vector.broadcast %167 : vector<1x64xf32> to vector<16x64xf32>
    %188 = arith.mulf %186, %187 : vector<16x64xf32>
    %189 = vector.broadcast %168 : vector<1x64xf32> to vector<16x64xf32>
    %190 = arith.addf %188, %189 : vector<16x64xf32>
    %c464 = arith.constant 464 : index
    %c0_40 = arith.constant 0 : index
    %191 = vector.load %arg1[%c464, %c0_40] : memref<1000x256xf32, #tpu.memory_space<vmem>>, vector<64x256xf32>
    %cst_41 = arith.constant dense<0.000000e+00> : vector<16x256xf32>
    %192 = tpu.matmul %190, %191, %cst_41 {dimension_numbers = #tpu.dot_dimension_numbers<[1], [0], [0], [1], [0, 0, 1, 1], [], []>} : vector<16x64xf32>, vector<64x256xf32>, vector<16x256xf32> -> vector<16x256xf32>
    %c984 = arith.constant 984 : index
    %c0_42 = arith.constant 0 : index
    %193 = vector.load %arg1[%c984, %c0_42] : memref<1000x256xf32, #tpu.memory_space<vmem>>, vector<1x256xf32>
    %194 = vector.broadcast %193 : vector<1x256xf32> to vector<16x256xf32>
    %195 = arith.addf %192, %194 : vector<16x256xf32>
    %196 = vector.extract_strided_slice %195 {offsets = [0, 0], sizes = [16, 8], strides = [1, 1]} : vector<16x256xf32> to vector<16x8xf32>
    %197 = vector.extract_strided_slice %195 {offsets = [0, 8], sizes = [16, 8], strides = [1, 1]} : vector<16x256xf32> to vector<16x8xf32>
    %198 = vector.extract_strided_slice %195 {offsets = [0, 16], sizes = [16, 8], strides = [1, 1]} : vector<16x256xf32> to vector<16x8xf32>
    %199 = vector.extract_strided_slice %195 {offsets = [0, 24], sizes = [16, 8], strides = [1, 1]} : vector<16x256xf32> to vector<16x8xf32>
    %200 = vector.extract_strided_slice %195 {offsets = [0, 32], sizes = [16, 8], strides = [1, 1]} : vector<16x256xf32> to vector<16x8xf32>
    %201 = vector.extract_strided_slice %195 {offsets = [0, 40], sizes = [16, 8], strides = [1, 1]} : vector<16x256xf32> to vector<16x8xf32>
    %202 = vector.extract_strided_slice %195 {offsets = [0, 48], sizes = [16, 8], strides = [1, 1]} : vector<16x256xf32> to vector<16x8xf32>
    %203 = vector.extract_strided_slice %195 {offsets = [0, 56], sizes = [16, 8], strides = [1, 1]} : vector<16x256xf32> to vector<16x8xf32>
    %204 = vector.extract_strided_slice %195 {offsets = [0, 64], sizes = [16, 8], strides = [1, 1]} : vector<16x256xf32> to vector<16x8xf32>
    %205 = vector.extract_strided_slice %195 {offsets = [0, 72], sizes = [16, 8], strides = [1, 1]} : vector<16x256xf32> to vector<16x8xf32>
    %206 = vector.extract_strided_slice %195 {offsets = [0, 80], sizes = [16, 8], strides = [1, 1]} : vector<16x256xf32> to vector<16x8xf32>
    %207 = vector.extract_strided_slice %195 {offsets = [0, 88], sizes = [16, 8], strides = [1, 1]} : vector<16x256xf32> to vector<16x8xf32>
    %208 = vector.extract_strided_slice %195 {offsets = [0, 96], sizes = [16, 8], strides = [1, 1]} : vector<16x256xf32> to vector<16x8xf32>
    %209 = vector.extract_strided_slice %195 {offsets = [0, 104], sizes = [16, 8], strides = [1, 1]} : vector<16x256xf32> to vector<16x8xf32>
    %210 = vector.extract_strided_slice %195 {offsets = [0, 112], sizes = [16, 8], strides = [1, 1]} : vector<16x256xf32> to vector<16x8xf32>
    %211 = vector.extract_strided_slice %195 {offsets = [0, 120], sizes = [16, 8], strides = [1, 1]} : vector<16x256xf32> to vector<16x8xf32>
    %212 = vector.extract_strided_slice %195 {offsets = [0, 128], sizes = [16, 8], strides = [1, 1]} : vector<16x256xf32> to vector<16x8xf32>
    %213 = vector.extract_strided_slice %195 {offsets = [0, 136], sizes = [16, 8], strides = [1, 1]} : vector<16x256xf32> to vector<16x8xf32>
    %214 = vector.extract_strided_slice %195 {offsets = [0, 144], sizes = [16, 8], strides = [1, 1]} : vector<16x256xf32> to vector<16x8xf32>
    %215 = vector.extract_strided_slice %195 {offsets = [0, 152], sizes = [16, 8], strides = [1, 1]} : vector<16x256xf32> to vector<16x8xf32>
    %216 = vector.extract_strided_slice %195 {offsets = [0, 160], sizes = [16, 8], strides = [1, 1]} : vector<16x256xf32> to vector<16x8xf32>
    %217 = vector.extract_strided_slice %195 {offsets = [0, 168], sizes = [16, 8], strides = [1, 1]} : vector<16x256xf32> to vector<16x8xf32>
    %218 = vector.extract_strided_slice %195 {offsets = [0, 176], sizes = [16, 8], strides = [1, 1]} : vector<16x256xf32> to vector<16x8xf32>
    %219 = vector.extract_strided_slice %195 {offsets = [0, 184], sizes = [16, 8], strides = [1, 1]} : vector<16x256xf32> to vector<16x8xf32>
    %220 = vector.shape_cast %196 : vector<16x8xf32> to vector<1x16x8xf32>
    %221 = vector.shape_cast %197 : vector<16x8xf32> to vector<1x16x8xf32>
    %222 = vector.shape_cast %198 : vector<16x8xf32> to vector<1x16x8xf32>
    %223 = vector.shape_cast %199 : vector<16x8xf32> to vector<1x16x8xf32>
    %224 = vector.shape_cast %200 : vector<16x8xf32> to vector<1x16x8xf32>
    %225 = vector.shape_cast %201 : vector<16x8xf32> to vector<1x16x8xf32>
    %226 = vector.shape_cast %202 : vector<16x8xf32> to vector<1x16x8xf32>
    %227 = vector.shape_cast %203 : vector<16x8xf32> to vector<1x16x8xf32>
    %228 = vector.shape_cast %204 : vector<16x8xf32> to vector<1x16x8xf32>
    %229 = vector.shape_cast %205 : vector<16x8xf32> to vector<1x16x8xf32>
    %230 = vector.shape_cast %206 : vector<16x8xf32> to vector<1x16x8xf32>
    %231 = vector.shape_cast %207 : vector<16x8xf32> to vector<1x16x8xf32>
    %232 = vector.shape_cast %208 : vector<16x8xf32> to vector<1x16x8xf32>
    %233 = vector.shape_cast %209 : vector<16x8xf32> to vector<1x16x8xf32>
    %234 = vector.shape_cast %210 : vector<16x8xf32> to vector<1x16x8xf32>
    %235 = vector.shape_cast %211 : vector<16x8xf32> to vector<1x16x8xf32>
    %236 = vector.shape_cast %212 : vector<16x8xf32> to vector<1x16x8xf32>
    %237 = vector.shape_cast %213 : vector<16x8xf32> to vector<1x16x8xf32>
    %238 = vector.shape_cast %214 : vector<16x8xf32> to vector<1x16x8xf32>
    %239 = vector.shape_cast %215 : vector<16x8xf32> to vector<1x16x8xf32>
    %240 = vector.shape_cast %216 : vector<16x8xf32> to vector<1x16x8xf32>
    %241 = vector.shape_cast %217 : vector<16x8xf32> to vector<1x16x8xf32>
    %242 = vector.shape_cast %218 : vector<16x8xf32> to vector<1x16x8xf32>
    %243 = vector.shape_cast %219 : vector<16x8xf32> to vector<1x16x8xf32>
    %244 = tpu.concatenate %220, %221, %222, %223, %224, %225, %226, %227, %228, %229, %230, %231, %232, %233, %234, %235 in 0 : vector<1x16x8xf32>, vector<1x16x8xf32>, vector<1x16x8xf32>, vector<1x16x8xf32>, vector<1x16x8xf32>, vector<1x16x8xf32>, vector<1x16x8xf32>, vector<1x16x8xf32>, vector<1x16x8xf32>, vector<1x16x8xf32>, vector<1x16x8xf32>, vector<1x16x8xf32>, vector<1x16x8xf32>, vector<1x16x8xf32>, vector<1x16x8xf32>, vector<1x16x8xf32> -> vector<16x16x8xf32>
    %245 = tpu.concatenate %236, %237, %238, %239, %240, %241, %242, %243 in 0 : vector<1x16x8xf32>, vector<1x16x8xf32>, vector<1x16x8xf32>, vector<1x16x8xf32>, vector<1x16x8xf32>, vector<1x16x8xf32>, vector<1x16x8xf32>, vector<1x16x8xf32> -> vector<8x16x8xf32>
    %246 = tpu.concatenate %244, %245 in 0 : vector<16x16x8xf32>, vector<8x16x8xf32> -> vector<24x16x8xf32>
    %247 = vector.extract_strided_slice %246 {offsets = [0, 0, 0], sizes = [8, 16, 8], strides = [1, 1, 1]} : vector<24x16x8xf32> to vector<8x16x8xf32>
    %248 = vector.extract_strided_slice %246 {offsets = [8, 0, 0], sizes = [8, 16, 8], strides = [1, 1, 1]} : vector<24x16x8xf32> to vector<8x16x8xf32>
    %249 = vector.extract_strided_slice %246 {offsets = [16, 0, 0], sizes = [8, 16, 8], strides = [1, 1, 1]} : vector<24x16x8xf32> to vector<8x16x8xf32>
    "tpu.trace_start"() <{level = 10 : i32, message = "hqd,hkd->hqk"}> : () -> ()
    %cst_43 = arith.constant dense<0.000000e+00> : vector<8x16x16xf32>
    %250 = tpu.matmul %247, %248, %cst_43 {dimension_numbers = #tpu.dot_dimension_numbers<[2], [2], [1], [1], [0, 0, 0, 1, 1, 1], [0], [0]>} : vector<8x16x8xf32>, vector<8x16x8xf32>, vector<8x16x16xf32> -> vector<8x16x16xf32>
    "tpu.trace_stop"() : () -> ()
    %251 = arith.addf %250, %35 : vector<8x16x16xf32>
    %cst_44 = arith.constant dense<0xFF800000> : vector<8x16xf32>
    %252 = vector.multi_reduction <maximumf>, %251, %cst_44 [2] : vector<8x16x16xf32> to vector<8x16xf32>
    %253 = vector.shape_cast %252 : vector<8x16xf32> to vector<8x16x1xf32>
    %254 = vector.broadcast %253 : vector<8x16x1xf32> to vector<8x16x16xf32>
    %255 = arith.subf %251, %254 : vector<8x16x16xf32>
    %256 = math.exp %255 : vector<8x16x16xf32>
    %cst_45 = arith.constant dense<0.000000e+00> : vector<8x16xf32>
    %257 = vector.multi_reduction <add>, %256, %cst_45 [2] : vector<8x16x16xf32> to vector<8x16xf32>
    %258 = vector.shape_cast %257 : vector<8x16xf32> to vector<8x16x1xf32>
    %259 = vector.broadcast %258 : vector<8x16x1xf32> to vector<8x16x16xf32>
    %260 = arith.divf %256, %259 : vector<8x16x16xf32>
    "tpu.trace_start"() <{level = 10 : i32, message = "hqk,hkd->hqd"}> : () -> ()
    %cst_46 = arith.constant dense<0.000000e+00> : vector<8x16x8xf32>
    %261 = tpu.matmul %260, %249, %cst_46 {dimension_numbers = #tpu.dot_dimension_numbers<[2], [1], [1], [2], [0, 0, 0, 1, 1, 2], [0], [0]>} : vector<8x16x16xf32>, vector<8x16x8xf32>, vector<8x16x8xf32> -> vector<8x16x8xf32>
    "tpu.trace_stop"() : () -> ()
    %262 = vector.extract_strided_slice %261 {offsets = [0, 0, 0], sizes = [1, 16, 8], strides = [1, 1, 1]} : vector<8x16x8xf32> to vector<1x16x8xf32>
    %263 = vector.shape_cast %262 : vector<1x16x8xf32> to vector<16x8xf32>
    %264 = vector.extract_strided_slice %261 {offsets = [1, 0, 0], sizes = [1, 16, 8], strides = [1, 1, 1]} : vector<8x16x8xf32> to vector<1x16x8xf32>
    %265 = vector.shape_cast %264 : vector<1x16x8xf32> to vector<16x8xf32>
    %266 = vector.extract_strided_slice %261 {offsets = [2, 0, 0], sizes = [1, 16, 8], strides = [1, 1, 1]} : vector<8x16x8xf32> to vector<1x16x8xf32>
    %267 = vector.shape_cast %266 : vector<1x16x8xf32> to vector<16x8xf32>
    %268 = vector.extract_strided_slice %261 {offsets = [3, 0, 0], sizes = [1, 16, 8], strides = [1, 1, 1]} : vector<8x16x8xf32> to vector<1x16x8xf32>
    %269 = vector.shape_cast %268 : vector<1x16x8xf32> to vector<16x8xf32>
    %270 = vector.extract_strided_slice %261 {offsets = [4, 0, 0], sizes = [1, 16, 8], strides = [1, 1, 1]} : vector<8x16x8xf32> to vector<1x16x8xf32>
    %271 = vector.shape_cast %270 : vector<1x16x8xf32> to vector<16x8xf32>
    %272 = vector.extract_strided_slice %261 {offsets = [5, 0, 0], sizes = [1, 16, 8], strides = [1, 1, 1]} : vector<8x16x8xf32> to vector<1x16x8xf32>
    %273 = vector.shape_cast %272 : vector<1x16x8xf32> to vector<16x8xf32>
    %274 = vector.extract_strided_slice %261 {offsets = [6, 0, 0], sizes = [1, 16, 8], strides = [1, 1, 1]} : vector<8x16x8xf32> to vector<1x16x8xf32>
    %275 = vector.shape_cast %274 : vector<1x16x8xf32> to vector<16x8xf32>
    %276 = vector.extract_strided_slice %261 {offsets = [7, 0, 0], sizes = [1, 16, 8], strides = [1, 1, 1]} : vector<8x16x8xf32> to vector<1x16x8xf32>
    %277 = vector.shape_cast %276 : vector<1x16x8xf32> to vector<16x8xf32>
    %278 = tpu.concatenate %263, %265, %267, %269, %271, %273, %275, %277 in 1 : vector<16x8xf32>, vector<16x8xf32>, vector<16x8xf32>, vector<16x8xf32>, vector<16x8xf32>, vector<16x8xf32>, vector<16x8xf32>, vector<16x8xf32> -> vector<16x64xf32>
    %c528 = arith.constant 528 : index
    %c0_47 = arith.constant 0 : index
    %279 = vector.load %arg1[%c528, %c0_47] : memref<1000x256xf32, #tpu.memory_space<vmem>>, vector<64x64xf32>
    %cst_48 = arith.constant dense<0.000000e+00> : vector<16x64xf32>
    %280 = tpu.matmul %278, %279, %cst_48 {dimension_numbers = #tpu.dot_dimension_numbers<[1], [0], [0], [1], [0, 0, 1, 1], [], []>} : vector<16x64xf32>, vector<64x64xf32>, vector<16x64xf32> -> vector<16x64xf32>
    %c986 = arith.constant 986 : index
    %c0_49 = arith.constant 0 : index
    %281 = vector.load %arg1[%c986, %c0_49] : memref<1000x256xf32, #tpu.memory_space<vmem>>, vector<1x64xf32>
    %282 = vector.broadcast %281 : vector<1x64xf32> to vector<16x64xf32>
    %283 = arith.addf %280, %282 : vector<16x64xf32>
    %284 = arith.addf %190, %283 : vector<16x64xf32>
    %c987 = arith.constant 987 : index
    %c0_50 = arith.constant 0 : index
    %285 = vector.load %arg1[%c987, %c0_50] : memref<1000x256xf32, #tpu.memory_space<vmem>>, vector<1x64xf32>
    %c988 = arith.constant 988 : index
    %c0_51 = arith.constant 0 : index
    %286 = vector.load %arg1[%c988, %c0_51] : memref<1000x256xf32, #tpu.memory_space<vmem>>, vector<1x64xf32>
    %cst_52 = arith.constant dense<0.000000e+00> : vector<16xf32>
    %287 = vector.multi_reduction <add>, %284, %cst_52 [1] : vector<16x64xf32> to vector<16xf32>
    %288 = vector.shape_cast %287 : vector<16xf32> to vector<16x1xf32>
    %cst_53 = arith.constant 6.400000e+01 : f32
    %289 = vector.broadcast %cst_53 : f32 to vector<16x1xf32>
    %290 = arith.divf %288, %289 : vector<16x1xf32>
    %291 = vector.broadcast %290 : vector<16x1xf32> to vector<16x64xf32>
    %292 = arith.subf %284, %291 : vector<16x64xf32>
    %293 = arith.mulf %292, %292 : vector<16x64xf32>
    %cst_54 = arith.constant dense<0.000000e+00> : vector<16xf32>
    %294 = vector.multi_reduction <add>, %293, %cst_54 [1] : vector<16x64xf32> to vector<16xf32>
    %295 = vector.shape_cast %294 : vector<16xf32> to vector<16x1xf32>
    %cst_55 = arith.constant 6.400000e+01 : f32
    %296 = vector.broadcast %cst_55 : f32 to vector<16x1xf32>
    %297 = arith.divf %295, %296 : vector<16x1xf32>
    %298 = vector.broadcast %290 : vector<16x1xf32> to vector<16x64xf32>
    %299 = arith.subf %284, %298 : vector<16x64xf32>
    %cst_56 = arith.constant 9.99999974E-6 : f32
    %300 = vector.broadcast %cst_56 : f32 to vector<16x1xf32>
    %301 = arith.addf %297, %300 : vector<16x1xf32>
    %302 = math.rsqrt %301 : vector<16x1xf32>
    %303 = vector.broadcast %302 : vector<16x1xf32> to vector<16x64xf32>
    %304 = arith.mulf %299, %303 : vector<16x64xf32>
    %305 = vector.broadcast %285 : vector<1x64xf32> to vector<16x64xf32>
    %306 = arith.mulf %304, %305 : vector<16x64xf32>
    %307 = vector.broadcast %286 : vector<1x64xf32> to vector<16x64xf32>
    %308 = arith.addf %306, %307 : vector<16x64xf32>
    %c592 = arith.constant 592 : index
    %c0_57 = arith.constant 0 : index
    %309 = vector.load %arg1[%c592, %c0_57] : memref<1000x256xf32, #tpu.memory_space<vmem>>, vector<64x256xf32>
    %cst_58 = arith.constant dense<0.000000e+00> : vector<16x256xf32>
    %310 = tpu.matmul %308, %309, %cst_58 {dimension_numbers = #tpu.dot_dimension_numbers<[1], [0], [0], [1], [0, 0, 1, 1], [], []>} : vector<16x64xf32>, vector<64x256xf32>, vector<16x256xf32> -> vector<16x256xf32>
    %c985 = arith.constant 985 : index
    %c0_59 = arith.constant 0 : index
    %311 = vector.load %arg1[%c985, %c0_59] : memref<1000x256xf32, #tpu.memory_space<vmem>>, vector<1x256xf32>
    %312 = vector.broadcast %311 : vector<1x256xf32> to vector<16x256xf32>
    %313 = arith.addf %310, %312 : vector<16x256xf32>
    %cst_60 = arith.constant 0.000000e+00 : f32
    %314 = vector.broadcast %cst_60 : f32 to vector<16x256xf32>
    %315 = arith.maximumf %313, %314 : vector<16x256xf32>
    %c656 = arith.constant 656 : index
    %c0_61 = arith.constant 0 : index
    %316 = vector.load %arg1[%c656, %c0_61] : memref<1000x256xf32, #tpu.memory_space<vmem>>, vector<256x64xf32>
    %cst_62 = arith.constant dense<0.000000e+00> : vector<16x64xf32>
    %317 = tpu.matmul %315, %316, %cst_62 {dimension_numbers = #tpu.dot_dimension_numbers<[1], [0], [0], [1], [0, 0, 1, 1], [], []>} : vector<16x256xf32>, vector<256x64xf32>, vector<16x64xf32> -> vector<16x64xf32>
    %c989 = arith.constant 989 : index
    %c0_63 = arith.constant 0 : index
    %318 = vector.load %arg1[%c989, %c0_63] : memref<1000x256xf32, #tpu.memory_space<vmem>>, vector<1x64xf32>
    %319 = vector.broadcast %318 : vector<1x64xf32> to vector<16x64xf32>
    %320 = arith.addf %317, %319 : vector<16x64xf32>
    %321 = arith.addf %308, %320 : vector<16x64xf32>
    %c990 = arith.constant 990 : index
    %c0_64 = arith.constant 0 : index
    %322 = vector.load %arg1[%c990, %c0_64] : memref<1000x256xf32, #tpu.memory_space<vmem>>, vector<1x64xf32>
    %c991 = arith.constant 991 : index
    %c0_65 = arith.constant 0 : index
    %323 = vector.load %arg1[%c991, %c0_65] : memref<1000x256xf32, #tpu.memory_space<vmem>>, vector<1x64xf32>
    %cst_66 = arith.constant dense<0.000000e+00> : vector<16xf32>
    %324 = vector.multi_reduction <add>, %321, %cst_66 [1] : vector<16x64xf32> to vector<16xf32>
    %325 = vector.shape_cast %324 : vector<16xf32> to vector<16x1xf32>
    %cst_67 = arith.constant 6.400000e+01 : f32
    %326 = vector.broadcast %cst_67 : f32 to vector<16x1xf32>
    %327 = arith.divf %325, %326 : vector<16x1xf32>
    %328 = vector.broadcast %327 : vector<16x1xf32> to vector<16x64xf32>
    %329 = arith.subf %321, %328 : vector<16x64xf32>
    %330 = arith.mulf %329, %329 : vector<16x64xf32>
    %cst_68 = arith.constant dense<0.000000e+00> : vector<16xf32>
    %331 = vector.multi_reduction <add>, %330, %cst_68 [1] : vector<16x64xf32> to vector<16xf32>
    %332 = vector.shape_cast %331 : vector<16xf32> to vector<16x1xf32>
    %cst_69 = arith.constant 6.400000e+01 : f32
    %333 = vector.broadcast %cst_69 : f32 to vector<16x1xf32>
    %334 = arith.divf %332, %333 : vector<16x1xf32>
    %335 = vector.broadcast %327 : vector<16x1xf32> to vector<16x64xf32>
    %336 = arith.subf %321, %335 : vector<16x64xf32>
    %cst_70 = arith.constant 9.99999974E-6 : f32
    %337 = vector.broadcast %cst_70 : f32 to vector<16x1xf32>
    %338 = arith.addf %334, %337 : vector<16x1xf32>
    %339 = math.rsqrt %338 : vector<16x1xf32>
    %340 = vector.broadcast %339 : vector<16x1xf32> to vector<16x64xf32>
    %341 = arith.mulf %336, %340 : vector<16x64xf32>
    %342 = vector.broadcast %322 : vector<1x64xf32> to vector<16x64xf32>
    %343 = arith.mulf %341, %342 : vector<16x64xf32>
    %344 = vector.broadcast %323 : vector<1x64xf32> to vector<16x64xf32>
    %345 = arith.addf %343, %344 : vector<16x64xf32>
    %346 = tpu.iota {dimensions = array<i32: 1>} : vector<2x16xi32>
    %347 = arith.sitofp %346 : vector<2x16xi32> to vector<2x16xf32>
    %cst_71 = arith.constant 8.000000e+00 : f32
    %348 = vector.broadcast %cst_71 : f32 to vector<2x16xf32>
    %349 = arith.divf %347, %348 : vector<2x16xf32>
    %350 = math.floor %349 : vector<2x16xf32>
    %351 = tpu.iota {dimensions = array<i32: 0>} : vector<2x16xi32>
    %352 = arith.sitofp %351 : vector<2x16xi32> to vector<2x16xf32>
    %353 = arith.cmpf oeq, %350, %352 : vector<2x16xf32>
    %354 = arith.extui %353 : vector<2x16xi1> to vector<2x16xi32>
    %355 = arith.sitofp %354 : vector<2x16xi32> to vector<2x16xf32>
    %356 = vector.extract_strided_slice %15 {offsets = [0, 0], sizes = [2, 16], strides = [1, 1]} : vector<16x16xf32> to vector<2x16xf32>
    %357 = arith.mulf %355, %356 : vector<2x16xf32>
    %cst_72 = arith.constant dense<0.000000e+00> : vector<2xf32>
    %358 = vector.multi_reduction <add>, %357, %cst_72 [1] : vector<2x16xf32> to vector<2xf32>
    %359 = vector.shape_cast %358 : vector<2xf32> to vector<2x1xf32>
    %cst_73 = arith.constant dense<0.000000e+00> : vector<2x64xf32>
    %360 = tpu.matmul %357, %345, %cst_73 {dimension_numbers = #tpu.dot_dimension_numbers<[1], [0], [0], [1], [0, 0, 1, 1], [], []>} : vector<2x16xf32>, vector<16x64xf32>, vector<2x64xf32> -> vector<2x64xf32>
    %cst_74 = arith.constant 9.99999971E-10 : f32
    %361 = vector.broadcast %cst_74 : f32 to vector<2x1xf32>
    %362 = arith.addf %359, %361 : vector<2x1xf32>
    %363 = vector.broadcast %362 : vector<2x1xf32> to vector<2x64xf32>
    %364 = arith.divf %360, %363 : vector<2x64xf32>
    %c912 = arith.constant 912 : index
    %c0_75 = arith.constant 0 : index
    %365 = vector.load %arg1[%c912, %c0_75] : memref<1000x256xf32, #tpu.memory_space<vmem>>, vector<64x128xf32>
    %cst_76 = arith.constant dense<0.000000e+00> : vector<2x128xf32>
    %366 = tpu.matmul %364, %365, %cst_76 {dimension_numbers = #tpu.dot_dimension_numbers<[1], [0], [0], [1], [0, 0, 1, 1], [], []>} : vector<2x64xf32>, vector<64x128xf32>, vector<2x128xf32> -> vector<2x128xf32>
    %c992 = arith.constant 992 : index
    %c0_77 = arith.constant 0 : index
    %367 = vector.load %arg1[%c992, %c0_77] : memref<1000x256xf32, #tpu.memory_space<vmem>>, vector<1x128xf32>
    %368 = vector.broadcast %367 : vector<1x128xf32> to vector<2x128xf32>
    %369 = arith.addf %366, %368 : vector<2x128xf32>
    %c0_78 = arith.constant 0 : index
    %c0_79 = arith.constant 0 : index
    %370 = vector.load %arg2[%c0_78, %c0_79] : memref<2x128xf32, #tpu.memory_space<vmem>>, vector<2x128xf32>
    tpu.vector_store %arg2[%c0_78, %c0_79], %369 {strides = array<i32>} : memref<2x128xf32, #tpu.memory_space<vmem>>, vector<2x128xf32>,
    return
  }
}

</mosaic_0001>

<llo_original>
// kernel: model_forward.1
$region0: #{model_forward.1}
  #allocation0 [shape = 'u32[]', space=smem, size = 0x4, offset = 0x4, fixed_abs, tag = 'smem constant byte address 0x4 - core index']
  #allocation1 [shape = 'u32[144,128]{1,0:T(1,128)}', space=vmem, size = 0x12000, scoped, tag = 'internal scratch']
  %s0 = inlined_call_operand.vmem [shape: s32[16,1], index: 0, kind: input, shape index: {}]
  %s1 = inlined_call_operand.hbm [shape: f32[1000,256], index: 1, kind: input, shape index: {}]
  %s2 = inlined_call_operand.hbm [shape: f32[2,128], index: 2, kind: output, shape index: {}]
  %s3 = sld [smem:[#allocation0]]
  $region22: #{model_forward.1} parent=0
    _
  %s5 = ssub.s32 1, %s3
  %s6 = scalar_select 0, %s5, %s3
  $region1: #{model_forward.1} parent=0
    #allocation2 [shape = 'u8[1024000]{0}', space=vmem, size = 0xfa000, scoped, tag = 'input window, operand 1, single buffered']
    #allocation3 [shape = 's32[1]{0}', space=sflag, size = 0x4, scoped, tag = 'scoped memory for model_forward.1']
    #allocation4 [shape = 's32[1]{0}', space=sflag, size = 0x4, scoped, tag = 'scoped memory for model_forward.1']
    #allocation5 [shape = 'u8[1024]{0}', space=vmem, size = 0x400, scoped, tag = 'output window, operand 0, single buffered']
    %7 = vsyncpa [#allocation3], 0
    %8 = vsyncpa [#allocation4], 0
    // Predicated region
    $region2: #{model_forward.1} parent=1 // pred_check
      _
    $region3: #{model_forward.1} parent=1 // pred_check_branch
      %10 = sbr.rel (0) target = $region5
    $region4: #{model_forward.1} parent=1 // pred_region
      _
    $region5: #{model_forward.1} parent=1 // pred_fallthru
      _
    // Predicated region
    $region6: #{model_forward.1} parent=1 // pred_check
      _
    $region7: #{model_forward.1} parent=1 // pred_check_branch
      %12 = sbr.rel (0) target = $region9
    $region8: #{model_forward.1} parent=1 // pred_region
      %s14 = ssub.s32 32000, 32000
      %15 = vsyncadd [#allocation3], %s14
      %s16 = sshll.u32 [#allocation2], 4
      %s17 = int_to_ptr.vmem [resolvable:$true] %s16
      %22 = dma.hbm_to_vmem [thread:$0]  %s1, 32000, %s17, [#allocation3], 256, 256, 16
    $region9: #{model_forward.1} parent=1 // pred_fallthru
      _
    // Predicated region
    $region10: #{model_forward.1} parent=1 // pred_check
      _
    $region11: #{model_forward.1} parent=1 // pred_check_branch
      %24 = sbr.rel (0) target = $region13
    $region12: #{model_forward.1} parent=1 // pred_region
      %25 = dma.done [#allocation3], 32000
    $region13: #{model_forward.1} parent=1 // pred_fallthru
      _
    %v26 = vld [vmem:[%s0] sm:$0xff]
    %v27 = vld [vmem:[%s0 + $0x8] sm:$0xff]
    %v28 = vlaneseq
    %v29 = vand.u32 %v28, 127
    %30 = vset.pattern.permute.xlu0 0
    %31 = vperm.xlu0 %30, %v26
    %v32 = vpop.permute.xlu0 %31
    %33 = vset.pattern.permute.xlu0 0
    %34 = vperm.xlu0 %33, %v27
    %v35 = vpop.permute.xlu0 %34
    %vm36 = vcmp.eq.s32.totalorder %v29, %v32
    %vm37 = vcmp.eq.s32.totalorder %v29, %v35
    %v38 = vsel %vm36, 1, 0
    %v39 = vsel %vm37, 1, 0
    %v40 = vcvt.s32.f32 %v38
    %v41 = vcvt.s32.f32 %v39
    %v42 = vld [vmem:[#allocation2] sm:$0xff]
    %v43 = vld [vmem:[#allocation2 + $0x10] sm:$0xff]
    %vm44 = vcmask 130048
    %v46 = vsel %vm44, %v40, 0
    %v49 = vsel %vm44, %v41, 0
    %51 = vmatprep.subr.mxu0 0.0
    %52 = vmatpush1.msra.mxu0 0.0
    %53 = vmatprep.subr.mxu0 0.0
    %54 = vmatpush1.msra.mxu0 0.0
    %55 = vmatprep.subr.mxu0 0.0
    %56 = vmatpush1.msra.mxu0 0.0
    %57 = vmatprep.subr.mxu0 0.0
    %58 = vmatpush1.msra.mxu0 0.0
    %59 = vmatprep.subr.mxu0 0.0
    %60 = vmatpush1.msra.mxu0 0.0
    %61 = vmatprep.subr.mxu0 0.0
    %62 = vmatpush1.msra.mxu0 0.0
    %63 = vmatprep.subr.mxu0 0.0
    %64 = vmatpush1.msra.mxu0 0.0
    %65 = vmatprep.subr.mxu0 0.0
    %66 = vmatpush1.msra.mxu0 0.0
    %67 = vmatprep.subr.mxu0 0.0
    %68 = vmatpush1.msra.mxu0 0.0
    %69 = vmatprep.subr.mxu0 0.0
    %70 = vmatpush1.msra.mxu0 0.0
    %71 = vmatprep.subr.mxu0 0.0
    %72 = vmatpush1.msra.mxu0 0.0
    %73 = vmatprep.subr.mxu0 0.0
    %74 = vmatpush1.msra.mxu0 0.0
    %75 = vmatprep.subr.mxu0 0.0
    %76 = vmatpush1.msra.mxu0 0.0
    %77 = vmatprep.subr.mxu0 0.0
    %78 = vmatpush1.msra.mxu0 0.0
    %79 = vmatprep.subr.mxu0 0.0
    %80 = vmatpush1.msra.mxu0 %v43
    %81 = vmatprep.subr.mxu0 0.0
    %82 = vmatpush1.msra.mxu0 %v42
    %83 = vmatprep.subr.mxu0 0.0
    %84 = vmatpush2.msra.mxu0 0.0
    %85 = vmatprep.subr.mxu0 0.0
    %86 = vmatpush2.msra.mxu0 0.0
    %87 = vmatprep.subr.mxu0 0.0
    %88 = vmatpush2.msra.mxu0 0.0
    %89 = vmatprep.subr.mxu0 0.0
    %90 = vmatpush2.msra.mxu0 0.0
    %91 = vmatprep.subr.mxu0 0.0
    %92 = vmatpush2.msra.mxu0 0.0
    %93 = vmatprep.subr.mxu0 0.0
    %94 = vmatpush2.msra.mxu0 0.0
    %95 = vmatprep.subr.mxu0 0.0
    %96 = vmatpush2.msra.mxu0 0.0
    %97 = vmatprep.subr.mxu0 0.0
    %98 = vmatpush2.msra.mxu0 0.0
    %99 = vmatprep.subr.mxu0 0.0
    %100 = vmatpush2.msra.mxu0 0.0
    %101 = vmatprep.subr.mxu0 0.0
    %102 = vmatpush2.msra.mxu0 0.0
    %103 = vmatprep.subr.mxu0 0.0
    %104 = vmatpush2.msra.mxu0 0.0
    %105 = vmatprep.subr.mxu0 0.0
    %106 = vmatpush2.msra.mxu0 0.0
    %107 = vmatprep.subr.mxu0 0.0
    %108 = vmatpush2.msra.mxu0 0.0
    %109 = vmatprep.subr.mxu0 0.0
    %110 = vmatpush2.msra.mxu0 0.0
    %111 = vmatprep.subr.mxu0 0.0
    %112 = vmatpush2.msra.mxu0 0.0
    %113 = vmatprep.subr.mxu0 0.0
    %114 = vmatpush2.msra.mxu0 0.0
    %115 = vmatprep.mubr.f32.mxu0 0.0
    %116 = vmatmul.mubr.f32.gmra.mxu0 %v46
    %v117 = vpop.f32.mrf.mxu0
    %v118 = vadd.f32 0.0, %v117
    %v119 = vpop.f32.mrf.mxu0
    %120 = vmatprep.mubr.f32.mxu0 0.0
    %121 = vmatmul.mubr.f32.gmra.mxu0 %v49
    %v122 = vpop.f32.mrf.mxu0
    %v123 = vadd.f32 0.0, %v122
    %v124 = vpop.f32.mrf.mxu0
    %125 = vdwg.mxu0
    %vm126 = vcmp.eq.s32.totalorder %v29, 0
    %v127 = vsel %vm126, 1, 0
    %v128 = vcvt.s32.f32 %v127
    %v130 = vsel %vm44, %v128, 0
    %132 = vmatprep.subr.mxu0 0.0
    %133 = vmatpush1.xpose.msra.mxu0 0.0
    %134 = vmatprep.subr.mxu0 0.0
    %135 = vmatpush1.xpose.msra.mxu0 0.0
    %136 = vmatprep.subr.mxu0 0.0
    %137 = vmatpush1.xpose.msra.mxu0 0.0
    %138 = vmatprep.subr.mxu0 0.0
    %139 = vmatpush1.xpose.msra.mxu0 0.0
    %140 = vmatprep.subr.mxu0 0.0
    %141 = vmatpush1.xpose.msra.mxu0 0.0
    %142 = vmatprep.subr.mxu0 0.0
    %143 = vmatpush1.xpose.msra.mxu0 0.0
    %144 = vmatprep.subr.mxu0 0.0
    %145 = vmatpush1.xpose.msra.mxu0 0.0
    %146 = vmatprep.subr.mxu0 0.0
    %147 = vmatpush1.xpose.msra.mxu0 0.0
    %148 = vmatprep.subr.mxu0 0.0
    %149 = vmatpush1.xpose.msra.mxu0 0.0
    %150 = vmatprep.subr.mxu0 0.0
    %151 = vmatpush1.xpose.msra.mxu0 0.0
    %152 = vmatprep.subr.mxu0 0.0
    %153 = vmatpush1.xpose.msra.mxu0 0.0
    %154 = vmatprep.subr.mxu0 0.0
    %155 = vmatpush1.xpose.msra.mxu0 0.0
    %156 = vmatprep.subr.mxu0 0.0
    %157 = vmatpush1.xpose.msra.mxu0 0.0
    %158 = vmatprep.subr.mxu0 0.0
    %159 = vmatpush1.xpose.msra.mxu0 0.0
    %160 = vmatprep.subr.mxu0 0.0
    %161 = vmatpush1.xpose.msra.mxu0 %v49
    %162 = vmatprep.subr.mxu0 0.0
    %163 = vmatpush1.xpose.msra.mxu0 %v46
    %164 = vmatprep.subr.mxu0 0.0
    %165 = vmatpush2.xpose.msra.mxu0 0.0
    %166 = vmatprep.subr.mxu0 0.0
    %167 = vmatpush2.xpose.msra.mxu0 0.0
    %168 = vmatprep.subr.mxu0 0.0
    %169 = vmatpush2.xpose.msra.mxu0 0.0
    %170 = vmatprep.subr.mxu0 0.0
    %171 = vmatpush2.xpose.msra.mxu0 0.0
    %172 = vmatprep.subr.mxu0 0.0
    %173 = vmatpush2.xpose.msra.mxu0 0.0
    %174 = vmatprep.subr.mxu0 0.0
    %175 = vmatpush2.xpose.msra.mxu0 0.0
    %176 = vmatprep.subr.mxu0 0.0
    %177 = vmatpush2.xpose.msra.mxu0 0.0
    %178 = vmatprep.subr.mxu0 0.0
    %179 = vmatpush2.xpose.msra.mxu0 0.0
    %180 = vmatprep.subr.mxu0 0.0
    %181 = vmatpush2.xpose.msra.mxu0 0.0
    %182 = vmatprep.subr.mxu0 0.0
    %183 = vmatpush2.xpose.msra.mxu0 0.0
    %184 = vmatprep.subr.mxu0 0.0
    %185 = vmatpush2.xpose.msra.mxu0 0.0
    %186 = vmatprep.subr.mxu0 0.0
    %187 = vmatpush2.xpose.msra.mxu0 0.0
    %188 = vmatprep.subr.mxu0 0.0
    %189 = vmatpush2.xpose.msra.mxu0 0.0
    %190 = vmatprep.subr.mxu0 0.0
    %191 = vmatpush2.xpose.msra.mxu0 0.0
    %192 = vmatprep.subr.mxu0 0.0
    %193 = vmatpush2.xpose.msra.mxu0 0.0
    %194 = vmatprep.subr.mxu0 0.0
    %195 = vmatpush2.xpose.msra.mxu0 0.0
    %196 = vmatprep.mubr.f32.mxu0 0.0
    %197 = vmatmul.mubr.f32.gmra.mxu0 %v130
    %v198 = vpop.f32.mrf.mxu0
    %v199 = vadd.f32 0.0, %v198
    %v200 = vpop.f32.mrf.mxu0
    %201 = vmatprep.mubr.f32.mxu0 0.0
    %202 = vmatmul.mubr.f32.gmra.mxu0 %v130
    %v203 = vpop.f32.mrf.mxu0
    %v204 = vadd.f32 0.0, %v203
    %v205 = vpop.f32.mrf.mxu0
    %206 = vdwg.mxu0
    %v207 = vsub.f32 1.0, %v199
    %v208 = vsub.f32 1.0, %v204
    %v209 = vlaneseq
    %v210 = vshrl.u32 %v209, 7
    %v211 = vadd.s32 %v210, 8
    %v212 = vcvt.s32.f32 %v210
    %v213 = vcvt.s32.f32 %v211
    %v214 = vrcp.pop 8.0
    %v215 = vmul.f32 %v212, %v214
    %v216 = vmul.f32 %v213, %v214
    %v217 = vfloor.f32 %v215
    %v218 = vfloor.f32 %v216
    %v219 = vcvt.s32.f32 %v29
    %v220 = vmul.f32 %v219, %v214
    %v221 = vfloor.f32 %v220
    %vm222 = vcmp.eq.f32.partialorder %v217, %v221
    %vm223 = vcmp.eq.f32.partialorder %v218, %v221
    %v224 = vsel %vm222, 1, 0
    %v225 = vsel %vm223, 1, 0
    %v226 = vcvt.s32.f32 %v224
    %v227 = vcvt.s32.f32 %v225
    %v228 = vmul.f32 %v226, %v207
    %v229 = vmul.f32 %v227, %v208
    %v230 = vsub.f32 %v228, 1.0
    %v231 = vsub.f32 %v229, 1.0
    %v232 = vmul.f32 %v230, 1e+09
    %v233 = vmul.f32 %v231, 1e+09
    %v234 = vld [vmem:[#allocation2 + $0x20] sm:$0xff]
    %v235 = vld [vmem:[#allocation2 + $0x28] sm:$0xff]
    %v236 = vld [vmem:[#allocation2 + $0x30] sm:$0xff]
    %v237 = vld [vmem:[#allocation2 + $0x38] sm:$0xff]
    %v238 = vld [vmem:[#allocation2 + $0x40] sm:$0xff]
    %v239 = vld [vmem:[#allocation2 + $0x48] sm:$0xff]
    %v240 = vld [vmem:[#allocation2 + $0x50] sm:$0xff]
    %v241 = vld [vmem:[#allocation2 + $0x58] sm:$0xff]
    %v242 = vld [vmem:[#allocation2 + $0x60] sm:$0xff]
    %v243 = vld [vmem:[#allocation2 + $0x68] sm:$0xff]
    %v244 = vld [vmem:[#allocation2 + $0x70] sm:$0xff]
    %v245 = vld [vmem:[#allocation2 + $0x78] sm:$0xff]
    %v246 = vld [vmem:[#allocation2 + $0x80] sm:$0xff]
    %v247 = vld [vmem:[#allocation2 + $0x88] sm:$0xff]
    %v248 = vld [vmem:[#allocation2 + $0x90] sm:$0xff]
    %v249 = vld [vmem:[#allocation2 + $0x98] sm:$0xff]
    %s250 = scalar_lea.vmem [#allocation2], 1952
    %v251 = vld [vmem:[%s250] ss:$8 sm:$0x3]
    %v253 = vlaneseq
    %v254 = vshrl.u32 %v253, 7
    %v255 = vsub.s32 0, %v254
    %v256 = vrot.slane %v251, %v255
    %v257 = vlaneseq
    %v258 = vshrl.u32 %v257, 7
    %v259 = vsub.s32 1, %v258
    %v260 = vrot.slane %v251, %v259
    %vm263 = vcmask 523264
    %v265 = vsel %vm263, %v118, 0
    %v268 = vsel %vm263, %v123, 0
    %270 = vmatprep.subr.mxu0 0.0
    %271 = vmatpush1.msra.mxu0 0.0
    %272 = vmatprep.subr.mxu0 0.0
    %273 = vmatpush1.msra.mxu0 0.0
    %274 = vmatprep.subr.mxu0 0.0
    %275 = vmatpush1.msra.mxu0 0.0
    %276 = vmatprep.subr.mxu0 0.0
    %277 = vmatpush1.msra.mxu0 0.0
    %278 = vmatprep.subr.mxu0 0.0
    %279 = vmatpush1.msra.mxu0 0.0
    %280 = vmatprep.subr.mxu0 0.0
    %281 = vmatpush1.msra.mxu0 0.0
    %282 = vmatprep.subr.mxu0 0.0
    %283 = vmatpush1.msra.mxu0 0.0
    %284 = vmatprep.subr.mxu0 0.0
    %285 = vmatpush1.msra.mxu0 0.0
    %286 = vmatprep.subr.mxu0 %v249
    %287 = vmatpush1.msra.mxu0 %v248
    %288 = vmatprep.subr.mxu0 %v247
    %289 = vmatpush1.msra.mxu0 %v246
    %290 = vmatprep.subr.mxu0 %v245
    %291 = vmatpush1.msra.mxu0 %v244
    %292 = vmatprep.subr.mxu0 %v243
    %293 = vmatpush1.msra.mxu0 %v242
    %294 = vmatprep.subr.mxu0 %v241
    %295 = vmatpush1.msra.mxu0 %v240
    %296 = vmatprep.subr.mxu0 %v239
    %297 = vmatpush1.msra.mxu0 %v238
    %298 = vmatprep.subr.mxu0 %v237
    %299 = vmatpush1.msra.mxu0 %v236
    %300 = vmatprep.subr.mxu0 %v235
    %301 = vmatpush1.msra.mxu0 %v234
    %302 = vmatprep.subr.mxu0 0.0
    %303 = vmatpush2.msra.mxu0 0.0
    %304 = vmatprep.subr.mxu0 0.0
    %305 = vmatpush2.msra.mxu0 0.0
    %306 = vmatprep.subr.mxu0 0.0
    %307 = vmatpush2.msra.mxu0 0.0
    %308 = vmatprep.subr.mxu0 0.0
    %309 = vmatpush2.msra.mxu0 0.0
    %310 = vmatprep.subr.mxu0 0.0
    %311 = vmatpush2.msra.mxu0 0.0
    %312 = vmatprep.subr.mxu0 0.0
    %313 = vmatpush2.msra.mxu0 0.0
    %314 = vmatprep.subr.mxu0 0.0
    %315 = vmatpush2.msra.mxu0 0.0
    %316 = vmatprep.subr.mxu0 0.0
    %317 = vmatpush2.msra.mxu0 0.0
    %318 = vmatprep.subr.mxu0 0.0
    %319 = vmatpush2.msra.mxu0 0.0
    %320 = vmatprep.subr.mxu0 0.0
    %321 = vmatpush2.msra.mxu0 0.0
    %322 = vmatprep.subr.mxu0 0.0
    %323 = vmatpush2.msra.mxu0 0.0
    %324 = vmatprep.subr.mxu0 0.0
    %325 = vmatpush2.msra.mxu0 0.0
    %326 = vmatprep.subr.mxu0 0.0
    %327 = vmatpush2.msra.mxu0 0.0
    %328 = vmatprep.subr.mxu0 0.0
    %329 = vmatpush2.msra.mxu0 0.0
    %330 = vmatprep.subr.mxu0 0.0
    %331 = vmatpush2.msra.mxu0 0.0
    %332 = vmatprep.subr.mxu0 0.0
    %333 = vmatpush2.msra.mxu0 0.0
    %334 = vmatprep.mubr.f32.mxu0 0.0
    %335 = vmatmul.mubr.f32.gmra.mxu0 %v265
    %v336 = vpop.f32.mrf.mxu0
    %v337 = vadd.f32 %v256, %v336
    %v338 = vpop.f32.mrf.mxu0
    %v339 = vadd.f32 %v260, %v338
    %340 = vmatprep.mubr.f32.mxu0 0.0
    %341 = vmatmul.mubr.f32.gmra.mxu0 %v268
    %v342 = vpop.f32.mrf.mxu0
    %v343 = vadd.f32 %v256, %v342
    %v344 = vpop.f32.mrf.mxu0
    %v345 = vadd.f32 %v260, %v344
    %346 = vdwg.mxu0
    %349 = vrot.lane.b32.xlu0 %v337, 120
    %v350 = vpop.permute.xlu0 %349
    %351 = vrot.lane.b32.xlu0 %v343, 120
    %v352 = vpop.permute.xlu0 %351
    %353 = vrot.lane.b32.xlu0 %v337, 112
    %v354 = vpop.permute.xlu0 %353
    %355 = vrot.lane.b32.xlu0 %v343, 112
    %v356 = vpop.permute.xlu0 %355
    %357 = vrot.lane.b32.xlu0 %v337, 104
    %v358 = vpop.permute.xlu0 %357
    %359 = vrot.lane.b32.xlu0 %v343, 104
    %v360 = vpop.permute.xlu0 %359
    %361 = vrot.lane.b32.xlu0 %v337, 96
    %v362 = vpop.permute.xlu0 %361
    %363 = vrot.lane.b32.xlu0 %v343, 96
    %v364 = vpop.permute.xlu0 %363
    %365 = vrot.lane.b32.xlu0 %v337, 88
    %v366 = vpop.permute.xlu0 %365
    %367 = vrot.lane.b32.xlu0 %v343, 88
    %v368 = vpop.permute.xlu0 %367
    %369 = vrot.lane.b32.xlu0 %v337, 80
    %v370 = vpop.permute.xlu0 %369
    %371 = vrot.lane.b32.xlu0 %v343, 80
    %v372 = vpop.permute.xlu0 %371
    %373 = vrot.lane.b32.xlu0 %v337, 72
    %v374 = vpop.permute.xlu0 %373
    %375 = vrot.lane.b32.xlu0 %v343, 72
    %v376 = vpop.permute.xlu0 %375
    %377 = vrot.lane.b32.xlu0 %v337, 64
    %v378 = vpop.permute.xlu0 %377
    %379 = vrot.lane.b32.xlu0 %v343, 64
    %v380 = vpop.permute.xlu0 %379
    %381 = vrot.lane.b32.xlu0 %v337, 56
    %v382 = vpop.permute.xlu0 %381
    %383 = vrot.lane.b32.xlu0 %v343, 56
    %v384 = vpop.permute.xlu0 %383
    %385 = vrot.lane.b32.xlu0 %v337, 48
    %v386 = vpop.permute.xlu0 %385
    %387 = vrot.lane.b32.xlu0 %v343, 48
    %v388 = vpop.permute.xlu0 %387
    %389 = vrot.lane.b32.xlu0 %v337, 40
    %v390 = vpop.permute.xlu0 %389
    %391 = vrot.lane.b32.xlu0 %v343, 40
    %v392 = vpop.permute.xlu0 %391
    %393 = vrot.lane.b32.xlu0 %v337, 32
    %v394 = vpop.permute.xlu0 %393
    %395 = vrot.lane.b32.xlu0 %v343, 32
    %v396 = vpop.permute.xlu0 %395
    %397 = vrot.lane.b32.xlu0 %v337, 24
    %v398 = vpop.permute.xlu0 %397
    %399 = vrot.lane.b32.xlu0 %v343, 24
    %v400 = vpop.permute.xlu0 %399
    %401 = vrot.lane.b32.xlu0 %v337, 16
    %v402 = vpop.permute.xlu0 %401
    %403 = vrot.lane.b32.xlu0 %v343, 16
    %v404 = vpop.permute.xlu0 %403
    %405 = vrot.lane.b32.xlu0 %v337, 8
    %v406 = vpop.permute.xlu0 %405
    %407 = vrot.lane.b32.xlu0 %v343, 8
    %v408 = vpop.permute.xlu0 %407
    %411 = vrot.lane.b32.xlu0 %v339, 120
    %v412 = vpop.permute.xlu0 %411
    %413 = vrot.lane.b32.xlu0 %v345, 120
    %v414 = vpop.permute.xlu0 %413
    %417 = vrot.lane.b32.xlu0 %v339, 112
    %v418 = vpop.permute.xlu0 %417
    %419 = vrot.lane.b32.xlu0 %v345, 112
    %v420 = vpop.permute.xlu0 %419
    %423 = vrot.lane.b32.xlu0 %v339, 104
    %v424 = vpop.permute.xlu0 %423
    %425 = vrot.lane.b32.xlu0 %v345, 104
    %v426 = vpop.permute.xlu0 %425
    %429 = vrot.lane.b32.xlu0 %v339, 96
    %v430 = vpop.permute.xlu0 %429
    %431 = vrot.lane.b32.xlu0 %v345, 96
    %v432 = vpop.permute.xlu0 %431
    %435 = vrot.lane.b32.xlu0 %v339, 88
    %v436 = vpop.permute.xlu0 %435
    %437 = vrot.lane.b32.xlu0 %v345, 88
    %v438 = vpop.permute.xlu0 %437
    %441 = vrot.lane.b32.xlu0 %v339, 80
    %v442 = vpop.permute.xlu0 %441
    %443 = vrot.lane.b32.xlu0 %v345, 80
    %v444 = vpop.permute.xlu0 %443
    %447 = vrot.lane.b32.xlu0 %v339, 72
    %v448 = vpop.permute.xlu0 %447
    %449 = vrot.lane.b32.xlu0 %v345, 72
    %v450 = vpop.permute.xlu0 %449
    %vm453 = vcmask 64512
    %v454 = vsel %vm453, %v337, 0
    %v456 = vsel %vm453, %v343, 0
    %v458 = vsel %vm453, %v378, 0
    %v460 = vsel %vm453, %v380, 0
    %462 = vmatprep.subr.mxu0 0.0
    %463 = vmatpush1.xpose.msra.mxu0 0.0
    %464 = vmatprep.subr.mxu0 0.0
    %465 = vmatpush1.xpose.msra.mxu0 0.0
    %466 = vmatprep.subr.mxu0 0.0
    %467 = vmatpush1.xpose.msra.mxu0 0.0
    %468 = vmatprep.subr.mxu0 0.0
    %469 = vmatpush1.xpose.msra.mxu0 0.0
    %470 = vmatprep.subr.mxu0 0.0
    %471 = vmatpush1.xpose.msra.mxu0 0.0
    %472 = vmatprep.subr.mxu0 0.0
    %473 = vmatpush1.xpose.msra.mxu0 0.0
    %474 = vmatprep.subr.mxu0 0.0
    %475 = vmatpush1.xpose.msra.mxu0 0.0
    %476 = vmatprep.subr.mxu0 0.0
    %477 = vmatpush1.xpose.msra.mxu0 0.0
    %478 = vmatprep.subr.mxu0 0.0
    %479 = vmatpush1.xpose.msra.mxu0 0.0
    %480 = vmatprep.subr.mxu0 0.0
    %481 = vmatpush1.xpose.msra.mxu0 0.0
    %482 = vmatprep.subr.mxu0 0.0
    %483 = vmatpush1.xpose.msra.mxu0 0.0
    %484 = vmatprep.subr.mxu0 0.0
    %485 = vmatpush1.xpose.msra.mxu0 0.0
    %486 = vmatprep.subr.mxu0 0.0
    %487 = vmatpush1.xpose.msra.mxu0 0.0
    %488 = vmatprep.subr.mxu0 0.0
    %489 = vmatpush1.xpose.msra.mxu0 0.0
    %490 = vmatprep.subr.mxu0 0.0
    %491 = vmatpush1.xpose.msra.mxu0 %v460
    %492 = vmatprep.subr.mxu0 0.0
    %493 = vmatpush1.xpose.msra.mxu0 %v458
    %494 = vmatprep.subr.mxu0 0.0
    %495 = vmatpush2.xpose.msra.mxu0 0.0
    %496 = vmatprep.subr.mxu0 0.0
    %497 = vmatpush2.xpose.msra.mxu0 0.0
    %498 = vmatprep.subr.mxu0 0.0
    %499 = vmatpush2.xpose.msra.mxu0 0.0
    %500 = vmatprep.subr.mxu0 0.0
    %501 = vmatpush2.xpose.msra.mxu0 0.0
    %502 = vmatprep.subr.mxu0 0.0
    %503 = vmatpush2.xpose.msra.mxu0 0.0
    %504 = vmatprep.subr.mxu0 0.0
    %505 = vmatpush2.xpose.msra.mxu0 0.0
    %506 = vmatprep.subr.mxu0 0.0
    %507 = vmatpush2.xpose.msra.mxu0 0.0
    %508 = vmatprep.subr.mxu0 0.0
    %509 = vmatpush2.xpose.msra.mxu0 0.0
    %510 = vmatprep.subr.mxu0 0.0
    %511 = vmatpush2.xpose.msra.mxu0 0.0
    %512 = vmatprep.subr.mxu0 0.0
    %513 = vmatpush2.xpose.msra.mxu0 0.0
    %514 = vmatprep.subr.mxu0 0.0
    %515 = vmatpush2.xpose.msra.mxu0 0.0
    %516 = vmatprep.subr.mxu0 0.0
    %517 = vmatpush2.xpose.msra.mxu0 0.0
    %518 = vmatprep.subr.mxu0 0.0
    %519 = vmatpush2.xpose.msra.mxu0 0.0
    %520 = vmatprep.subr.mxu0 0.0
    %521 = vmatpush2.xpose.msra.mxu0 0.0
    %522 = vmatprep.subr.mxu0 0.0
    %523 = vmatpush2.xpose.msra.mxu0 0.0
    %524 = vmatprep.subr.mxu0 0.0
    %525 = vmatpush2.xpose.msra.mxu0 0.0
    %526 = vmatprep.mubr.f32.mxu0 0.0
    %527 = vmatmul.mubr.f32.gmra.mxu0 %v454
    %v528 = vpop.f32.mrf.mxu0
    %v529 = vadd.f32 %v232, %v528
    %v530 = vpop.f32.mrf.mxu0
    %531 = vmatprep.mubr.f32.mxu0 0.0
    %532 = vmatmul.mubr.f32.gmra.mxu0 %v456
    %v533 = vpop.f32.mrf.mxu0
    %v534 = vadd.f32 %v233, %v533
    %v535 = vpop.f32.mrf.mxu0
    %536 = vdwg.mxu0
    %v537 = vsel %vm453, %v350, 0
    %v539 = vsel %vm453, %v352, 0
    %v541 = vsel %vm453, %v382, 0
    %v543 = vsel %vm453, %v384, 0
    %545 = vmatprep.subr.mxu0 0.0
    %546 = vmatpush1.xpose.msra.mxu0 0.0
    %547 = vmatprep.subr.mxu0 0.0
    %548 = vmatpush1.xpose.msra.mxu0 0.0
    %549 = vmatprep.subr.mxu0 0.0
    %550 = vmatpush1.xpose.msra.mxu0 0.0
    %551 = vmatprep.subr.mxu0 0.0
    %552 = vmatpush1.xpose.msra.mxu0 0.0
    %553 = vmatprep.subr.mxu0 0.0
    %554 = vmatpush1.xpose.msra.mxu0 0.0
    %555 = vmatprep.subr.mxu0 0.0
    %556 = vmatpush1.xpose.msra.mxu0 0.0
    %557 = vmatprep.subr.mxu0 0.0
    %558 = vmatpush1.xpose.msra.mxu0 0.0
    %559 = vmatprep.subr.mxu0 0.0
    %560 = vmatpush1.xpose.msra.mxu0 0.0
    %561 = vmatprep.subr.mxu0 0.0
    %562 = vmatpush1.xpose.msra.mxu0 0.0
    %563 = vmatprep.subr.mxu0 0.0
    %564 = vmatpush1.xpose.msra.mxu0 0.0
    %565 = vmatprep.subr.mxu0 0.0
    %566 = vmatpush1.xpose.msra.mxu0 0.0
    %567 = vmatprep.subr.mxu0 0.0
    %568 = vmatpush1.xpose.msra.mxu0 0.0
    %569 = vmatprep.subr.mxu0 0.0
    %570 = vmatpush1.xpose.msra.mxu0 0.0
    %571 = vmatprep.subr.mxu0 0.0
    %572 = vmatpush1.xpose.msra.mxu0 0.0
    %573 = vmatprep.subr.mxu0 0.0
    %574 = vmatpush1.xpose.msra.mxu0 %v543
    %575 = vmatprep.subr.mxu0 0.0
    %576 = vmatpush1.xpose.msra.mxu0 %v541
    %577 = vmatprep.subr.mxu0 0.0
    %578 = vmatpush2.xpose.msra.mxu0 0.0
    %579 = vmatprep.subr.mxu0 0.0
    %580 = vmatpush2.xpose.msra.mxu0 0.0
    %581 = vmatprep.subr.mxu0 0.0
    %582 = vmatpush2.xpose.msra.mxu0 0.0
    %583 = vmatprep.subr.mxu0 0.0
    %584 = vmatpush2.xpose.msra.mxu0 0.0
    %585 = vmatprep.subr.mxu0 0.0
    %586 = vmatpush2.xpose.msra.mxu0 0.0
    %587 = vmatprep.subr.mxu0 0.0
    %588 = vmatpush2.xpose.msra.mxu0 0.0
    %589 = vmatprep.subr.mxu0 0.0
    %590 = vmatpush2.xpose.msra.mxu0 0.0
    %591 = vmatprep.subr.mxu0 0.0
    %592 = vmatpush2.xpose.msra.mxu0 0.0
    %593 = vmatprep.subr.mxu0 0.0
    %594 = vmatpush2.xpose.msra.mxu0 0.0
    %595 = vmatprep.subr.mxu0 0.0
    %596 = vmatpush2.xpose.msra.mxu0 0.0
    %597 = vmatprep.subr.mxu0 0.0
    %598 = vmatpush2.xpose.msra.mxu0 0.0
    %599 = vmatprep.subr.mxu0 0.0
    %600 = vmatpush2.xpose.msra.mxu0 0.0
    %601 = vmatprep.subr.mxu0 0.0
    %602 = vmatpush2.xpose.msra.mxu0 0.0
    %603 = vmatprep.subr.mxu0 0.0
    %604 = vmatpush2.xpose.msra.mxu0 0.0
    %605 = vmatprep.subr.mxu0 0.0
    %606 = vmatpush2.xpose.msra.mxu0 0.0
    %607 = vmatprep.subr.mxu0 0.0
    %608 = vmatpush2.xpose.msra.mxu0 0.0
    %609 = vmatprep.mubr.f32.mxu0 0.0
    %610 = vmatmul.mubr.f32.gmra.mxu0 %v537
    %v611 = vpop.f32.mrf.mxu0
    %v612 = vadd.f32 %v232, %v611
    %v613 = vpop.f32.mrf.mxu0
    %614 = vmatprep.mubr.f32.mxu0 0.0
    %615 = vmatmul.mubr.f32.gmra.mxu0 %v539
    %v616 = vpop.f32.mrf.mxu0
    %v617 = vadd.f32 %v233, %v616
    %v618 = vpop.f32.mrf.mxu0
    %619 = vdwg.mxu0
    %v620 = vsel %vm453, %v354, 0
    %v622 = vsel %vm453, %v356, 0
    %v624 = vsel %vm453, %v386, 0
    %v626 = vsel %vm453, %v388, 0
    %628 = vmatprep.subr.mxu0 0.0
    %629 = vmatpush1.xpose.msra.mxu0 0.0
    %630 = vmatprep.subr.mxu0 0.0
    %631 = vmatpush1.xpose.msra.mxu0 0.0
    %632 = vmatprep.subr.mxu0 0.0
    %633 = vmatpush1.xpose.msra.mxu0 0.0
    %634 = vmatprep.subr.mxu0 0.0
    %635 = vmatpush1.xpose.msra.mxu0 0.0
    %636 = vmatprep.subr.mxu0 0.0
    %637 = vmatpush1.xpose.msra.mxu0 0.0
    %638 = vmatprep.subr.mxu0 0.0
    %639 = vmatpush1.xpose.msra.mxu0 0.0
    %640 = vmatprep.subr.mxu0 0.0
    %641 = vmatpush1.xpose.msra.mxu0 0.0
    %642 = vmatprep.subr.mxu0 0.0
    %643 = vmatpush1.xpose.msra.mxu0 0.0
    %644 = vmatprep.subr.mxu0 0.0
    %645 = vmatpush1.xpose.msra.mxu0 0.0
    %646 = vmatprep.subr.mxu0 0.0
    %647 = vmatpush1.xpose.msra.mxu0 0.0
    %648 = vmatprep.subr.mxu0 0.0
    %649 = vmatpush1.xpose.msra.mxu0 0.0
    %650 = vmatprep.subr.mxu0 0.0
    %651 = vmatpush1.xpose.msra.mxu0 0.0
    %652 = vmatprep.subr.mxu0 0.0
    %653 = vmatpush1.xpose.msra.mxu0 0.0
    %654 = vmatprep.subr.mxu0 0.0
    %655 = vmatpush1.xpose.msra.mxu0 0.0
    %656 = vmatprep.subr.mxu0 0.0
    %657 = vmatpush1.xpose.msra.mxu0 %v626
    %658 = vmatprep.subr.mxu0 0.0
    %659 = vmatpush1.xpose.msra.mxu0 %v624
    %660 = vmatprep.subr.mxu0 0.0
    %661 = vmatpush2.xpose.msra.mxu0 0.0
    %662 = vmatprep.subr.mxu0 0.0
    %663 = vmatpush2.xpose.msra.mxu0 0.0
    %664 = vmatprep.subr.mxu0 0.0
    %665 = vmatpush2.xpose.msra.mxu0 0.0
    %666 = vmatprep.subr.mxu0 0.0
    %667 = vmatpush2.xpose.msra.mxu0 0.0
    %668 = vmatprep.subr.mxu0 0.0
    %669 = vmatpush2.xpose.msra.mxu0 0.0
    %670 = vmatprep.subr.mxu0 0.0
    %671 = vmatpush2.xpose.msra.mxu0 0.0
    %672 = vmatprep.subr.mxu0 0.0
    %673 = vmatpush2.xpose.msra.mxu0 0.0
    %674 = vmatprep.subr.mxu0 0.0
    %675 = vmatpush2.xpose.msra.mxu0 0.0
    %676 = vmatprep.subr.mxu0 0.0
    %677 = vmatpush2.xpose.msra.mxu0 0.0
    %678 = vmatprep.subr.mxu0 0.0
    %679 = vmatpush2.xpose.msra.mxu0 0.0
    %680 = vmatprep.subr.mxu0 0.0
    %681 = vmatpush2.xpose.msra.mxu0 0.0
    %682 = vmatprep.subr.mxu0 0.0
    %683 = vmatpush2.xpose.msra.mxu0 0.0
    %684 = vmatprep.subr.mxu0 0.0
    %685 = vmatpush2.xpose.msra.mxu0 0.0
    %686 = vmatprep.subr.mxu0 0.0
    %687 = vmatpush2.xpose.msra.mxu0 0.0
    %688 = vmatprep.subr.mxu0 0.0
    %689 = vmatpush2.xpose.msra.mxu0 0.0
    %690 = vmatprep.subr.mxu0 0.0
    %691 = vmatpush2.xpose.msra.mxu0 0.0
    %692 = vmatprep.mubr.f32.mxu0 0.0
    %693 = vmatmul.mubr.f32.gmra.mxu0 %v620
    %v694 = vpop.f32.mrf.mxu0
    %v695 = vadd.f32 %v232, %v694
    %v696 = vpop.f32.mrf.mxu0
    %697 = vmatprep.mubr.f32.mxu0 0.0
    %698 = vmatmul.mubr.f32.gmra.mxu0 %v622
    %v699 = vpop.f32.mrf.mxu0
    %v700 = vadd.f32 %v233, %v699
    %v701 = vpop.f32.mrf.mxu0
    %702 = vdwg.mxu0
    %v703 = vsel %vm453, %v358, 0
    %v705 = vsel %vm453, %v360, 0
    %v707 = vsel %vm453, %v390, 0
    %v709 = vsel %vm453, %v392, 0
    %711 = vmatprep.subr.mxu0 0.0
    %712 = vmatpush1.xpose.msra.mxu0 0.0
    %713 = vmatprep.subr.mxu0 0.0
    %714 = vmatpush1.xpose.msra.mxu0 0.0
    %715 = vmatprep.subr.mxu0 0.0
    %716 = vmatpush1.xpose.msra.mxu0 0.0
    %717 = vmatprep.subr.mxu0 0.0
    %718 = vmatpush1.xpose.msra.mxu0 0.0
    %719 = vmatprep.subr.mxu0 0.0
    %720 = vmatpush1.xpose.msra.mxu0 0.0
    %721 = vmatprep.subr.mxu0 0.0
    %722 = vmatpush1.xpose.msra.mxu0 0.0
    %723 = vmatprep.subr.mxu0 0.0
    %724 = vmatpush1.xpose.msra.mxu0 0.0
    %725 = vmatprep.subr.mxu0 0.0
    %726 = vmatpush1.xpose.msra.mxu0 0.0
    %727 = vmatprep.subr.mxu0 0.0
    %728 = vmatpush1.xpose.msra.mxu0 0.0
    %729 = vmatprep.subr.mxu0 0.0
    %730 = vmatpush1.xpose.msra.mxu0 0.0
    %731 = vmatprep.subr.mxu0 0.0
    %732 = vmatpush1.xpose.msra.mxu0 0.0
    %733 = vmatprep.subr.mxu0 0.0
    %734 = vmatpush1.xpose.msra.mxu0 0.0
    %735 = vmatprep.subr.mxu0 0.0
    %736 = vmatpush1.xpose.msra.mxu0 0.0
    %737 = vmatprep.subr.mxu0 0.0
    %738 = vmatpush1.xpose.msra.mxu0 0.0
    %739 = vmatprep.subr.mxu0 0.0
    %740 = vmatpush1.xpose.msra.mxu0 %v709
    %741 = vmatprep.subr.mxu0 0.0
    %742 = vmatpush1.xpose.msra.mxu0 %v707
    %743 = vmatprep.subr.mxu0 0.0
    %744 = vmatpush2.xpose.msra.mxu0 0.0
    %745 = vmatprep.subr.mxu0 0.0
    %746 = vmatpush2.xpose.msra.mxu0 0.0
    %747 = vmatprep.subr.mxu0 0.0
    %748 = vmatpush2.xpose.msra.mxu0 0.0
    %749 = vmatprep.subr.mxu0 0.0
    %750 = vmatpush2.xpose.msra.mxu0 0.0
    %751 = vmatprep.subr.mxu0 0.0
    %752 = vmatpush2.xpose.msra.mxu0 0.0
    %753 = vmatprep.subr.mxu0 0.0
    %754 = vmatpush2.xpose.msra.mxu0 0.0
    %755 = vmatprep.subr.mxu0 0.0
    %756 = vmatpush2.xpose.msra.mxu0 0.0
    %757 = vmatprep.subr.mxu0 0.0
    %758 = vmatpush2.xpose.msra.mxu0 0.0
    %759 = vmatprep.subr.mxu0 0.0
    %760 = vmatpush2.xpose.msra.mxu0 0.0
    %761 = vmatprep.subr.mxu0 0.0
    %762 = vmatpush2.xpose.msra.mxu0 0.0
    %763 = vmatprep.subr.mxu0 0.0
    %764 = vmatpush2.xpose.msra.mxu0 0.0
    %765 = vmatprep.subr.mxu0 0.0
    %766 = vmatpush2.xpose.msra.mxu0 0.0
    %767 = vmatprep.subr.mxu0 0.0
    %768 = vmatpush2.xpose.msra.mxu0 0.0
    %769 = vmatprep.subr.mxu0 0.0
    %770 = vmatpush2.xpose.msra.mxu0 0.0
    %771 = vmatprep.subr.mxu0 0.0
    %772 = vmatpush2.xpose.msra.mxu0 0.0
    %773 = vmatprep.subr.mxu0 0.0
    %774 = vmatpush2.xpose.msra.mxu0 0.0
    %775 = vmatprep.mubr.f32.mxu0 0.0
    %776 = vmatmul.mubr.f32.gmra.mxu0 %v703
    %v777 = vpop.f32.mrf.mxu0
    %v778 = vadd.f32 %v232, %v777
    %v779 = vpop.f32.mrf.mxu0
    %780 = vmatprep.mubr.f32.mxu0 0.0
    %781 = vmatmul.mubr.f32.gmra.mxu0 %v705
    %v782 = vpop.f32.mrf.mxu0
    %v783 = vadd.f32 %v233, %v782
    %v784 = vpop.f32.mrf.mxu0
    %785 = vdwg.mxu0
    %v786 = vsel %vm453, %v362, 0
    %v788 = vsel %vm453, %v364, 0
    %v790 = vsel %vm453, %v394, 0
    %v792 = vsel %vm453, %v396, 0
    %794 = vmatprep.subr.mxu0 0.0
    %795 = vmatpush1.xpose.msra.mxu0 0.0
    %796 = vmatprep.subr.mxu0 0.0
    %797 = vmatpush1.xpose.msra.mxu0 0.0
    %798 = vmatprep.subr.mxu0 0.0
    %799 = vmatpush1.xpose.msra.mxu0 0.0
    %800 = vmatprep.subr.mxu0 0.0
    %801 = vmatpush1.xpose.msra.mxu0 0.0
    %802 = vmatprep.subr.mxu0 0.0
    %803 = vmatpush1.xpose.msra.mxu0 0.0
    %804 = vmatprep.subr.mxu0 0.0
    %805 = vmatpush1.xpose.msra.mxu0 0.0
    %806 = vmatprep.subr.mxu0 0.0
    %807 = vmatpush1.xpose.msra.mxu0 0.0
    %808 = vmatprep.subr.mxu0 0.0
    %809 = vmatpush1.xpose.msra.mxu0 0.0
    %810 = vmatprep.subr.mxu0 0.0
    %811 = vmatpush1.xpose.msra.mxu0 0.0
    %812 = vmatprep.subr.mxu0 0.0
    %813 = vmatpush1.xpose.msra.mxu0 0.0
    %814 = vmatprep.subr.mxu0 0.0
    %815 = vmatpush1.xpose.msra.mxu0 0.0
    %816 = vmatprep.subr.mxu0 0.0
    %817 = vmatpush1.xpose.msra.mxu0 0.0
    %818 = vmatprep.subr.mxu0 0.0
    %819 = vmatpush1.xpose.msra.mxu0 0.0
    %820 = vmatprep.subr.mxu0 0.0
    %821 = vmatpush1.xpose.msra.mxu0 0.0
    %822 = vmatprep.subr.mxu0 0.0
    %823 = vmatpush1.xpose.msra.mxu0 %v792
    %824 = vmatprep.subr.mxu0 0.0
    %825 = vmatpush1.xpose.msra.mxu0 %v790
    %826 = vmatprep.subr.mxu0 0.0
    %827 = vmatpush2.xpose.msra.mxu0 0.0
    %828 = vmatprep.subr.mxu0 0.0
    %829 = vmatpush2.xpose.msra.mxu0 0.0
    %830 = vmatprep.subr.mxu0 0.0
    %831 = vmatpush2.xpose.msra.mxu0 0.0
    %832 = vmatprep.subr.mxu0 0.0
    %833 = vmatpush2.xpose.msra.mxu0 0.0
    %834 = vmatprep.subr.mxu0 0.0
    %835 = vmatpush2.xpose.msra.mxu0 0.0
    %836 = vmatprep.subr.mxu0 0.0
    %837 = vmatpush2.xpose.msra.mxu0 0.0
    %838 = vmatprep.subr.mxu0 0.0
    %839 = vmatpush2.xpose.msra.mxu0 0.0
    %840 = vmatprep.subr.mxu0 0.0
    %841 = vmatpush2.xpose.msra.mxu0 0.0
    %842 = vmatprep.subr.mxu0 0.0
    %843 = vmatpush2.xpose.msra.mxu0 0.0
    %844 = vmatprep.subr.mxu0 0.0
    %845 = vmatpush2.xpose.msra.mxu0 0.0
    %846 = vmatprep.subr.mxu0 0.0
    %847 = vmatpush2.xpose.msra.mxu0 0.0
    %848 = vmatprep.subr.mxu0 0.0
    %849 = vmatpush2.xpose.msra.mxu0 0.0
    %850 = vmatprep.subr.mxu0 0.0
    %851 = vmatpush2.xpose.msra.mxu0 0.0
    %852 = vmatprep.subr.mxu0 0.0
    %853 = vmatpush2.xpose.msra.mxu0 0.0
    %854 = vmatprep.subr.mxu0 0.0
    %855 = vmatpush2.xpose.msra.mxu0 0.0
    %856 = vmatprep.subr.mxu0 0.0
    %857 = vmatpush2.xpose.msra.mxu0 0.0
    %858 = vmatprep.mubr.f32.mxu0 0.0
    %859 = vmatmul.mubr.f32.gmra.mxu0 %v786
    %v860 = vpop.f32.mrf.mxu0
    %v861 = vadd.f32 %v232, %v860
    %v862 = vpop.f32.mrf.mxu0
    %863 = vmatprep.mubr.f32.mxu0 0.0
    %864 = vmatmul.mubr.f32.gmra.mxu0 %v788
    %v865 = vpop.f32.mrf.mxu0
    %v866 = vadd.f32 %v233, %v865
    %v867 = vpop.f32.mrf.mxu0
    %868 = vdwg.mxu0
    %v869 = vsel %vm453, %v366, 0
    %v871 = vsel %vm453, %v368, 0
    %v873 = vsel %vm453, %v398, 0
    %v875 = vsel %vm453, %v400, 0
    %877 = vmatprep.subr.mxu0 0.0
    %878 = vmatpush1.xpose.msra.mxu0 0.0
    %879 = vmatprep.subr.mxu0 0.0
    %880 = vmatpush1.xpose.msra.mxu0 0.0
    %881 = vmatprep.subr.mxu0 0.0
    %882 = vmatpush1.xpose.msra.mxu0 0.0
    %883 = vmatprep.subr.mxu0 0.0
    %884 = vmatpush1.xpose.msra.mxu0 0.0
    %885 = vmatprep.subr.mxu0 0.0
    %886 = vmatpush1.xpose.msra.mxu0 0.0
    %887 = vmatprep.subr.mxu0 0.0
    %888 = vmatpush1.xpose.msra.mxu0 0.0
    %889 = vmatprep.subr.mxu0 0.0
    %890 = vmatpush1.xpose.msra.mxu0 0.0
    %891 = vmatprep.subr.mxu0 0.0
    %892 = vmatpush1.xpose.msra.mxu0 0.0
    %893 = vmatprep.subr.mxu0 0.0
    %894 = vmatpush1.xpose.msra.mxu0 0.0
    %895 = vmatprep.subr.mxu0 0.0
    %896 = vmatpush1.xpose.msra.mxu0 0.0
    %897 = vmatprep.subr.mxu0 0.0
    %898 = vmatpush1.xpose.msra.mxu0 0.0
    %899 = vmatprep.subr.mxu0 0.0
    %900 = vmatpush1.xpose.msra.mxu0 0.0
    %901 = vmatprep.subr.mxu0 0.0
    %902 = vmatpush1.xpose.msra.mxu0 0.0
    %903 = vmatprep.subr.mxu0 0.0
    %904 = vmatpush1.xpose.msra.mxu0 0.0
    %905 = vmatprep.subr.mxu0 0.0
    %906 = vmatpush1.xpose.msra.mxu0 %v875
    %907 = vmatprep.subr.mxu0 0.0
    %908 = vmatpush1.xpose.msra.mxu0 %v873
    %909 = vmatprep.subr.mxu0 0.0
    %910 = vmatpush2.xpose.msra.mxu0 0.0
    %911 = vmatprep.subr.mxu0 0.0
    %912 = vmatpush2.xpose.msra.mxu0 0.0
    %913 = vmatprep.subr.mxu0 0.0
    %914 = vmatpush2.xpose.msra.mxu0 0.0
    %915 = vmatprep.subr.mxu0 0.0
    %916 = vmatpush2.xpose.msra.mxu0 0.0
    %917 = vmatprep.subr.mxu0 0.0
    %918 = vmatpush2.xpose.msra.mxu0 0.0
    %919 = vmatprep.subr.mxu0 0.0
    %920 = vmatpush2.xpose.msra.mxu0 0.0
    %921 = vmatprep.subr.mxu0 0.0
    %922 = vmatpush2.xpose.msra.mxu0 0.0
    %923 = vmatprep.subr.mxu0 0.0
    %924 = vmatpush2.xpose.msra.mxu0 0.0
    %925 = vmatprep.subr.mxu0 0.0
    %926 = vmatpush2.xpose.msra.mxu0 0.0
    %927 = vmatprep.subr.mxu0 0.0
    %928 = vmatpush2.xpose.msra.mxu0 0.0
    %929 = vmatprep.subr.mxu0 0.0
    %930 = vmatpush2.xpose.msra.mxu0 0.0
    %931 = vmatprep.subr.mxu0 0.0
    %932 = vmatpush2.xpose.msra.mxu0 0.0
    %933 = vmatprep.subr.mxu0 0.0
    %934 = vmatpush2.xpose.msra.mxu0 0.0
    %935 = vmatprep.subr.mxu0 0.0
    %936 = vmatpush2.xpose.msra.mxu0 0.0
    %937 = vmatprep.subr.mxu0 0.0
    %938 = vmatpush2.xpose.msra.mxu0 0.0
    %939 = vmatprep.subr.mxu0 0.0
    %940 = vmatpush2.xpose.msra.mxu0 0.0
    %941 = vmatprep.mubr.f32.mxu0 0.0
    %942 = vmatmul.mubr.f32.gmra.mxu0 %v869
    %v943 = vpop.f32.mrf.mxu0
    %v944 = vadd.f32 %v232, %v943
    %v945 = vpop.f32.mrf.mxu0
    %946 = vmatprep.mubr.f32.mxu0 0.0
    %947 = vmatmul.mubr.f32.gmra.mxu0 %v871
    %v948 = vpop.f32.mrf.mxu0
    %v949 = vadd.f32 %v233, %v948
    %v950 = vpop.f32.mrf.mxu0
    %951 = vdwg.mxu0
    %v952 = vsel %vm453, %v370, 0
    %v954 = vsel %vm453, %v372, 0
    %v956 = vsel %vm453, %v402, 0
    %v958 = vsel %vm453, %v404, 0
    %960 = vmatprep.subr.mxu0 0.0
    %961 = vmatpush1.xpose.msra.mxu0 0.0
    %962 = vmatprep.subr.mxu0 0.0
    %963 = vmatpush1.xpose.msra.mxu0 0.0
    %964 = vmatprep.subr.mxu0 0.0
    %965 = vmatpush1.xpose.msra.mxu0 0.0
    %966 = vmatprep.subr.mxu0 0.0
    %967 = vmatpush1.xpose.msra.mxu0 0.0
    %968 = vmatprep.subr.mxu0 0.0
    %969 = vmatpush1.xpose.msra.mxu0 0.0
    %970 = vmatprep.subr.mxu0 0.0
    %971 = vmatpush1.xpose.msra.mxu0 0.0
    %972 = vmatprep.subr.mxu0 0.0
    %973 = vmatpush1.xpose.msra.mxu0 0.0
    %974 = vmatprep.subr.mxu0 0.0
    %975 = vmatpush1.xpose.msra.mxu0 0.0
    %976 = vmatprep.subr.mxu0 0.0
    %977 = vmatpush1.xpose.msra.mxu0 0.0
    %978 = vmatprep.subr.mxu0 0.0
    %979 = vmatpush1.xpose.msra.mxu0 0.0
    %980 = vmatprep.subr.mxu0 0.0
    %981 = vmatpush1.xpose.msra.mxu0 0.0
    %982 = vmatprep.subr.mxu0 0.0
    %983 = vmatpush1.xpose.msra.mxu0 0.0
    %984 = vmatprep.subr.mxu0 0.0
    %985 = vmatpush1.xpose.msra.mxu0 0.0
    %986 = vmatprep.subr.mxu0 0.0
    %987 = vmatpush1.xpose.msra.mxu0 0.0
    %988 = vmatprep.subr.mxu0 0.0
    %989 = vmatpush1.xpose.msra.mxu0 %v958
    %990 = vmatprep.subr.mxu0 0.0
    %991 = vmatpush1.xpose.msra.mxu0 %v956
    %992 = vmatprep.subr.mxu0 0.0
    %993 = vmatpush2.xpose.msra.mxu0 0.0
    %994 = vmatprep.subr.mxu0 0.0
    %995 = vmatpush2.xpose.msra.mxu0 0.0
    %996 = vmatprep.subr.mxu0 0.0
    %997 = vmatpush2.xpose.msra.mxu0 0.0
    %998 = vmatprep.subr.mxu0 0.0
    %999 = vmatpush2.xpose.msra.mxu0 0.0
    %1000 = vmatprep.subr.mxu0 0.0
    %1001 = vmatpush2.xpose.msra.mxu0 0.0
    %1002 = vmatprep.subr.mxu0 0.0
    %1003 = vmatpush2.xpose.msra.mxu0 0.0
    %1004 = vmatprep.subr.mxu0 0.0
    %1005 = vmatpush2.xpose.msra.mxu0 0.0
    %1006 = vmatprep.subr.mxu0 0.0
    %1007 = vmatpush2.xpose.msra.mxu0 0.0
    %1008 = vmatprep.subr.mxu0 0.0
    %1009 = vmatpush2.xpose.msra.mxu0 0.0
    %1010 = vmatprep.subr.mxu0 0.0
    %1011 = vmatpush2.xpose.msra.mxu0 0.0
    %1012 = vmatprep.subr.mxu0 0.0
    %1013 = vmatpush2.xpose.msra.mxu0 0.0
    %1014 = vmatprep.subr.mxu0 0.0
    %1015 = vmatpush2.xpose.msra.mxu0 0.0
    %1016 = vmatprep.subr.mxu0 0.0
    %1017 = vmatpush2.xpose.msra.mxu0 0.0
    %1018 = vmatprep.subr.mxu0 0.0
    %1019 = vmatpush2.xpose.msra.mxu0 0.0
    %1020 = vmatprep.subr.mxu0 0.0
    %1021 = vmatpush2.xpose.msra.mxu0 0.0
    %1022 = vmatprep.subr.mxu0 0.0
    %1023 = vmatpush2.xpose.msra.mxu0 0.0
    %1024 = vmatprep.mubr.f32.mxu0 0.0
    %1025 = vmatmul.mubr.f32.gmra.mxu0 %v952
    %v1026 = vpop.f32.mrf.mxu0
    %v1027 = vadd.f32 %v232, %v1026
    %v1028 = vpop.f32.mrf.mxu0
    %1029 = vmatprep.mubr.f32.mxu0 0.0
    %1030 = vmatmul.mubr.f32.gmra.mxu0 %v954
    %v1031 = vpop.f32.mrf.mxu0
    %v1032 = vadd.f32 %v233, %v1031
    %v1033 = vpop.f32.mrf.mxu0
    %1034 = vdwg.mxu0
    %v1035 = vsel %vm453, %v374, 0
    %v1037 = vsel %vm453, %v376, 0
    %v1039 = vsel %vm453, %v406, 0
    %v1041 = vsel %vm453, %v408, 0
    %1043 = vmatprep.subr.mxu0 0.0
    %1044 = vmatpush1.xpose.msra.mxu0 0.0
    %1045 = vmatprep.subr.mxu0 0.0
    %1046 = vmatpush1.xpose.msra.mxu0 0.0
    %1047 = vmatprep.subr.mxu0 0.0
    %1048 = vmatpush1.xpose.msra.mxu0 0.0
    %1049 = vmatprep.subr.mxu0 0.0
    %1050 = vmatpush1.xpose.msra.mxu0 0.0
    %1051 = vmatprep.subr.mxu0 0.0
    %1052 = vmatpush1.xpose.msra.mxu0 0.0
    %1053 = vmatprep.subr.mxu0 0.0
    %1054 = vmatpush1.xpose.msra.mxu0 0.0
    %1055 = vmatprep.subr.mxu0 0.0
    %1056 = vmatpush1.xpose.msra.mxu0 0.0
    %1057 = vmatprep.subr.mxu0 0.0
    %1058 = vmatpush1.xpose.msra.mxu0 0.0
    %1059 = vmatprep.subr.mxu0 0.0
    %1060 = vmatpush1.xpose.msra.mxu0 0.0
    %1061 = vmatprep.subr.mxu0 0.0
    %1062 = vmatpush1.xpose.msra.mxu0 0.0
    %1063 = vmatprep.subr.mxu0 0.0
    %1064 = vmatpush1.xpose.msra.mxu0 0.0
    %1065 = vmatprep.subr.mxu0 0.0
    %1066 = vmatpush1.xpose.msra.mxu0 0.0
    %1067 = vmatprep.subr.mxu0 0.0
    %1068 = vmatpush1.xpose.msra.mxu0 0.0
    %1069 = vmatprep.subr.mxu0 0.0
    %1070 = vmatpush1.xpose.msra.mxu0 0.0
    %1071 = vmatprep.subr.mxu0 0.0
    %1072 = vmatpush1.xpose.msra.mxu0 %v1041
    %1073 = vmatprep.subr.mxu0 0.0
    %1074 = vmatpush1.xpose.msra.mxu0 %v1039
    %1075 = vmatprep.subr.mxu0 0.0
    %1076 = vmatpush2.xpose.msra.mxu0 0.0
    %1077 = vmatprep.subr.mxu0 0.0
    %1078 = vmatpush2.xpose.msra.mxu0 0.0
    %1079 = vmatprep.subr.mxu0 0.0
    %1080 = vmatpush2.xpose.msra.mxu0 0.0
    %1081 = vmatprep.subr.mxu0 0.0
    %1082 = vmatpush2.xpose.msra.mxu0 0.0
    %1083 = vmatprep.subr.mxu0 0.0
    %1084 = vmatpush2.xpose.msra.mxu0 0.0
    %1085 = vmatprep.subr.mxu0 0.0
    %1086 = vmatpush2.xpose.msra.mxu0 0.0
    %1087 = vmatprep.subr.mxu0 0.0
    %1088 = vmatpush2.xpose.msra.mxu0 0.0
    %1089 = vmatprep.subr.mxu0 0.0
    %1090 = vmatpush2.xpose.msra.mxu0 0.0
    %1091 = vmatprep.subr.mxu0 0.0
    %1092 = vmatpush2.xpose.msra.mxu0 0.0
    %1093 = vmatprep.subr.mxu0 0.0
    %1094 = vmatpush2.xpose.msra.mxu0 0.0
    %1095 = vmatprep.subr.mxu0 0.0
    %1096 = vmatpush2.xpose.msra.mxu0 0.0
    %1097 = vmatprep.subr.mxu0 0.0
    %1098 = vmatpush2.xpose.msra.mxu0 0.0
    %1099 = vmatprep.subr.mxu0 0.0
    %1100 = vmatpush2.xpose.msra.mxu0 0.0
    %1101 = vmatprep.subr.mxu0 0.0
    %1102 = vmatpush2.xpose.msra.mxu0 0.0
    %1103 = vmatprep.subr.mxu0 0.0
    %1104 = vmatpush2.xpose.msra.mxu0 0.0
    %1105 = vmatprep.subr.mxu0 0.0
    %1106 = vmatpush2.xpose.msra.mxu0 0.0
    %1107 = vmatprep.mubr.f32.mxu0 0.0
    %1108 = vmatmul.mubr.f32.gmra.mxu0 %v1035
    %v1109 = vpop.f32.mrf.mxu0
    %v1110 = vadd.f32 %v232, %v1109
    %v1111 = vpop.f32.mrf.mxu0
    %1112 = vmatprep.mubr.f32.mxu0 0.0
    %1113 = vmatmul.mubr.f32.gmra.mxu0 %v1037
    %v1114 = vpop.f32.mrf.mxu0
    %v1115 = vadd.f32 %v233, %v1114
    %v1116 = vpop.f32.mrf.mxu0
    %1117 = vdwg.mxu0
    %v1118 = vsel %vm44, %v529, -inf
    %1119 = vmax.xlane.f32.xlu0 %v1118
    %v1120 = vpop.xlane.xlu0 %1119
    %v1121 = vsel %vm44, %v534, -inf
    %1122 = vmax.xlane.f32.xlu0 %v1121
    %v1123 = vpop.xlane.xlu0 %1122
    %v1124 = vsel %vm44, %v612, -inf
    %1125 = vmax.xlane.f32.xlu0 %v1124
    %v1126 = vpop.xlane.xlu0 %1125
    %v1127 = vsel %vm44, %v617, -inf
    %1128 = vmax.xlane.f32.xlu0 %v1127
    %v1129 = vpop.xlane.xlu0 %1128
    %v1130 = vsel %vm44, %v695, -inf
    %1131 = vmax.xlane.f32.xlu0 %v1130
    %v1132 = vpop.xlane.xlu0 %1131
    %v1133 = vsel %vm44, %v700, -inf
    %1134 = vmax.xlane.f32.xlu0 %v1133
    %v1135 = vpop.xlane.xlu0 %1134
    %v1136 = vsel %vm44, %v778, -inf
    %1137 = vmax.xlane.f32.xlu0 %v1136
    %v1138 = vpop.xlane.xlu0 %1137
    %v1139 = vsel %vm44, %v783, -inf
    %1140 = vmax.xlane.f32.xlu0 %v1139
    %v1141 = vpop.xlane.xlu0 %1140
    %v1142 = vsel %vm44, %v861, -inf
    %1143 = vmax.xlane.f32.xlu0 %v1142
    %v1144 = vpop.xlane.xlu0 %1143
    %v1145 = vsel %vm44, %v866, -inf
    %1146 = vmax.xlane.f32.xlu0 %v1145
    %v1147 = vpop.xlane.xlu0 %1146
    %v1148 = vsel %vm44, %v944, -inf
    %1149 = vmax.xlane.f32.xlu0 %v1148
    %v1150 = vpop.xlane.xlu0 %1149
    %v1151 = vsel %vm44, %v949, -inf
    %1152 = vmax.xlane.f32.xlu0 %v1151
    %v1153 = vpop.xlane.xlu0 %1152
    %v1154 = vsel %vm44, %v1027, -inf
    %1155 = vmax.xlane.f32.xlu0 %v1154
    %v1156 = vpop.xlane.xlu0 %1155
    %v1157 = vsel %vm44, %v1032, -inf
    %1158 = vmax.xlane.f32.xlu0 %v1157
    %v1159 = vpop.xlane.xlu0 %1158
    %v1160 = vsel %vm44, %v1110, -inf
    %1161 = vmax.xlane.f32.xlu0 %v1160
    %v1162 = vpop.xlane.xlu0 %1161
    %v1163 = vsel %vm44, %v1115, -inf
    %1164 = vmax.xlane.f32.xlu0 %v1163
    %v1165 = vpop.xlane.xlu0 %1164
    %v1166 = vsub.f32 %v529, %v1120
    %v1167 = vsub.f32 %v534, %v1123
    %v1168 = vsub.f32 %v612, %v1126
    %v1169 = vsub.f32 %v617, %v1129
    %v1170 = vsub.f32 %v695, %v1132
    %v1171 = vsub.f32 %v700, %v1135
    %v1172 = vsub.f32 %v778, %v1138
    %v1173 = vsub.f32 %v783, %v1141
    %v1174 = vsub.f32 %v861, %v1144
    %v1175 = vsub.f32 %v866, %v1147
    %v1176 = vsub.f32 %v944, %v1150
    %v1177 = vsub.f32 %v949, %v1153
    %v1178 = vsub.f32 %v1027, %v1156
    %v1179 = vsub.f32 %v1032, %v1159
    %v1180 = vsub.f32 %v1110, %v1162
    %v1181 = vsub.f32 %v1115, %v1165
    %v1182 = vmul.f32 %v1166, 1.442695
    %v1183 = vpow.pop %v1182
    %v1184 = vmul.f32 %v1167, 1.442695
    %v1185 = vpow.pop %v1184
    %v1186 = vmul.f32 %v1168, 1.442695
    %v1187 = vpow.pop %v1186
    %v1188 = vmul.f32 %v1169, 1.442695
    %v1189 = vpow.pop %v1188
    %v1190 = vmul.f32 %v1170, 1.442695
    %v1191 = vpow.pop %v1190
    %v1192 = vmul.f32 %v1171, 1.442695
    %v1193 = vpow.pop %v1192
    %v1194 = vmul.f32 %v1172, 1.442695
    %v1195 = vpow.pop %v1194
    %v1196 = vmul.f32 %v1173, 1.442695
    %v1197 = vpow.pop %v1196
    %v1198 = vmul.f32 %v1174, 1.442695
    %v1199 = vpow.pop %v1198
    %v1200 = vmul.f32 %v1175, 1.442695
    %v1201 = vpow.pop %v1200
    %v1202 = vmul.f32 %v1176, 1.442695
    %v1203 = vpow.pop %v1202
    %v1204 = vmul.f32 %v1177, 1.442695
    %v1205 = vpow.pop %v1204
    %v1206 = vmul.f32 %v1178, 1.442695
    %v1207 = vpow.pop %v1206
    %v1208 = vmul.f32 %v1179, 1.442695
    %v1209 = vpow.pop %v1208
    %v1210 = vmul.f32 %v1180, 1.442695
    %v1211 = vpow.pop %v1210
    %v1212 = vmul.f32 %v1181, 1.442695
    %v1213 = vpow.pop %v1212
    %v1214 = vsel %vm44, %v1183, 0.0
    %1215 = vadd.xlane.f32.xlu0 %v1214
    %v1216 = vpop.xlane.xlu0 %1215
    %v1217 = vsel %vm44, %v1185, 0.0
    %1218 = vadd.xlane.f32.xlu0 %v1217
    %v1219 = vpop.xlane.xlu0 %1218
    %v1220 = vsel %vm44, %v1187, 0.0
    %1221 = vadd.xlane.f32.xlu0 %v1220
    %v1222 = vpop.xlane.xlu0 %1221
    %v1223 = vsel %vm44, %v1189, 0.0
    %1224 = vadd.xlane.f32.xlu0 %v1223
    %v1225 = vpop.xlane.xlu0 %1224
    %v1226 = vsel %vm44, %v1191, 0.0
    %1227 = vadd.xlane.f32.xlu0 %v1226
    %v1228 = vpop.xlane.xlu0 %1227
    %v1229 = vsel %vm44, %v1193, 0.0
    %1230 = vadd.xlane.f32.xlu0 %v1229
    %v1231 = vpop.xlane.xlu0 %1230
    %v1232 = vsel %vm44, %v1195, 0.0
    %1233 = vadd.xlane.f32.xlu0 %v1232
    %v1234 = vpop.xlane.xlu0 %1233
    %v1235 = vsel %vm44, %v1197, 0.0
    %1236 = vadd.xlane.f32.xlu0 %v1235
    %v1237 = vpop.xlane.xlu0 %1236
    %v1238 = vsel %vm44, %v1199, 0.0
    %1239 = vadd.xlane.f32.xlu0 %v1238
    %v1240 = vpop.xlane.xlu0 %1239
    %v1241 = vsel %vm44, %v1201, 0.0
    %1242 = vadd.xlane.f32.xlu0 %v1241
    %v1243 = vpop.xlane.xlu0 %1242
    %v1244 = vsel %vm44, %v1203, 0.0
    %1245 = vadd.xlane.f32.xlu0 %v1244
    %v1246 = vpop.xlane.xlu0 %1245
    %v1247 = vsel %vm44, %v1205, 0.0
    %1248 = vadd.xlane.f32.xlu0 %v1247
    %v1249 = vpop.xlane.xlu0 %1248
    %v1250 = vsel %vm44, %v1207, 0.0
    %1251 = vadd.xlane.f32.xlu0 %v1250
    %v1252 = vpop.xlane.xlu0 %1251
    %v1253 = vsel %vm44, %v1209, 0.0
    %1254 = vadd.xlane.f32.xlu0 %v1253
    %v1255 = vpop.xlane.xlu0 %1254
    %v1256 = vsel %vm44, %v1211, 0.0
    %1257 = vadd.xlane.f32.xlu0 %v1256
    %v1258 = vpop.xlane.xlu0 %1257
    %v1259 = vsel %vm44, %v1213, 0.0
    %1260 = vadd.xlane.f32.xlu0 %v1259
    %v1261 = vpop.xlane.xlu0 %1260
    %v1262 = vrcp.pop %v1216
    %v1263 = vmul.f32 %v1183, %v1262
    %v1264 = vrcp.pop %v1219
    %v1265 = vmul.f32 %v1185, %v1264
    %v1266 = vrcp.pop %v1222
    %v1267 = vmul.f32 %v1187, %v1266
    %v1268 = vrcp.pop %v1225
    %v1269 = vmul.f32 %v1189, %v1268
    %v1270 = vrcp.pop %v1228
    %v1271 = vmul.f32 %v1191, %v1270
    %v1272 = vrcp.pop %v1231
    %v1273 = vmul.f32 %v1193, %v1272
    %v1274 = vrcp.pop %v1234
    %v1275 = vmul.f32 %v1195, %v1274
    %v1276 = vrcp.pop %v1237
    %v1277 = vmul.f32 %v1197, %v1276
    %v1278 = vrcp.pop %v1240
    %v1279 = vmul.f32 %v1199, %v1278
    %v1280 = vrcp.pop %v1243
    %v1281 = vmul.f32 %v1201, %v1280
    %v1282 = vrcp.pop %v1246
    %v1283 = vmul.f32 %v1203, %v1282
    %v1284 = vrcp.pop %v1249
    %v1285 = vmul.f32 %v1205, %v1284
    %v1286 = vrcp.pop %v1252
    %v1287 = vmul.f32 %v1207, %v1286
    %v1288 = vrcp.pop %v1255
    %v1289 = vmul.f32 %v1209, %v1288
    %v1290 = vrcp.pop %v1258
    %v1291 = vmul.f32 %v1211, %v1290
    %v1292 = vrcp.pop %v1261
    %v1293 = vmul.f32 %v1213, %v1292
    %v1295 = vsel %vm44, %v1263, 0
    %v1298 = vsel %vm44, %v1265, 0
    %1300 = vmatprep.subr.mxu0 0.0
    %1301 = vmatpush1.msra.mxu0 0.0
    %1302 = vmatprep.subr.mxu0 0.0
    %1303 = vmatpush1.msra.mxu0 0.0
    %1304 = vmatprep.subr.mxu0 0.0
    %1305 = vmatpush1.msra.mxu0 0.0
    %1306 = vmatprep.subr.mxu0 0.0
    %1307 = vmatpush1.msra.mxu0 0.0
    %1308 = vmatprep.subr.mxu0 0.0
    %1309 = vmatpush1.msra.mxu0 0.0
    %1310 = vmatprep.subr.mxu0 0.0
    %1311 = vmatpush1.msra.mxu0 0.0
    %1312 = vmatprep.subr.mxu0 0.0
    %1313 = vmatpush1.msra.mxu0 0.0
    %1314 = vmatprep.subr.mxu0 0.0
    %1315 = vmatpush1.msra.mxu0 0.0
    %1316 = vmatprep.subr.mxu0 0.0
    %1317 = vmatpush1.msra.mxu0 0.0
    %1318 = vmatprep.subr.mxu0 0.0
    %1319 = vmatpush1.msra.mxu0 0.0
    %1320 = vmatprep.subr.mxu0 0.0
    %1321 = vmatpush1.msra.mxu0 0.0
    %1322 = vmatprep.subr.mxu0 0.0
    %1323 = vmatpush1.msra.mxu0 0.0
    %1324 = vmatprep.subr.mxu0 0.0
    %1325 = vmatpush1.msra.mxu0 0.0
    %1326 = vmatprep.subr.mxu0 0.0
    %1327 = vmatpush1.msra.mxu0 0.0
    %1328 = vmatprep.subr.mxu0 0.0
    %1329 = vmatpush1.msra.mxu0 %v345
    %1330 = vmatprep.subr.mxu0 0.0
    %1331 = vmatpush1.msra.mxu0 %v339
    %1332 = vmatprep.subr.mxu0 0.0
    %1333 = vmatpush2.msra.mxu0 0.0
    %1334 = vmatprep.subr.mxu0 0.0
    %1335 = vmatpush2.msra.mxu0 0.0
    %1336 = vmatprep.subr.mxu0 0.0
    %1337 = vmatpush2.msra.mxu0 0.0
    %1338 = vmatprep.subr.mxu0 0.0
    %1339 = vmatpush2.msra.mxu0 0.0
    %1340 = vmatprep.subr.mxu0 0.0
    %1341 = vmatpush2.msra.mxu0 0.0
    %1342 = vmatprep.subr.mxu0 0.0
    %1343 = vmatpush2.msra.mxu0 0.0
    %1344 = vmatprep.subr.mxu0 0.0
    %1345 = vmatpush2.msra.mxu0 0.0
    %1346 = vmatprep.subr.mxu0 0.0
    %1347 = vmatpush2.msra.mxu0 0.0
    %1348 = vmatprep.subr.mxu0 0.0
    %1349 = vmatpush2.msra.mxu0 0.0
    %1350 = vmatprep.subr.mxu0 0.0
    %1351 = vmatpush2.msra.mxu0 0.0
    %1352 = vmatprep.subr.mxu0 0.0
    %1353 = vmatpush2.msra.mxu0 0.0
    %1354 = vmatprep.subr.mxu0 0.0
    %1355 = vmatpush2.msra.mxu0 0.0
    %1356 = vmatprep.subr.mxu0 0.0
    %1357 = vmatpush2.msra.mxu0 0.0
    %1358 = vmatprep.subr.mxu0 0.0
    %1359 = vmatpush2.msra.mxu0 0.0
    %1360 = vmatprep.subr.mxu0 0.0
    %1361 = vmatpush2.msra.mxu0 0.0
    %1362 = vmatprep.subr.mxu0 0.0
    %1363 = vmatpush2.msra.mxu0 0.0
    %1364 = vmatprep.mubr.f32.mxu0 0.0
    %1365 = vmatmul.mubr.f32.gmra.mxu0 %v1295
    %v1366 = vpop.f32.mrf.mxu0
    %v1367 = vadd.f32 0.0, %v1366
    %v1368 = vpop.f32.mrf.mxu0
    %1369 = vmatprep.mubr.f32.mxu0 0.0
    %1370 = vmatmul.mubr.f32.gmra.mxu0 %v1298
    %v1371 = vpop.f32.mrf.mxu0
    %v1372 = vadd.f32 0.0, %v1371
    %v1373 = vpop.f32.mrf.mxu0
    %1374 = vdwg.mxu0
    %v1376 = vsel %vm44, %v1267, 0
    %v1379 = vsel %vm44, %v1269, 0
    %1381 = vmatprep.subr.mxu0 0.0
    %1382 = vmatpush1.msra.mxu0 0.0
    %1383 = vmatprep.subr.mxu0 0.0
    %1384 = vmatpush1.msra.mxu0 0.0
    %1385 = vmatprep.subr.mxu0 0.0
    %1386 = vmatpush1.msra.mxu0 0.0
    %1387 = vmatprep.subr.mxu0 0.0
    %1388 = vmatpush1.msra.mxu0 0.0
    %1389 = vmatprep.subr.mxu0 0.0
    %1390 = vmatpush1.msra.mxu0 0.0
    %1391 = vmatprep.subr.mxu0 0.0
    %1392 = vmatpush1.msra.mxu0 0.0
    %1393 = vmatprep.subr.mxu0 0.0
    %1394 = vmatpush1.msra.mxu0 0.0
    %1395 = vmatprep.subr.mxu0 0.0
    %1396 = vmatpush1.msra.mxu0 0.0
    %1397 = vmatprep.subr.mxu0 0.0
    %1398 = vmatpush1.msra.mxu0 0.0
    %1399 = vmatprep.subr.mxu0 0.0
    %1400 = vmatpush1.msra.mxu0 0.0
    %1401 = vmatprep.subr.mxu0 0.0
    %1402 = vmatpush1.msra.mxu0 0.0
    %1403 = vmatprep.subr.mxu0 0.0
    %1404 = vmatpush1.msra.mxu0 0.0
    %1405 = vmatprep.subr.mxu0 0.0
    %1406 = vmatpush1.msra.mxu0 0.0
    %1407 = vmatprep.subr.mxu0 0.0
    %1408 = vmatpush1.msra.mxu0 0.0
    %1409 = vmatprep.subr.mxu0 0.0
    %1410 = vmatpush1.msra.mxu0 %v414
    %1411 = vmatprep.subr.mxu0 0.0
    %1412 = vmatpush1.msra.mxu0 %v412
    %1413 = vmatprep.subr.mxu0 0.0
    %1414 = vmatpush2.msra.mxu0 0.0
    %1415 = vmatprep.subr.mxu0 0.0
    %1416 = vmatpush2.msra.mxu0 0.0
    %1417 = vmatprep.subr.mxu0 0.0
    %1418 = vmatpush2.msra.mxu0 0.0
    %1419 = vmatprep.subr.mxu0 0.0
    %1420 = vmatpush2.msra.mxu0 0.0
    %1421 = vmatprep.subr.mxu0 0.0
    %1422 = vmatpush2.msra.mxu0 0.0
    %1423 = vmatprep.subr.mxu0 0.0
    %1424 = vmatpush2.msra.mxu0 0.0
    %1425 = vmatprep.subr.mxu0 0.0
    %1426 = vmatpush2.msra.mxu0 0.0
    %1427 = vmatprep.subr.mxu0 0.0
    %1428 = vmatpush2.msra.mxu0 0.0
    %1429 = vmatprep.subr.mxu0 0.0
    %1430 = vmatpush2.msra.mxu0 0.0
    %1431 = vmatprep.subr.mxu0 0.0
    %1432 = vmatpush2.msra.mxu0 0.0
    %1433 = vmatprep.subr.mxu0 0.0
    %1434 = vmatpush2.msra.mxu0 0.0
    %1435 = vmatprep.subr.mxu0 0.0
    %1436 = vmatpush2.msra.mxu0 0.0
    %1437 = vmatprep.subr.mxu0 0.0
    %1438 = vmatpush2.msra.mxu0 0.0
    %1439 = vmatprep.subr.mxu0 0.0
    %1440 = vmatpush2.msra.mxu0 0.0
    %1441 = vmatprep.subr.mxu0 0.0
    %1442 = vmatpush2.msra.mxu0 0.0
    %1443 = vmatprep.subr.mxu0 0.0
    %1444 = vmatpush2.msra.mxu0 0.0
    %1445 = vmatprep.mubr.f32.mxu0 0.0
    %1446 = vmatmul.mubr.f32.gmra.mxu0 %v1376
    %v1447 = vpop.f32.mrf.mxu0
    %v1448 = vadd.f32 0.0, %v1447
    %v1449 = vpop.f32.mrf.mxu0
    %1450 = vmatprep.mubr.f32.mxu0 0.0
    %1451 = vmatmul.mubr.f32.gmra.mxu0 %v1379
    %v1452 = vpop.f32.mrf.mxu0
    %v1453 = vadd.f32 0.0, %v1452
    %v1454 = vpop.f32.mrf.mxu0
    %1455 = vdwg.mxu0
    %v1457 = vsel %vm44, %v1271, 0
    %v1460 = vsel %vm44, %v1273, 0
    %1462 = vmatprep.subr.mxu0 0.0
    %1463 = vmatpush1.msra.mxu0 0.0
    %1464 = vmatprep.subr.mxu0 0.0
    %1465 = vmatpush1.msra.mxu0 0.0
    %1466 = vmatprep.subr.mxu0 0.0
    %1467 = vmatpush1.msra.mxu0 0.0
    %1468 = vmatprep.subr.mxu0 0.0
    %1469 = vmatpush1.msra.mxu0 0.0
    %1470 = vmatprep.subr.mxu0 0.0
    %1471 = vmatpush1.msra.mxu0 0.0
    %1472 = vmatprep.subr.mxu0 0.0
    %1473 = vmatpush1.msra.mxu0 0.0
    %1474 = vmatprep.subr.mxu0 0.0
    %1475 = vmatpush1.msra.mxu0 0.0
    %1476 = vmatprep.subr.mxu0 0.0
    %1477 = vmatpush1.msra.mxu0 0.0
    %1478 = vmatprep.subr.mxu0 0.0
    %1479 = vmatpush1.msra.mxu0 0.0
    %1480 = vmatprep.subr.mxu0 0.0
    %1481 = vmatpush1.msra.mxu0 0.0
    %1482 = vmatprep.subr.mxu0 0.0
    %1483 = vmatpush1.msra.mxu0 0.0
    %1484 = vmatprep.subr.mxu0 0.0
    %1485 = vmatpush1.msra.mxu0 0.0
    %1486 = vmatprep.subr.mxu0 0.0
    %1487 = vmatpush1.msra.mxu0 0.0
    %1488 = vmatprep.subr.mxu0 0.0
    %1489 = vmatpush1.msra.mxu0 0.0
    %1490 = vmatprep.subr.mxu0 0.0
    %1491 = vmatpush1.msra.mxu0 %v420
    %1492 = vmatprep.subr.mxu0 0.0
    %1493 = vmatpush1.msra.mxu0 %v418
    %1494 = vmatprep.subr.mxu0 0.0
    %1495 = vmatpush2.msra.mxu0 0.0
    %1496 = vmatprep.subr.mxu0 0.0
    %1497 = vmatpush2.msra.mxu0 0.0
    %1498 = vmatprep.subr.mxu0 0.0
    %1499 = vmatpush2.msra.mxu0 0.0
    %1500 = vmatprep.subr.mxu0 0.0
    %1501 = vmatpush2.msra.mxu0 0.0
    %1502 = vmatprep.subr.mxu0 0.0
    %1503 = vmatpush2.msra.mxu0 0.0
    %1504 = vmatprep.subr.mxu0 0.0
    %1505 = vmatpush2.msra.mxu0 0.0
    %1506 = vmatprep.subr.mxu0 0.0
    %1507 = vmatpush2.msra.mxu0 0.0
    %1508 = vmatprep.subr.mxu0 0.0
    %1509 = vmatpush2.msra.mxu0 0.0
    %1510 = vmatprep.subr.mxu0 0.0
    %1511 = vmatpush2.msra.mxu0 0.0
    %1512 = vmatprep.subr.mxu0 0.0
    %1513 = vmatpush2.msra.mxu0 0.0
    %1514 = vmatprep.subr.mxu0 0.0
    %1515 = vmatpush2.msra.mxu0 0.0
    %1516 = vmatprep.subr.mxu0 0.0
    %1517 = vmatpush2.msra.mxu0 0.0
    %1518 = vmatprep.subr.mxu0 0.0
    %1519 = vmatpush2.msra.mxu0 0.0
    %1520 = vmatprep.subr.mxu0 0.0
    %1521 = vmatpush2.msra.mxu0 0.0
    %1522 = vmatprep.subr.mxu0 0.0
    %1523 = vmatpush2.msra.mxu0 0.0
    %1524 = vmatprep.subr.mxu0 0.0
    %1525 = vmatpush2.msra.mxu0 0.0
    %1526 = vmatprep.mubr.f32.mxu0 0.0
    %1527 = vmatmul.mubr.f32.gmra.mxu0 %v1457
    %v1528 = vpop.f32.mrf.mxu0
    %v1529 = vadd.f32 0.0, %v1528
    %v1530 = vpop.f32.mrf.mxu0
    %1531 = vmatprep.mubr.f32.mxu0 0.0
    %1532 = vmatmul.mubr.f32.gmra.mxu0 %v1460
    %v1533 = vpop.f32.mrf.mxu0
    %v1534 = vadd.f32 0.0, %v1533
    %v1535 = vpop.f32.mrf.mxu0
    %1536 = vdwg.mxu0
    %v1538 = vsel %vm44, %v1275, 0
    %v1541 = vsel %vm44, %v1277, 0
    %1543 = vmatprep.subr.mxu0 0.0
    %1544 = vmatpush1.msra.mxu0 0.0
    %1545 = vmatprep.subr.mxu0 0.0
    %1546 = vmatpush1.msra.mxu0 0.0
    %1547 = vmatprep.subr.mxu0 0.0
    %1548 = vmatpush1.msra.mxu0 0.0
    %1549 = vmatprep.subr.mxu0 0.0
    %1550 = vmatpush1.msra.mxu0 0.0
    %1551 = vmatprep.subr.mxu0 0.0
    %1552 = vmatpush1.msra.mxu0 0.0
    %1553 = vmatprep.subr.mxu0 0.0
    %1554 = vmatpush1.msra.mxu0 0.0
    %1555 = vmatprep.subr.mxu0 0.0
    %1556 = vmatpush1.msra.mxu0 0.0
    %1557 = vmatprep.subr.mxu0 0.0
    %1558 = vmatpush1.msra.mxu0 0.0
    %1559 = vmatprep.subr.mxu0 0.0
    %1560 = vmatpush1.msra.mxu0 0.0
    %1561 = vmatprep.subr.mxu0 0.0
    %1562 = vmatpush1.msra.mxu0 0.0
    %1563 = vmatprep.subr.mxu0 0.0
    %1564 = vmatpush1.msra.mxu0 0.0
    %1565 = vmatprep.subr.mxu0 0.0
    %1566 = vmatpush1.msra.mxu0 0.0
    %1567 = vmatprep.subr.mxu0 0.0
    %1568 = vmatpush1.msra.mxu0 0.0
    %1569 = vmatprep.subr.mxu0 0.0
    %1570 = vmatpush1.msra.mxu0 0.0
    %1571 = vmatprep.subr.mxu0 0.0
    %1572 = vmatpush1.msra.mxu0 %v426
    %1573 = vmatprep.subr.mxu0 0.0
    %1574 = vmatpush1.msra.mxu0 %v424
    %1575 = vmatprep.subr.mxu0 0.0
    %1576 = vmatpush2.msra.mxu0 0.0
    %1577 = vmatprep.subr.mxu0 0.0
    %1578 = vmatpush2.msra.mxu0 0.0
    %1579 = vmatprep.subr.mxu0 0.0
    %1580 = vmatpush2.msra.mxu0 0.0
    %1581 = vmatprep.subr.mxu0 0.0
    %1582 = vmatpush2.msra.mxu0 0.0
    %1583 = vmatprep.subr.mxu0 0.0
    %1584 = vmatpush2.msra.mxu0 0.0
    %1585 = vmatprep.subr.mxu0 0.0
    %1586 = vmatpush2.msra.mxu0 0.0
    %1587 = vmatprep.subr.mxu0 0.0
    %1588 = vmatpush2.msra.mxu0 0.0
    %1589 = vmatprep.subr.mxu0 0.0
    %1590 = vmatpush2.msra.mxu0 0.0
    %1591 = vmatprep.subr.mxu0 0.0
    %1592 = vmatpush2.msra.mxu0 0.0
    %1593 = vmatprep.subr.mxu0 0.0
    %1594 = vmatpush2.msra.mxu0 0.0
    %1595 = vmatprep.subr.mxu0 0.0
    %1596 = vmatpush2.msra.mxu0 0.0
    %1597 = vmatprep.subr.mxu0 0.0
    %1598 = vmatpush2.msra.mxu0 0.0
    %1599 = vmatprep.subr.mxu0 0.0
    %1600 = vmatpush2.msra.mxu0 0.0
    %1601 = vmatprep.subr.mxu0 0.0
    %1602 = vmatpush2.msra.mxu0 0.0
    %1603 = vmatprep.subr.mxu0 0.0
    %1604 = vmatpush2.msra.mxu0 0.0
    %1605 = vmatprep.subr.mxu0 0.0
    %1606 = vmatpush2.msra.mxu0 0.0
    %1607 = vmatprep.mubr.f32.mxu0 0.0
    %1608 = vmatmul.mubr.f32.gmra.mxu0 %v1538
    %v1609 = vpop.f32.mrf.mxu0
    %v1610 = vadd.f32 0.0, %v1609
    %v1611 = vpop.f32.mrf.mxu0
    %1612 = vmatprep.mubr.f32.mxu0 0.0
    %1613 = vmatmul.mubr.f32.gmra.mxu0 %v1541
    %v1614 = vpop.f32.mrf.mxu0
    %v1615 = vadd.f32 0.0, %v1614
    %v1616 = vpop.f32.mrf.mxu0
    %1617 = vdwg.mxu0
    %v1619 = vsel %vm44, %v1279, 0
    %v1622 = vsel %vm44, %v1281, 0
    %1624 = vmatprep.subr.mxu0 0.0
    %1625 = vmatpush1.msra.mxu0 0.0
    %1626 = vmatprep.subr.mxu0 0.0
    %1627 = vmatpush1.msra.mxu0 0.0
    %1628 = vmatprep.subr.mxu0 0.0
    %1629 = vmatpush1.msra.mxu0 0.0
    %1630 = vmatprep.subr.mxu0 0.0
    %1631 = vmatpush1.msra.mxu0 0.0
    %1632 = vmatprep.subr.mxu0 0.0
    %1633 = vmatpush1.msra.mxu0 0.0
    %1634 = vmatprep.subr.mxu0 0.0
    %1635 = vmatpush1.msra.mxu0 0.0
    %1636 = vmatprep.subr.mxu0 0.0
    %1637 = vmatpush1.msra.mxu0 0.0
    %1638 = vmatprep.subr.mxu0 0.0
    %1639 = vmatpush1.msra.mxu0 0.0
    %1640 = vmatprep.subr.mxu0 0.0
    %1641 = vmatpush1.msra.mxu0 0.0
    %1642 = vmatprep.subr.mxu0 0.0
    %1643 = vmatpush1.msra.mxu0 0.0
    %1644 = vmatprep.subr.mxu0 0.0
    %1645 = vmatpush1.msra.mxu0 0.0
    %1646 = vmatprep.subr.mxu0 0.0
    %1647 = vmatpush1.msra.mxu0 0.0
    %1648 = vmatprep.subr.mxu0 0.0
    %1649 = vmatpush1.msra.mxu0 0.0
    %1650 = vmatprep.subr.mxu0 0.0
    %1651 = vmatpush1.msra.mxu0 0.0
    %1652 = vmatprep.subr.mxu0 0.0
    %1653 = vmatpush1.msra.mxu0 %v432
    %1654 = vmatprep.subr.mxu0 0.0
    %1655 = vmatpush1.msra.mxu0 %v430
    %1656 = vmatprep.subr.mxu0 0.0
    %1657 = vmatpush2.msra.mxu0 0.0
    %1658 = vmatprep.subr.mxu0 0.0
    %1659 = vmatpush2.msra.mxu0 0.0
    %1660 = vmatprep.subr.mxu0 0.0
    %1661 = vmatpush2.msra.mxu0 0.0
    %1662 = vmatprep.subr.mxu0 0.0
    %1663 = vmatpush2.msra.mxu0 0.0
    %1664 = vmatprep.subr.mxu0 0.0
    %1665 = vmatpush2.msra.mxu0 0.0
    %1666 = vmatprep.subr.mxu0 0.0
    %1667 = vmatpush2.msra.mxu0 0.0
    %1668 = vmatprep.subr.mxu0 0.0
    %1669 = vmatpush2.msra.mxu0 0.0
    %1670 = vmatprep.subr.mxu0 0.0
    %1671 = vmatpush2.msra.mxu0 0.0
    %1672 = vmatprep.subr.mxu0 0.0
    %1673 = vmatpush2.msra.mxu0 0.0
    %1674 = vmatprep.subr.mxu0 0.0
    %1675 = vmatpush2.msra.mxu0 0.0
    %1676 = vmatprep.subr.mxu0 0.0
    %1677 = vmatpush2.msra.mxu0 0.0
    %1678 = vmatprep.subr.mxu0 0.0
    %1679 = vmatpush2.msra.mxu0 0.0
    %1680 = vmatprep.subr.mxu0 0.0
    %1681 = vmatpush2.msra.mxu0 0.0
    %1682 = vmatprep.subr.mxu0 0.0
    %1683 = vmatpush2.msra.mxu0 0.0
    %1684 = vmatprep.subr.mxu0 0.0
    %1685 = vmatpush2.msra.mxu0 0.0
    %1686 = vmatprep.subr.mxu0 0.0
    %1687 = vmatpush2.msra.mxu0 0.0
    %1688 = vmatprep.mubr.f32.mxu0 0.0
    %1689 = vmatmul.mubr.f32.gmra.mxu0 %v1619
    %v1690 = vpop.f32.mrf.mxu0
    %v1691 = vadd.f32 0.0, %v1690
    %v1692 = vpop.f32.mrf.mxu0
    %1693 = vmatprep.mubr.f32.mxu0 0.0
    %1694 = vmatmul.mubr.f32.gmra.mxu0 %v1622
    %v1695 = vpop.f32.mrf.mxu0
    %v1696 = vadd.f32 0.0, %v1695
    %v1697 = vpop.f32.mrf.mxu0
    %1698 = vdwg.mxu0
    %v1700 = vsel %vm44, %v1283, 0
    %v1703 = vsel %vm44, %v1285, 0
    %1705 = vmatprep.subr.mxu0 0.0
    %1706 = vmatpush1.msra.mxu0 0.0
    %1707 = vmatprep.subr.mxu0 0.0
    %1708 = vmatpush1.msra.mxu0 0.0
    %1709 = vmatprep.subr.mxu0 0.0
    %1710 = vmatpush1.msra.mxu0 0.0
    %1711 = vmatprep.subr.mxu0 0.0
    %1712 = vmatpush1.msra.mxu0 0.0
    %1713 = vmatprep.subr.mxu0 0.0
    %1714 = vmatpush1.msra.mxu0 0.0
    %1715 = vmatprep.subr.mxu0 0.0
    %1716 = vmatpush1.msra.mxu0 0.0
    %1717 = vmatprep.subr.mxu0 0.0
    %1718 = vmatpush1.msra.mxu0 0.0
    %1719 = vmatprep.subr.mxu0 0.0
    %1720 = vmatpush1.msra.mxu0 0.0
    %1721 = vmatprep.subr.mxu0 0.0
    %1722 = vmatpush1.msra.mxu0 0.0
    %1723 = vmatprep.subr.mxu0 0.0
    %1724 = vmatpush1.msra.mxu0 0.0
    %1725 = vmatprep.subr.mxu0 0.0
    %1726 = vmatpush1.msra.mxu0 0.0
    %1727 = vmatprep.subr.mxu0 0.0
    %1728 = vmatpush1.msra.mxu0 0.0
    %1729 = vmatprep.subr.mxu0 0.0
    %1730 = vmatpush1.msra.mxu0 0.0
    %1731 = vmatprep.subr.mxu0 0.0
    %1732 = vmatpush1.msra.mxu0 0.0
    %1733 = vmatprep.subr.mxu0 0.0
    %1734 = vmatpush1.msra.mxu0 %v438
    %1735 = vmatprep.subr.mxu0 0.0
    %1736 = vmatpush1.msra.mxu0 %v436
    %1737 = vmatprep.subr.mxu0 0.0
    %1738 = vmatpush2.msra.mxu0 0.0
    %1739 = vmatprep.subr.mxu0 0.0
    %1740 = vmatpush2.msra.mxu0 0.0
    %1741 = vmatprep.subr.mxu0 0.0
    %1742 = vmatpush2.msra.mxu0 0.0
    %1743 = vmatprep.subr.mxu0 0.0
    %1744 = vmatpush2.msra.mxu0 0.0
    %1745 = vmatprep.subr.mxu0 0.0
    %1746 = vmatpush2.msra.mxu0 0.0
    %1747 = vmatprep.subr.mxu0 0.0
    %1748 = vmatpush2.msra.mxu0 0.0
    %1749 = vmatprep.subr.mxu0 0.0
    %1750 = vmatpush2.msra.mxu0 0.0
    %1751 = vmatprep.subr.mxu0 0.0
    %1752 = vmatpush2.msra.mxu0 0.0
    %1753 = vmatprep.subr.mxu0 0.0
    %1754 = vmatpush2.msra.mxu0 0.0
    %1755 = vmatprep.subr.mxu0 0.0
    %1756 = vmatpush2.msra.mxu0 0.0
    %1757 = vmatprep.subr.mxu0 0.0
    %1758 = vmatpush2.msra.mxu0 0.0
    %1759 = vmatprep.subr.mxu0 0.0
    %1760 = vmatpush2.msra.mxu0 0.0
    %1761 = vmatprep.subr.mxu0 0.0
    %1762 = vmatpush2.msra.mxu0 0.0
    %1763 = vmatprep.subr.mxu0 0.0
    %1764 = vmatpush2.msra.mxu0 0.0
    %1765 = vmatprep.subr.mxu0 0.0
    %1766 = vmatpush2.msra.mxu0 0.0
    %1767 = vmatprep.subr.mxu0 0.0
    %1768 = vmatpush2.msra.mxu0 0.0
    %1769 = vmatprep.mubr.f32.mxu0 0.0
    %1770 = vmatmul.mubr.f32.gmra.mxu0 %v1700
    %v1771 = vpop.f32.mrf.mxu0
    %v1772 = vadd.f32 0.0, %v1771
    %v1773 = vpop.f32.mrf.mxu0
    %1774 = vmatprep.mubr.f32.mxu0 0.0
    %1775 = vmatmul.mubr.f32.gmra.mxu0 %v1703
    %v1776 = vpop.f32.mrf.mxu0
    %v1777 = vadd.f32 0.0, %v1776
    %v1778 = vpop.f32.mrf.mxu0
    %1779 = vdwg.mxu0
    %v1781 = vsel %vm44, %v1287, 0
    %v1784 = vsel %vm44, %v1289, 0
    %1786 = vmatprep.subr.mxu0 0.0
    %1787 = vmatpush1.msra.mxu0 0.0
    %1788 = vmatprep.subr.mxu0 0.0
    %1789 = vmatpush1.msra.mxu0 0.0
    %1790 = vmatprep.subr.mxu0 0.0
    %1791 = vmatpush1.msra.mxu0 0.0
    %1792 = vmatprep.subr.mxu0 0.0
    %1793 = vmatpush1.msra.mxu0 0.0
    %1794 = vmatprep.subr.mxu0 0.0
    %1795 = vmatpush1.msra.mxu0 0.0
    %1796 = vmatprep.subr.mxu0 0.0
    %1797 = vmatpush1.msra.mxu0 0.0
    %1798 = vmatprep.subr.mxu0 0.0
    %1799 = vmatpush1.msra.mxu0 0.0
    %1800 = vmatprep.subr.mxu0 0.0
    %1801 = vmatpush1.msra.mxu0 0.0
    %1802 = vmatprep.subr.mxu0 0.0
    %1803 = vmatpush1.msra.mxu0 0.0
    %1804 = vmatprep.subr.mxu0 0.0
    %1805 = vmatpush1.msra.mxu0 0.0
    %1806 = vmatprep.subr.mxu0 0.0
    %1807 = vmatpush1.msra.mxu0 0.0
    %1808 = vmatprep.subr.mxu0 0.0
    %1809 = vmatpush1.msra.mxu0 0.0
    %1810 = vmatprep.subr.mxu0 0.0
    %1811 = vmatpush1.msra.mxu0 0.0
    %1812 = vmatprep.subr.mxu0 0.0
    %1813 = vmatpush1.msra.mxu0 0.0
    %1814 = vmatprep.subr.mxu0 0.0
    %1815 = vmatpush1.msra.mxu0 %v444
    %1816 = vmatprep.subr.mxu0 0.0
    %1817 = vmatpush1.msra.mxu0 %v442
    %1818 = vmatprep.subr.mxu0 0.0
    %1819 = vmatpush2.msra.mxu0 0.0
    %1820 = vmatprep.subr.mxu0 0.0
    %1821 = vmatpush2.msra.mxu0 0.0
    %1822 = vmatprep.subr.mxu0 0.0
    %1823 = vmatpush2.msra.mxu0 0.0
    %1824 = vmatprep.subr.mxu0 0.0
    %1825 = vmatpush2.msra.mxu0 0.0
    %1826 = vmatprep.subr.mxu0 0.0
    %1827 = vmatpush2.msra.mxu0 0.0
    %1828 = vmatprep.subr.mxu0 0.0
    %1829 = vmatpush2.msra.mxu0 0.0
    %1830 = vmatprep.subr.mxu0 0.0
    %1831 = vmatpush2.msra.mxu0 0.0
    %1832 = vmatprep.subr.mxu0 0.0
    %1833 = vmatpush2.msra.mxu0 0.0
    %1834 = vmatprep.subr.mxu0 0.0
    %1835 = vmatpush2.msra.mxu0 0.0
    %1836 = vmatprep.subr.mxu0 0.0
    %1837 = vmatpush2.msra.mxu0 0.0
    %1838 = vmatprep.subr.mxu0 0.0
    %1839 = vmatpush2.msra.mxu0 0.0
    %1840 = vmatprep.subr.mxu0 0.0
    %1841 = vmatpush2.msra.mxu0 0.0
    %1842 = vmatprep.subr.mxu0 0.0
    %1843 = vmatpush2.msra.mxu0 0.0
    %1844 = vmatprep.subr.mxu0 0.0
    %1845 = vmatpush2.msra.mxu0 0.0
    %1846 = vmatprep.subr.mxu0 0.0
    %1847 = vmatpush2.msra.mxu0 0.0
    %1848 = vmatprep.subr.mxu0 0.0
    %1849 = vmatpush2.msra.mxu0 0.0
    %1850 = vmatprep.mubr.f32.mxu0 0.0
    %1851 = vmatmul.mubr.f32.gmra.mxu0 %v1781
    %v1852 = vpop.f32.mrf.mxu0
    %v1853 = vadd.f32 0.0, %v1852
    %v1854 = vpop.f32.mrf.mxu0
    %1855 = vmatprep.mubr.f32.mxu0 0.0
    %1856 = vmatmul.mubr.f32.gmra.mxu0 %v1784
    %v1857 = vpop.f32.mrf.mxu0
    %v1858 = vadd.f32 0.0, %v1857
    %v1859 = vpop.f32.mrf.mxu0
    %1860 = vdwg.mxu0
    %v1862 = vsel %vm44, %v1291, 0
    %v1865 = vsel %vm44, %v1293, 0
    %1867 = vmatprep.subr.mxu0 0.0
    %1868 = vmatpush1.msra.mxu0 0.0
    %1869 = vmatprep.subr.mxu0 0.0
    %1870 = vmatpush1.msra.mxu0 0.0
    %1871 = vmatprep.subr.mxu0 0.0
    %1872 = vmatpush1.msra.mxu0 0.0
    %1873 = vmatprep.subr.mxu0 0.0
    %1874 = vmatpush1.msra.mxu0 0.0
    %1875 = vmatprep.subr.mxu0 0.0
    %1876 = vmatpush1.msra.mxu0 0.0
    %1877 = vmatprep.subr.mxu0 0.0
    %1878 = vmatpush1.msra.mxu0 0.0
    %1879 = vmatprep.subr.mxu0 0.0
    %1880 = vmatpush1.msra.mxu0 0.0
    %1881 = vmatprep.subr.mxu0 0.0
    %1882 = vmatpush1.msra.mxu0 0.0
    %1883 = vmatprep.subr.mxu0 0.0
    %1884 = vmatpush1.msra.mxu0 0.0
    %1885 = vmatprep.subr.mxu0 0.0
    %1886 = vmatpush1.msra.mxu0 0.0
    %1887 = vmatprep.subr.mxu0 0.0
    %1888 = vmatpush1.msra.mxu0 0.0
    %1889 = vmatprep.subr.mxu0 0.0
    %1890 = vmatpush1.msra.mxu0 0.0
    %1891 = vmatprep.subr.mxu0 0.0
    %1892 = vmatpush1.msra.mxu0 0.0
    %1893 = vmatprep.subr.mxu0 0.0
    %1894 = vmatpush1.msra.mxu0 0.0
    %1895 = vmatprep.subr.mxu0 0.0
    %1896 = vmatpush1.msra.mxu0 %v450
    %1897 = vmatprep.subr.mxu0 0.0
    %1898 = vmatpush1.msra.mxu0 %v448
    %1899 = vmatprep.subr.mxu0 0.0
    %1900 = vmatpush2.msra.mxu0 0.0
    %1901 = vmatprep.subr.mxu0 0.0
    %1902 = vmatpush2.msra.mxu0 0.0
    %1903 = vmatprep.subr.mxu0 0.0
    %1904 = vmatpush2.msra.mxu0 0.0
    %1905 = vmatprep.subr.mxu0 0.0
    %1906 = vmatpush2.msra.mxu0 0.0
    %1907 = vmatprep.subr.mxu0 0.0
    %1908 = vmatpush2.msra.mxu0 0.0
    %1909 = vmatprep.subr.mxu0 0.0
    %1910 = vmatpush2.msra.mxu0 0.0
    %1911 = vmatprep.subr.mxu0 0.0
    %1912 = vmatpush2.msra.mxu0 0.0
    %1913 = vmatprep.subr.mxu0 0.0
    %1914 = vmatpush2.msra.mxu0 0.0
    %1915 = vmatprep.subr.mxu0 0.0
    %1916 = vmatpush2.msra.mxu0 0.0
    %1917 = vmatprep.subr.mxu0 0.0
    %1918 = vmatpush2.msra.mxu0 0.0
    %1919 = vmatprep.subr.mxu0 0.0
    %1920 = vmatpush2.msra.mxu0 0.0
    %1921 = vmatprep.subr.mxu0 0.0
    %1922 = vmatpush2.msra.mxu0 0.0
    %1923 = vmatprep.subr.mxu0 0.0
    %1924 = vmatpush2.msra.mxu0 0.0
    %1925 = vmatprep.subr.mxu0 0.0
    %1926 = vmatpush2.msra.mxu0 0.0
    %1927 = vmatprep.subr.mxu0 0.0
    %1928 = vmatpush2.msra.mxu0 0.0
    %1929 = vmatprep.subr.mxu0 0.0
    %1930 = vmatpush2.msra.mxu0 0.0
    %1931 = vmatprep.mubr.f32.mxu0 0.0
    %1932 = vmatmul.mubr.f32.gmra.mxu0 %v1862
    %v1933 = vpop.f32.mrf.mxu0
    %v1934 = vadd.f32 0.0, %v1933
    %v1935 = vpop.f32.mrf.mxu0
    %1936 = vmatprep.mubr.f32.mxu0 0.0
    %1937 = vmatmul.mubr.f32.gmra.mxu0 %v1865
    %v1938 = vpop.f32.mrf.mxu0
    %v1939 = vadd.f32 0.0, %v1938
    %v1940 = vpop.f32.mrf.mxu0
    %1941 = vdwg.mxu0
    %1944 = vrot.lane.b32.xlu0 %v1448, 8
    %v1945 = vpop.permute.xlu0 %1944
    %1946 = vrot.lane.b32.xlu0 %v1453, 8
    %v1947 = vpop.permute.xlu0 %1946
    %1952 = vrot.lane.b32.xlu0 %v1529, 16
    %v1953 = vpop.permute.xlu0 %1952
    %1954 = vrot.lane.b32.xlu0 %v1534, 16
    %v1955 = vpop.permute.xlu0 %1954
    %1960 = vrot.lane.b32.xlu0 %v1610, 24
    %v1961 = vpop.permute.xlu0 %1960
    %1962 = vrot.lane.b32.xlu0 %v1615, 24
    %v1963 = vpop.permute.xlu0 %1962
    %1968 = vrot.lane.b32.xlu0 %v1691, 32
    %v1969 = vpop.permute.xlu0 %1968
    %1970 = vrot.lane.b32.xlu0 %v1696, 32
    %v1971 = vpop.permute.xlu0 %1970
    %1976 = vrot.lane.b32.xlu0 %v1772, 40
    %v1977 = vpop.permute.xlu0 %1976
    %1978 = vrot.lane.b32.xlu0 %v1777, 40
    %v1979 = vpop.permute.xlu0 %1978
    %1984 = vrot.lane.b32.xlu0 %v1853, 48
    %v1985 = vpop.permute.xlu0 %1984
    %1986 = vrot.lane.b32.xlu0 %v1858, 48
    %v1987 = vpop.permute.xlu0 %1986
    %1992 = vrot.lane.b32.xlu0 %v1934, 56
    %v1993 = vpop.permute.xlu0 %1992
    %1994 = vrot.lane.b32.xlu0 %v1939, 56
    %v1995 = vpop.permute.xlu0 %1994
    %v1998 = vsel %vm453, %v1367, %v1945
    %v1999 = vsel %vm453, %v1372, %v1947
    %v2000 = vsel %vm44, %v1998, %v1953
    %v2001 = vsel %vm44, %v1999, %v1955
    %vm2002 = vcmask 195584
    %v2003 = vsel %vm2002, %v2000, %v1961
    %v2004 = vsel %vm2002, %v2001, %v1963
    %vm2005 = vcmask 261120
    %v2006 = vsel %vm2005, %v2003, %v1969
    %v2007 = vsel %vm2005, %v2004, %v1971
    %vm2008 = vcmask 326656
    %v2009 = vsel %vm2008, %v2006, %v1977
    %v2010 = vsel %vm2008, %v2007, %v1979
    %vm2011 = vcmask 392192
    %v2012 = vsel %vm2011, %v2009, %v1985
    %v2013 = vsel %vm2011, %v2010, %v1987
    %vm2014 = vcmask 457728
    %v2015 = vsel %vm2014, %v2012, %v1993
    %v2016 = vsel %vm2014, %v2013, %v1995
    %v2017 = vld [vmem:[#allocation2 + $0xa0] sm:$0xff]
    %v2018 = vld [vmem:[#allocation2 + $0xb0] sm:$0xff]
    %v2019 = vld [vmem:[#allocation2 + $0xc0] sm:$0xff]
    %v2020 = vld [vmem:[#allocation2 + $0xd0] sm:$0xff]
    %v2021 = vld [vmem:[#allocation2 + $0xe0] sm:$0xff]
    %v2022 = vld [vmem:[#allocation2 + $0xf0] sm:$0xff]
    %v2023 = vld [vmem:[#allocation2 + $0x100] sm:$0xff]
    %v2024 = vld [vmem:[#allocation2 + $0x110] sm:$0xff]
    %v2025 = vld [vmem:[#allocation2 + $0x7a2] ss:$0 sm:$0xff]
    %v2027 = vsel %vm263, %v2015, 0
    %v2030 = vsel %vm263, %v2016, 0
    %2032 = vmatprep.subr.mxu0 0.0
    %2033 = vmatpush1.msra.mxu0 0.0
    %2034 = vmatprep.subr.mxu0 0.0
    %2035 = vmatpush1.msra.mxu0 0.0
    %2036 = vmatprep.subr.mxu0 0.0
    %2037 = vmatpush1.msra.mxu0 0.0
    %2038 = vmatprep.subr.mxu0 0.0
    %2039 = vmatpush1.msra.mxu0 0.0
    %2040 = vmatprep.subr.mxu0 0.0
    %2041 = vmatpush1.msra.mxu0 0.0
    %2042 = vmatprep.subr.mxu0 0.0
    %2043 = vmatpush1.msra.mxu0 0.0
    %2044 = vmatprep.subr.mxu0 0.0
    %2045 = vmatpush1.msra.mxu0 0.0
    %2046 = vmatprep.subr.mxu0 0.0
    %2047 = vmatpush1.msra.mxu0 0.0
    %2048 = vmatprep.subr.mxu0 0.0
    %2049 = vmatpush1.msra.mxu0 %v2024
    %2050 = vmatprep.subr.mxu0 0.0
    %2051 = vmatpush1.msra.mxu0 %v2023
    %2052 = vmatprep.subr.mxu0 0.0
    %2053 = vmatpush1.msra.mxu0 %v2022
    %2054 = vmatprep.subr.mxu0 0.0
    %2055 = vmatpush1.msra.mxu0 %v2021
    %2056 = vmatprep.subr.mxu0 0.0
    %2057 = vmatpush1.msra.mxu0 %v2020
    %2058 = vmatprep.subr.mxu0 0.0
    %2059 = vmatpush1.msra.mxu0 %v2019
    %2060 = vmatprep.subr.mxu0 0.0
    %2061 = vmatpush1.msra.mxu0 %v2018
    %2062 = vmatprep.subr.mxu0 0.0
    %2063 = vmatpush1.msra.mxu0 %v2017
    %2064 = vmatprep.subr.mxu0 0.0
    %2065 = vmatpush2.msra.mxu0 0.0
    %2066 = vmatprep.subr.mxu0 0.0
    %2067 = vmatpush2.msra.mxu0 0.0
    %2068 = vmatprep.subr.mxu0 0.0
    %2069 = vmatpush2.msra.mxu0 0.0
    %2070 = vmatprep.subr.mxu0 0.0
    %2071 = vmatpush2.msra.mxu0 0.0
    %2072 = vmatprep.subr.mxu0 0.0
    %2073 = vmatpush2.msra.mxu0 0.0
    %2074 = vmatprep.subr.mxu0 0.0
    %2075 = vmatpush2.msra.mxu0 0.0
    %2076 = vmatprep.subr.mxu0 0.0
    %2077 = vmatpush2.msra.mxu0 0.0
    %2078 = vmatprep.subr.mxu0 0.0
    %2079 = vmatpush2.msra.mxu0 0.0
    %2080 = vmatprep.subr.mxu0 0.0
    %2081 = vmatpush2.msra.mxu0 0.0
    %2082 = vmatprep.subr.mxu0 0.0
    %2083 = vmatpush2.msra.mxu0 0.0
    %2084 = vmatprep.subr.mxu0 0.0
    %2085 = vmatpush2.msra.mxu0 0.0
    %2086 = vmatprep.subr.mxu0 0.0
    %2087 = vmatpush2.msra.mxu0 0.0
    %2088 = vmatprep.subr.mxu0 0.0
    %2089 = vmatpush2.msra.mxu0 0.0
    %2090 = vmatprep.subr.mxu0 0.0
    %2091 = vmatpush2.msra.mxu0 0.0
    %2092 = vmatprep.subr.mxu0 0.0
    %2093 = vmatpush2.msra.mxu0 0.0
    %2094 = vmatprep.subr.mxu0 0.0
    %2095 = vmatpush2.msra.mxu0 0.0
    %2096 = vmatprep.mubr.f32.mxu0 0.0
    %2097 = vmatmul.mubr.f32.gmra.mxu0 %v2027
    %v2098 = vpop.f32.mrf.mxu0
    %v2099 = vadd.f32 %v2025, %v2098
    %v2100 = vpop.f32.mrf.mxu0
    %2101 = vmatprep.mubr.f32.mxu0 0.0
    %2102 = vmatmul.mubr.f32.gmra.mxu0 %v2030
    %v2103 = vpop.f32.mrf.mxu0
    %v2104 = vadd.f32 %v2025, %v2103
    %v2105 = vpop.f32.mrf.mxu0
    %2106 = vdwg.mxu0
    %v2107 = vadd.f32 %v118, %v2099
    %v2108 = vadd.f32 %v123, %v2104
    %v2109 = vld [vmem:[#allocation2 + $0x7a3] ss:$0 sm:$0xff]
    %v2110 = vld [vmem:[#allocation2 + $0x7a4] ss:$0 sm:$0xff]
    %v2111 = vsel %vm263, %v2107, 0.0
    %2112 = vadd.xlane.f32.xlu0 %v2111
    %v2113 = vpop.xlane.xlu0 %2112
    %v2114 = vsel %vm263, %v2108, 0.0
    %2115 = vadd.xlane.f32.xlu0 %v2114
    %v2116 = vpop.xlane.xlu0 %2115
    %v2117 = vrcp.pop 64.0
    %v2118 = vmul.f32 %v2113, %v2117
    %v2119 = vmul.f32 %v2116, %v2117
    %v2120 = vsub.f32 %v2107, %v2118
    %v2121 = vsub.f32 %v2108, %v2119
    %v2122 = vmul.f32 %v2120, %v2120
    %v2123 = vmul.f32 %v2121, %v2121
    %v2124 = vsel %vm263, %v2122, 0.0
    %2125 = vadd.xlane.f32.xlu0 %v2124
    %v2126 = vpop.xlane.xlu0 %2125
    %v2127 = vsel %vm263, %v2123, 0.0
    %2128 = vadd.xlane.f32.xlu0 %v2127
    %v2129 = vpop.xlane.xlu0 %2128
    %v2130 = vmul.f32 %v2126, %v2117
    %v2131 = vmul.f32 %v2129, %v2117
    %v2132 = vadd.f32 %v2130, 1e-05
    %v2133 = vadd.f32 %v2131, 1e-05
    %v2134 = vrsqrt.pop %v2132
    %v2135 = vrsqrt.pop %v2133
    %v2136 = vmul.f32 %v2120, %v2134
    %v2137 = vmul.f32 %v2121, %v2135
    %v2138 = vmul.f32 %v2136, %v2109
    %v2139 = vmul.f32 %v2137, %v2109
    %v2140 = vadd.f32 %v2138, %v2110
    %v2141 = vadd.f32 %v2139, %v2110
    %v2142 = vld [vmem:[#allocation2 + $0x120] sm:$0xff]
    %v2143 = vld [vmem:[#allocation2 + $0x128] sm:$0xff]
    %v2144 = vld [vmem:[#allocation2 + $0x130] sm:$0xff]
    %v2145 = vld [vmem:[#allocation2 + $0x138] sm:$0xff]
    %v2146 = vld [vmem:[#allocation2 + $0x140] sm:$0xff]
    %v2147 = vld [vmem:[#allocation2 + $0x148] sm:$0xff]
    %v2148 = vld [vmem:[#allocation2 + $0x150] sm:$0xff]
    %v2149 = vld [vmem:[#allocation2 + $0x158] sm:$0xff]
    %v2150 = vld [vmem:[#allocation2 + $0x160] sm:$0xff]
    %v2151 = vld [vmem:[#allocation2 + $0x168] sm:$0xff]
    %v2152 = vld [vmem:[#allocation2 + $0x170] sm:$0xff]
    %v2153 = vld [vmem:[#allocation2 + $0x178] sm:$0xff]
    %v2154 = vld [vmem:[#allocation2 + $0x180] sm:$0xff]
    %v2155 = vld [vmem:[#allocation2 + $0x188] sm:$0xff]
    %v2156 = vld [vmem:[#allocation2 + $0x190] sm:$0xff]
    %v2157 = vld [vmem:[#allocation2 + $0x198] sm:$0xff]
    %s2158 = scalar_lea.vmem [#allocation2], 1953
    %v2159 = vld [vmem:[%s2158] ss:$8 sm:$0x3]
    %v2161 = vlaneseq
    %v2162 = vshrl.u32 %v2161, 7
    %v2163 = vsub.s32 0, %v2162
    %v2164 = vrot.slane %v2159, %v2163
    %v2165 = vlaneseq
    %v2166 = vshrl.u32 %v2165, 7
    %v2167 = vsub.s32 1, %v2166
    %v2168 = vrot.slane %v2159, %v2167
    %v2172 = vsel %vm263, %v2140, 0
    %v2175 = vsel %vm263, %v2141, 0
    %2177 = vmatprep.subr.mxu0 0.0
    %2178 = vmatpush1.msra.mxu0 0.0
    %2179 = vmatprep.subr.mxu0 0.0
    %2180 = vmatpush1.msra.mxu0 0.0
    %2181 = vmatprep.subr.mxu0 0.0
    %2182 = vmatpush1.msra.mxu0 0.0
    %2183 = vmatprep.subr.mxu0 0.0
    %2184 = vmatpush1.msra.mxu0 0.0
    %2185 = vmatprep.subr.mxu0 0.0
    %2186 = vmatpush1.msra.mxu0 0.0
    %2187 = vmatprep.subr.mxu0 0.0
    %2188 = vmatpush1.msra.mxu0 0.0
    %2189 = vmatprep.subr.mxu0 0.0
    %2190 = vmatpush1.msra.mxu0 0.0
    %2191 = vmatprep.subr.mxu0 0.0
    %2192 = vmatpush1.msra.mxu0 0.0
    %2193 = vmatprep.subr.mxu0 %v2157
    %2194 = vmatpush1.msra.mxu0 %v2156
    %2195 = vmatprep.subr.mxu0 %v2155
    %2196 = vmatpush1.msra.mxu0 %v2154
    %2197 = vmatprep.subr.mxu0 %v2153
    %2198 = vmatpush1.msra.mxu0 %v2152
    %2199 = vmatprep.subr.mxu0 %v2151
    %2200 = vmatpush1.msra.mxu0 %v2150
    %2201 = vmatprep.subr.mxu0 %v2149
    %2202 = vmatpush1.msra.mxu0 %v2148
    %2203 = vmatprep.subr.mxu0 %v2147
    %2204 = vmatpush1.msra.mxu0 %v2146
    %2205 = vmatprep.subr.mxu0 %v2145
    %2206 = vmatpush1.msra.mxu0 %v2144
    %2207 = vmatprep.subr.mxu0 %v2143
    %2208 = vmatpush1.msra.mxu0 %v2142
    %2209 = vmatprep.subr.mxu0 0.0
    %2210 = vmatpush2.msra.mxu0 0.0
    %2211 = vmatprep.subr.mxu0 0.0
    %2212 = vmatpush2.msra.mxu0 0.0
    %2213 = vmatprep.subr.mxu0 0.0
    %2214 = vmatpush2.msra.mxu0 0.0
    %2215 = vmatprep.subr.mxu0 0.0
    %2216 = vmatpush2.msra.mxu0 0.0
    %2217 = vmatprep.subr.mxu0 0.0
    %2218 = vmatpush2.msra.mxu0 0.0
    %2219 = vmatprep.subr.mxu0 0.0
    %2220 = vmatpush2.msra.mxu0 0.0
    %2221 = vmatprep.subr.mxu0 0.0
    %2222 = vmatpush2.msra.mxu0 0.0
    %2223 = vmatprep.subr.mxu0 0.0
    %2224 = vmatpush2.msra.mxu0 0.0
    %2225 = vmatprep.subr.mxu0 0.0
    %2226 = vmatpush2.msra.mxu0 0.0
    %2227 = vmatprep.subr.mxu0 0.0
    %2228 = vmatpush2.msra.mxu0 0.0
    %2229 = vmatprep.subr.mxu0 0.0
    %2230 = vmatpush2.msra.mxu0 0.0
    %2231 = vmatprep.subr.mxu0 0.0
    %2232 = vmatpush2.msra.mxu0 0.0
    %2233 = vmatprep.subr.mxu0 0.0
    %2234 = vmatpush2.msra.mxu0 0.0
    %2235 = vmatprep.subr.mxu0 0.0
    %2236 = vmatpush2.msra.mxu0 0.0
    %2237 = vmatprep.subr.mxu0 0.0
    %2238 = vmatpush2.msra.mxu0 0.0
    %2239 = vmatprep.subr.mxu0 0.0
    %2240 = vmatpush2.msra.mxu0 0.0
    %2241 = vmatprep.mubr.f32.mxu0 0.0
    %2242 = vmatmul.mubr.f32.gmra.mxu0 %v2172
    %v2243 = vpop.f32.mrf.mxu0
    %v2244 = vadd.f32 %v2164, %v2243
    %v2245 = vpop.f32.mrf.mxu0
    %v2246 = vadd.f32 %v2168, %v2245
    %2247 = vmatprep.mubr.f32.mxu0 0.0
    %2248 = vmatmul.mubr.f32.gmra.mxu0 %v2175
    %v2249 = vpop.f32.mrf.mxu0
    %v2250 = vadd.f32 %v2164, %v2249
    %v2251 = vpop.f32.mrf.mxu0
    %v2252 = vadd.f32 %v2168, %v2251
    %2253 = vdwg.mxu0
    %v2254 = vmax.f32 %v2244, 0.0
    %v2255 = vmax.f32 %v2246, 0.0
    %v2256 = vmax.f32 %v2250, 0.0
    %v2257 = vmax.f32 %v2252, 0.0
    %v2258 = vld [vmem:[#allocation2 + $0x1a0] sm:$0xff]
    %v2259 = vld [vmem:[#allocation2 + $0x1b0] sm:$0xff]
    %v2260 = vld [vmem:[#allocation2 + $0x1c0] sm:$0xff]
    %v2261 = vld [vmem:[#allocation2 + $0x1d0] sm:$0xff]
    %v2262 = vld [vmem:[#allocation2 + $0x1e0] sm:$0xff]
    %v2263 = vld [vmem:[#allocation2 + $0x1f0] sm:$0xff]
    %v2264 = vld [vmem:[#allocation2 + $0x200] sm:$0xff]
    %v2265 = vld [vmem:[#allocation2 + $0x210] sm:$0xff]
    %v2266 = vld [vmem:[#allocation2 + $0x220] sm:$0xff]
    %v2267 = vld [vmem:[#allocation2 + $0x230] sm:$0xff]
    %v2268 = vld [vmem:[#allocation2 + $0x240] sm:$0xff]
    %v2269 = vld [vmem:[#allocation2 + $0x250] sm:$0xff]
    %v2270 = vld [vmem:[#allocation2 + $0x260] sm:$0xff]
    %v2271 = vld [vmem:[#allocation2 + $0x270] sm:$0xff]
    %v2272 = vld [vmem:[#allocation2 + $0x280] sm:$0xff]
    %v2273 = vld [vmem:[#allocation2 + $0x290] sm:$0xff]
    %v2274 = vld [vmem:[#allocation2 + $0x2a0] sm:$0xff]
    %v2275 = vld [vmem:[#allocation2 + $0x2b0] sm:$0xff]
    %v2276 = vld [vmem:[#allocation2 + $0x2c0] sm:$0xff]
    %v2277 = vld [vmem:[#allocation2 + $0x2d0] sm:$0xff]
    %v2278 = vld [vmem:[#allocation2 + $0x2e0] sm:$0xff]
    %v2279 = vld [vmem:[#allocation2 + $0x2f0] sm:$0xff]
    %v2280 = vld [vmem:[#allocation2 + $0x300] sm:$0xff]
    %v2281 = vld [vmem:[#allocation2 + $0x310] sm:$0xff]
    %v2282 = vld [vmem:[#allocation2 + $0x320] sm:$0xff]
    %v2283 = vld [vmem:[#allocation2 + $0x330] sm:$0xff]
    %v2284 = vld [vmem:[#allocation2 + $0x340] sm:$0xff]
    %v2285 = vld [vmem:[#allocation2 + $0x350] sm:$0xff]
    %v2286 = vld [vmem:[#allocation2 + $0x360] sm:$0xff]
    %v2287 = vld [vmem:[#allocation2 + $0x370] sm:$0xff]
    %v2288 = vld [vmem:[#allocation2 + $0x380] sm:$0xff]
    %v2289 = vld [vmem:[#allocation2 + $0x390] sm:$0xff]
    %v2290 = vld [vmem:[#allocation2 + $0x7a5] ss:$0 sm:$0xff]
    %2291 = vmatprep.subr.mxu0 0.0
    %2292 = vmatpush1.msra.mxu0 %v2273
    %2293 = vmatprep.subr.mxu0 0.0
    %2294 = vmatpush1.msra.mxu0 %v2272
    %2295 = vmatprep.subr.mxu0 0.0
    %2296 = vmatpush1.msra.mxu0 %v2271
    %2297 = vmatprep.subr.mxu0 0.0
    %2298 = vmatpush1.msra.mxu0 %v2270
    %2299 = vmatprep.subr.mxu0 0.0
    %2300 = vmatpush1.msra.mxu0 %v2269
    %2301 = vmatprep.subr.mxu0 0.0
    %2302 = vmatpush1.msra.mxu0 %v2268
    %2303 = vmatprep.subr.mxu0 0.0
    %2304 = vmatpush1.msra.mxu0 %v2267
    %2305 = vmatprep.subr.mxu0 0.0
    %2306 = vmatpush1.msra.mxu0 %v2266
    %2307 = vmatprep.subr.mxu0 0.0
    %2308 = vmatpush1.msra.mxu0 %v2265
    %2309 = vmatprep.subr.mxu0 0.0
    %2310 = vmatpush1.msra.mxu0 %v2264
    %2311 = vmatprep.subr.mxu0 0.0
    %2312 = vmatpush1.msra.mxu0 %v2263
    %2313 = vmatprep.subr.mxu0 0.0
    %2314 = vmatpush1.msra.mxu0 %v2262
    %2315 = vmatprep.subr.mxu0 0.0
    %2316 = vmatpush1.msra.mxu0 %v2261
    %2317 = vmatprep.subr.mxu0 0.0
    %2318 = vmatpush1.msra.mxu0 %v2260
    %2319 = vmatprep.subr.mxu0 0.0
    %2320 = vmatpush1.msra.mxu0 %v2259
    %2321 = vmatprep.subr.mxu0 0.0
    %2322 = vmatpush1.msra.mxu0 %v2258
    %2323 = vmatprep.subr.mxu0 0.0
    %2324 = vmatpush2.msra.mxu0 %v2289
    %2325 = vmatprep.subr.mxu0 0.0
    %2326 = vmatpush2.msra.mxu0 %v2288
    %2327 = vmatprep.subr.mxu0 0.0
    %2328 = vmatpush2.msra.mxu0 %v2287
    %2329 = vmatprep.subr.mxu0 0.0
    %2330 = vmatpush2.msra.mxu0 %v2286
    %2331 = vmatprep.subr.mxu0 0.0
    %2332 = vmatpush2.msra.mxu0 %v2285
    %2333 = vmatprep.subr.mxu0 0.0
    %2334 = vmatpush2.msra.mxu0 %v2284
    %2335 = vmatprep.subr.mxu0 0.0
    %2336 = vmatpush2.msra.mxu0 %v2283
    %2337 = vmatprep.subr.mxu0 0.0
    %2338 = vmatpush2.msra.mxu0 %v2282
    %2339 = vmatprep.subr.mxu0 0.0
    %2340 = vmatpush2.msra.mxu0 %v2281
    %2341 = vmatprep.subr.mxu0 0.0
    %2342 = vmatpush2.msra.mxu0 %v2280
    %2343 = vmatprep.subr.mxu0 0.0
    %2344 = vmatpush2.msra.mxu0 %v2279
    %2345 = vmatprep.subr.mxu0 0.0
    %2346 = vmatpush2.msra.mxu0 %v2278
    %2347 = vmatprep.subr.mxu0 0.0
    %2348 = vmatpush2.msra.mxu0 %v2277
    %2349 = vmatprep.subr.mxu0 0.0
    %2350 = vmatpush2.msra.mxu0 %v2276
    %2351 = vmatprep.subr.mxu0 0.0
    %2352 = vmatpush2.msra.mxu0 %v2275
    %2353 = vmatprep.subr.mxu0 0.0
    %2354 = vmatpush2.msra.mxu0 %v2274
    %2355 = vmatprep.mubr.f32.mxu0 %v2255
    %2356 = vmatmul.mubr.f32.gmra.mxu0 %v2254
    %v2357 = vpop.f32.mrf.mxu0
    %v2358 = vadd.f32 %v2290, %v2357
    %v2359 = vpop.f32.mrf.mxu0
    %2360 = vmatprep.mubr.f32.mxu0 %v2257
    %2361 = vmatmul.mubr.f32.gmra.mxu0 %v2256
    %v2362 = vpop.f32.mrf.mxu0
    %v2363 = vadd.f32 %v2290, %v2362
    %v2364 = vpop.f32.mrf.mxu0
    %2365 = vdwg.mxu0
    %v2366 = vadd.f32 %v2140, %v2358
    %v2367 = vadd.f32 %v2141, %v2363
    %v2368 = vld [vmem:[#allocation2 + $0x7a6] ss:$0 sm:$0xff]
    %v2369 = vld [vmem:[#allocation2 + $0x7a7] ss:$0 sm:$0xff]
    %v2370 = vsel %vm263, %v2366, 0.0
    %2371 = vadd.xlane.f32.xlu0 %v2370
    %v2372 = vpop.xlane.xlu0 %2371
    %v2373 = vsel %vm263, %v2367, 0.0
    %2374 = vadd.xlane.f32.xlu0 %v2373
    %v2375 = vpop.xlane.xlu0 %2374
    %v2376 = vmul.f32 %v2372, %v2117
    %v2377 = vmul.f32 %v2375, %v2117
    %v2378 = vsub.f32 %v2366, %v2376
    %v2379 = vsub.f32 %v2367, %v2377
    %v2380 = vmul.f32 %v2378, %v2378
    %v2381 = vmul.f32 %v2379, %v2379
    %v2382 = vsel %vm263, %v2380, 0.0
    %2383 = vadd.xlane.f32.xlu0 %v2382
    %v2384 = vpop.xlane.xlu0 %2383
    %v2385 = vsel %vm263, %v2381, 0.0
    %2386 = vadd.xlane.f32.xlu0 %v2385
    %v2387 = vpop.xlane.xlu0 %2386
    %v2388 = vmul.f32 %v2384, %v2117
    %v2389 = vmul.f32 %v2387, %v2117
    %v2390 = vadd.f32 %v2388, 1e-05
    %v2391 = vadd.f32 %v2389, 1e-05
    %v2392 = vrsqrt.pop %v2390
    %v2393 = vrsqrt.pop %v2391
    %v2394 = vmul.f32 %v2378, %v2392
    %v2395 = vmul.f32 %v2379, %v2393
    %v2396 = vmul.f32 %v2394, %v2368
    %v2397 = vmul.f32 %v2395, %v2368
    %v2398 = vadd.f32 %v2396, %v2369
    %v2399 = vadd.f32 %v2397, %v2369
    %v2400 = vld [vmem:[#allocation2 + $0x3a0] sm:$0xff]
    %v2401 = vld [vmem:[#allocation2 + $0x3a8] sm:$0xff]
    %v2402 = vld [vmem:[#allocation2 + $0x3b0] sm:$0xff]
    %v2403 = vld [vmem:[#allocation2 + $0x3b8] sm:$0xff]
    %v2404 = vld [vmem:[#allocation2 + $0x3c0] sm:$0xff]
    %v2405 = vld [vmem:[#allocation2 + $0x3c8] sm:$0xff]
    %v2406 = vld [vmem:[#allocation2 + $0x3d0] sm:$0xff]
    %v2407 = vld [vmem:[#allocation2 + $0x3d8] sm:$0xff]
    %v2408 = vld [vmem:[#allocation2 + $0x3e0] sm:$0xff]
    %v2409 = vld [vmem:[#allocation2 + $0x3e8] sm:$0xff]
    %v2410 = vld [vmem:[#allocation2 + $0x3f0] sm:$0xff]
    %v2411 = vld [vmem:[#allocation2 + $0x3f8] sm:$0xff]
    %v2412 = vld [vmem:[#allocation2 + $0x400] sm:$0xff]
    %v2413 = vld [vmem:[#allocation2 + $0x408] sm:$0xff]
    %v2414 = vld [vmem:[#allocation2 + $0x410] sm:$0xff]
    %v2415 = vld [vmem:[#allocation2 + $0x418] sm:$0xff]
    %s2416 = scalar_lea.vmem [#allocation2], 1968
    %v2417 = vld [vmem:[%s2416] ss:$8 sm:$0x3]
    %v2419 = vlaneseq
    %v2420 = vshrl.u32 %v2419, 7
    %v2421 = vsub.s32 0, %v2420
    %v2422 = vrot.slane %v2417, %v2421
    %v2423 = vlaneseq
    %v2424 = vshrl.u32 %v2423, 7
    %v2425 = vsub.s32 1, %v2424
    %v2426 = vrot.slane %v2417, %v2425
    %v2430 = vsel %vm263, %v2398, 0
    %v2433 = vsel %vm263, %v2399, 0
    %2435 = vmatprep.subr.mxu0 0.0
    %2436 = vmatpush1.msra.mxu0 0.0
    %2437 = vmatprep.subr.mxu0 0.0
    %2438 = vmatpush1.msra.mxu0 0.0
    %2439 = vmatprep.subr.mxu0 0.0
    %2440 = vmatpush1.msra.mxu0 0.0
    %2441 = vmatprep.subr.mxu0 0.0
    %2442 = vmatpush1.msra.mxu0 0.0
    %2443 = vmatprep.subr.mxu0 0.0
    %2444 = vmatpush1.msra.mxu0 0.0
    %2445 = vmatprep.subr.mxu0 0.0
    %2446 = vmatpush1.msra.mxu0 0.0
    %2447 = vmatprep.subr.mxu0 0.0
    %2448 = vmatpush1.msra.mxu0 0.0
    %2449 = vmatprep.subr.mxu0 0.0
    %2450 = vmatpush1.msra.mxu0 0.0
    %2451 = vmatprep.subr.mxu0 %v2415
    %2452 = vmatpush1.msra.mxu0 %v2414
    %2453 = vmatprep.subr.mxu0 %v2413
    %2454 = vmatpush1.msra.mxu0 %v2412
    %2455 = vmatprep.subr.mxu0 %v2411
    %2456 = vmatpush1.msra.mxu0 %v2410
    %2457 = vmatprep.subr.mxu0 %v2409
    %2458 = vmatpush1.msra.mxu0 %v2408
    %2459 = vmatprep.subr.mxu0 %v2407
    %2460 = vmatpush1.msra.mxu0 %v2406
    %2461 = vmatprep.subr.mxu0 %v2405
    %2462 = vmatpush1.msra.mxu0 %v2404
    %2463 = vmatprep.subr.mxu0 %v2403
    %2464 = vmatpush1.msra.mxu0 %v2402
    %2465 = vmatprep.subr.mxu0 %v2401
    %2466 = vmatpush1.msra.mxu0 %v2400
    %2467 = vmatprep.subr.mxu0 0.0
    %2468 = vmatpush2.msra.mxu0 0.0
    %2469 = vmatprep.subr.mxu0 0.0
    %2470 = vmatpush2.msra.mxu0 0.0
    %2471 = vmatprep.subr.mxu0 0.0
    %2472 = vmatpush2.msra.mxu0 0.0
    %2473 = vmatprep.subr.mxu0 0.0
    %2474 = vmatpush2.msra.mxu0 0.0
    %2475 = vmatprep.subr.mxu0 0.0
    %2476 = vmatpush2.msra.mxu0 0.0
    %2477 = vmatprep.subr.mxu0 0.0
    %2478 = vmatpush2.msra.mxu0 0.0
    %2479 = vmatprep.subr.mxu0 0.0
    %2480 = vmatpush2.msra.mxu0 0.0
    %2481 = vmatprep.subr.mxu0 0.0
    %2482 = vmatpush2.msra.mxu0 0.0
    %2483 = vmatprep.subr.mxu0 0.0
    %2484 = vmatpush2.msra.mxu0 0.0
    %2485 = vmatprep.subr.mxu0 0.0
    %2486 = vmatpush2.msra.mxu0 0.0
    %2487 = vmatprep.subr.mxu0 0.0
    %2488 = vmatpush2.msra.mxu0 0.0
    %2489 = vmatprep.subr.mxu0 0.0
    %2490 = vmatpush2.msra.mxu0 0.0
    %2491 = vmatprep.subr.mxu0 0.0
    %2492 = vmatpush2.msra.mxu0 0.0
    %2493 = vmatprep.subr.mxu0 0.0
    %2494 = vmatpush2.msra.mxu0 0.0
    %2495 = vmatprep.subr.mxu0 0.0
    %2496 = vmatpush2.msra.mxu0 0.0
    %2497 = vmatprep.subr.mxu0 0.0
    %2498 = vmatpush2.msra.mxu0 0.0
    %2499 = vmatprep.mubr.f32.mxu0 0.0
    %2500 = vmatmul.mubr.f32.gmra.mxu0 %v2430
    %v2501 = vpop.f32.mrf.mxu0
    %v2502 = vadd.f32 %v2422, %v2501
    %v2503 = vpop.f32.mrf.mxu0
    %v2504 = vadd.f32 %v2426, %v2503
    %2505 = vmatprep.mubr.f32.mxu0 0.0
    %2506 = vmatmul.mubr.f32.gmra.mxu0 %v2433
    %v2507 = vpop.f32.mrf.mxu0
    %v2508 = vadd.f32 %v2422, %v2507
    %v2509 = vpop.f32.mrf.mxu0
    %v2510 = vadd.f32 %v2426, %v2509
    %2511 = vdwg.mxu0
    %2514 = vrot.lane.b32.xlu0 %v2502, 120
    %v2515 = vpop.permute.xlu0 %2514
    %2516 = vrot.lane.b32.xlu0 %v2508, 120
    %v2517 = vpop.permute.xlu0 %2516
    %2518 = vrot.lane.b32.xlu0 %v2502, 112
    %v2519 = vpop.permute.xlu0 %2518
    %2520 = vrot.lane.b32.xlu0 %v2508, 112
    %v2521 = vpop.permute.xlu0 %2520
    %2522 = vrot.lane.b32.xlu0 %v2502, 104
    %v2523 = vpop.permute.xlu0 %2522
    %2524 = vrot.lane.b32.xlu0 %v2508, 104
    %v2525 = vpop.permute.xlu0 %2524
    %2526 = vrot.lane.b32.xlu0 %v2502, 96
    %v2527 = vpop.permute.xlu0 %2526
    %2528 = vrot.lane.b32.xlu0 %v2508, 96
    %v2529 = vpop.permute.xlu0 %2528
    %2530 = vrot.lane.b32.xlu0 %v2502, 88
    %v2531 = vpop.permute.xlu0 %2530
    %2532 = vrot.lane.b32.xlu0 %v2508, 88
    %v2533 = vpop.permute.xlu0 %2532
    %2534 = vrot.lane.b32.xlu0 %v2502, 80
    %v2535 = vpop.permute.xlu0 %2534
    %2536 = vrot.lane.b32.xlu0 %v2508, 80
    %v2537 = vpop.permute.xlu0 %2536
    %2538 = vrot.lane.b32.xlu0 %v2502, 72
    %v2539 = vpop.permute.xlu0 %2538
    %2540 = vrot.lane.b32.xlu0 %v2508, 72
    %v2541 = vpop.permute.xlu0 %2540
    %2542 = vrot.lane.b32.xlu0 %v2502, 64
    %v2543 = vpop.permute.xlu0 %2542
    %2544 = vrot.lane.b32.xlu0 %v2508, 64
    %v2545 = vpop.permute.xlu0 %2544
    %2546 = vrot.lane.b32.xlu0 %v2502, 56
    %v2547 = vpop.permute.xlu0 %2546
    %2548 = vrot.lane.b32.xlu0 %v2508, 56
    %v2549 = vpop.permute.xlu0 %2548
    %2550 = vrot.lane.b32.xlu0 %v2502, 48
    %v2551 = vpop.permute.xlu0 %2550
    %2552 = vrot.lane.b32.xlu0 %v2508, 48
    %v2553 = vpop.permute.xlu0 %2552
    %2554 = vrot.lane.b32.xlu0 %v2502, 40
    %v2555 = vpop.permute.xlu0 %2554
    %2556 = vrot.lane.b32.xlu0 %v2508, 40
    %v2557 = vpop.permute.xlu0 %2556
    %2558 = vrot.lane.b32.xlu0 %v2502, 32
    %v2559 = vpop.permute.xlu0 %2558
    %2560 = vrot.lane.b32.xlu0 %v2508, 32
    %v2561 = vpop.permute.xlu0 %2560
    %2562 = vrot.lane.b32.xlu0 %v2502, 24
    %v2563 = vpop.permute.xlu0 %2562
    %2564 = vrot.lane.b32.xlu0 %v2508, 24
    %v2565 = vpop.permute.xlu0 %2564
    %2566 = vrot.lane.b32.xlu0 %v2502, 16
    %v2567 = vpop.permute.xlu0 %2566
    %2568 = vrot.lane.b32.xlu0 %v2508, 16
    %v2569 = vpop.permute.xlu0 %2568
    %2570 = vrot.lane.b32.xlu0 %v2502, 8
    %v2571 = vpop.permute.xlu0 %2570
    %2572 = vrot.lane.b32.xlu0 %v2508, 8
    %v2573 = vpop.permute.xlu0 %2572
    %2576 = vrot.lane.b32.xlu0 %v2504, 120
    %v2577 = vpop.permute.xlu0 %2576
    %2578 = vrot.lane.b32.xlu0 %v2510, 120
    %v2579 = vpop.permute.xlu0 %2578
    %2582 = vrot.lane.b32.xlu0 %v2504, 112
    %v2583 = vpop.permute.xlu0 %2582
    %2584 = vrot.lane.b32.xlu0 %v2510, 112
    %v2585 = vpop.permute.xlu0 %2584
    %2588 = vrot.lane.b32.xlu0 %v2504, 104
    %v2589 = vpop.permute.xlu0 %2588
    %2590 = vrot.lane.b32.xlu0 %v2510, 104
    %v2591 = vpop.permute.xlu0 %2590
    %2594 = vrot.lane.b32.xlu0 %v2504, 96
    %v2595 = vpop.permute.xlu0 %2594
    %2596 = vrot.lane.b32.xlu0 %v2510, 96
    %v2597 = vpop.permute.xlu0 %2596
    %2600 = vrot.lane.b32.xlu0 %v2504, 88
    %v2601 = vpop.permute.xlu0 %2600
    %2602 = vrot.lane.b32.xlu0 %v2510, 88
    %v2603 = vpop.permute.xlu0 %2602
    %2606 = vrot.lane.b32.xlu0 %v2504, 80
    %v2607 = vpop.permute.xlu0 %2606
    %2608 = vrot.lane.b32.xlu0 %v2510, 80
    %v2609 = vpop.permute.xlu0 %2608
    %2612 = vrot.lane.b32.xlu0 %v2504, 72
    %v2613 = vpop.permute.xlu0 %2612
    %2614 = vrot.lane.b32.xlu0 %v2510, 72
    %v2615 = vpop.permute.xlu0 %2614
    %v2618 = vsel %vm453, %v2502, 0
    %v2620 = vsel %vm453, %v2508, 0
    %v2622 = vsel %vm453, %v2543, 0
    %v2624 = vsel %vm453, %v2545, 0
    %2626 = vmatprep.subr.mxu0 0.0
    %2627 = vmatpush1.xpose.msra.mxu0 0.0
    %2628 = vmatprep.subr.mxu0 0.0
    %2629 = vmatpush1.xpose.msra.mxu0 0.0
    %2630 = vmatprep.subr.mxu0 0.0
    %2631 = vmatpush1.xpose.msra.mxu0 0.0
    %2632 = vmatprep.subr.mxu0 0.0
    %2633 = vmatpush1.xpose.msra.mxu0 0.0
    %2634 = vmatprep.subr.mxu0 0.0
    %2635 = vmatpush1.xpose.msra.mxu0 0.0
    %2636 = vmatprep.subr.mxu0 0.0
    %2637 = vmatpush1.xpose.msra.mxu0 0.0
    %2638 = vmatprep.subr.mxu0 0.0
    %2639 = vmatpush1.xpose.msra.mxu0 0.0
    %2640 = vmatprep.subr.mxu0 0.0
    %2641 = vmatpush1.xpose.msra.mxu0 0.0
    %2642 = vmatprep.subr.mxu0 0.0
    %2643 = vmatpush1.xpose.msra.mxu0 0.0
    %2644 = vmatprep.subr.mxu0 0.0
    %2645 = vmatpush1.xpose.msra.mxu0 0.0
    %2646 = vmatprep.subr.mxu0 0.0
    %2647 = vmatpush1.xpose.msra.mxu0 0.0
    %2648 = vmatprep.subr.mxu0 0.0
    %2649 = vmatpush1.xpose.msra.mxu0 0.0
    %2650 = vmatprep.subr.mxu0 0.0
    %2651 = vmatpush1.xpose.msra.mxu0 0.0
    %2652 = vmatprep.subr.mxu0 0.0
    %2653 = vmatpush1.xpose.msra.mxu0 0.0
    %2654 = vmatprep.subr.mxu0 0.0
    %2655 = vmatpush1.xpose.msra.mxu0 %v2624
    %2656 = vmatprep.subr.mxu0 0.0
    %2657 = vmatpush1.xpose.msra.mxu0 %v2622
    %2658 = vmatprep.subr.mxu0 0.0
    %2659 = vmatpush2.xpose.msra.mxu0 0.0
    %2660 = vmatprep.subr.mxu0 0.0
    %2661 = vmatpush2.xpose.msra.mxu0 0.0
    %2662 = vmatprep.subr.mxu0 0.0
    %2663 = vmatpush2.xpose.msra.mxu0 0.0
    %2664 = vmatprep.subr.mxu0 0.0
    %2665 = vmatpush2.xpose.msra.mxu0 0.0
    %2666 = vmatprep.subr.mxu0 0.0
    %2667 = vmatpush2.xpose.msra.mxu0 0.0
    %2668 = vmatprep.subr.mxu0 0.0
    %2669 = vmatpush2.xpose.msra.mxu0 0.0
    %2670 = vmatprep.subr.mxu0 0.0
    %2671 = vmatpush2.xpose.msra.mxu0 0.0
    %2672 = vmatprep.subr.mxu0 0.0
    %2673 = vmatpush2.xpose.msra.mxu0 0.0
    %2674 = vmatprep.subr.mxu0 0.0
    %2675 = vmatpush2.xpose.msra.mxu0 0.0
    %2676 = vmatprep.subr.mxu0 0.0
    %2677 = vmatpush2.xpose.msra.mxu0 0.0
    %2678 = vmatprep.subr.mxu0 0.0
    %2679 = vmatpush2.xpose.msra.mxu0 0.0
    %2680 = vmatprep.subr.mxu0 0.0
    %2681 = vmatpush2.xpose.msra.mxu0 0.0
    %2682 = vmatprep.subr.mxu0 0.0
    %2683 = vmatpush2.xpose.msra.mxu0 0.0
    %2684 = vmatprep.subr.mxu0 0.0
    %2685 = vmatpush2.xpose.msra.mxu0 0.0
    %2686 = vmatprep.subr.mxu0 0.0
    %2687 = vmatpush2.xpose.msra.mxu0 0.0
    %2688 = vmatprep.subr.mxu0 0.0
    %2689 = vmatpush2.xpose.msra.mxu0 0.0
    %2690 = vmatprep.mubr.f32.mxu0 0.0
    %2691 = vmatmul.mubr.f32.gmra.mxu0 %v2618
    %v2692 = vpop.f32.mrf.mxu0
    %v2693 = vadd.f32 %v232, %v2692
    %v2694 = vpop.f32.mrf.mxu0
    %2695 = vmatprep.mubr.f32.mxu0 0.0
    %2696 = vmatmul.mubr.f32.gmra.mxu0 %v2620
    %v2697 = vpop.f32.mrf.mxu0
    %v2698 = vadd.f32 %v233, %v2697
    %v2699 = vpop.f32.mrf.mxu0
    %2700 = vdwg.mxu0
    %v2701 = vsel %vm453, %v2515, 0
    %v2703 = vsel %vm453, %v2517, 0
    %v2705 = vsel %vm453, %v2547, 0
    %v2707 = vsel %vm453, %v2549, 0
    %2709 = vmatprep.subr.mxu0 0.0
    %2710 = vmatpush1.xpose.msra.mxu0 0.0
    %2711 = vmatprep.subr.mxu0 0.0
    %2712 = vmatpush1.xpose.msra.mxu0 0.0
    %2713 = vmatprep.subr.mxu0 0.0
    %2714 = vmatpush1.xpose.msra.mxu0 0.0
    %2715 = vmatprep.subr.mxu0 0.0
    %2716 = vmatpush1.xpose.msra.mxu0 0.0
    %2717 = vmatprep.subr.mxu0 0.0
    %2718 = vmatpush1.xpose.msra.mxu0 0.0
    %2719 = vmatprep.subr.mxu0 0.0
    %2720 = vmatpush1.xpose.msra.mxu0 0.0
    %2721 = vmatprep.subr.mxu0 0.0
    %2722 = vmatpush1.xpose.msra.mxu0 0.0
    %2723 = vmatprep.subr.mxu0 0.0
    %2724 = vmatpush1.xpose.msra.mxu0 0.0
    %2725 = vmatprep.subr.mxu0 0.0
    %2726 = vmatpush1.xpose.msra.mxu0 0.0
    %2727 = vmatprep.subr.mxu0 0.0
    %2728 = vmatpush1.xpose.msra.mxu0 0.0
    %2729 = vmatprep.subr.mxu0 0.0
    %2730 = vmatpush1.xpose.msra.mxu0 0.0
    %2731 = vmatprep.subr.mxu0 0.0
    %2732 = vmatpush1.xpose.msra.mxu0 0.0
    %2733 = vmatprep.subr.mxu0 0.0
    %2734 = vmatpush1.xpose.msra.mxu0 0.0
    %2735 = vmatprep.subr.mxu0 0.0
    %2736 = vmatpush1.xpose.msra.mxu0 0.0
    %2737 = vmatprep.subr.mxu0 0.0
    %2738 = vmatpush1.xpose.msra.mxu0 %v2707
    %2739 = vmatprep.subr.mxu0 0.0
    %2740 = vmatpush1.xpose.msra.mxu0 %v2705
    %2741 = vmatprep.subr.mxu0 0.0
    %2742 = vmatpush2.xpose.msra.mxu0 0.0
    %2743 = vmatprep.subr.mxu0 0.0
    %2744 = vmatpush2.xpose.msra.mxu0 0.0
    %2745 = vmatprep.subr.mxu0 0.0
    %2746 = vmatpush2.xpose.msra.mxu0 0.0
    %2747 = vmatprep.subr.mxu0 0.0
    %2748 = vmatpush2.xpose.msra.mxu0 0.0
    %2749 = vmatprep.subr.mxu0 0.0
    %2750 = vmatpush2.xpose.msra.mxu0 0.0
    %2751 = vmatprep.subr.mxu0 0.0
    %2752 = vmatpush2.xpose.msra.mxu0 0.0
    %2753 = vmatprep.subr.mxu0 0.0
    %2754 = vmatpush2.xpose.msra.mxu0 0.0
    %2755 = vmatprep.subr.mxu0 0.0
    %2756 = vmatpush2.xpose.msra.mxu0 0.0
    %2757 = vmatprep.subr.mxu0 0.0
    %2758 = vmatpush2.xpose.msra.mxu0 0.0
    %2759 = vmatprep.subr.mxu0 0.0
    %2760 = vmatpush2.xpose.msra.mxu0 0.0
    %2761 = vmatprep.subr.mxu0 0.0
    %2762 = vmatpush2.xpose.msra.mxu0 0.0
    %2763 = vmatprep.subr.mxu0 0.0
    %2764 = vmatpush2.xpose.msra.mxu0 0.0
    %2765 = vmatprep.subr.mxu0 0.0
    %2766 = vmatpush2.xpose.msra.mxu0 0.0
    %2767 = vmatprep.subr.mxu0 0.0
    %2768 = vmatpush2.xpose.msra.mxu0 0.0
    %2769 = vmatprep.subr.mxu0 0.0
    %2770 = vmatpush2.xpose.msra.mxu0 0.0
    %2771 = vmatprep.subr.mxu0 0.0
    %2772 = vmatpush2.xpose.msra.mxu0 0.0
    %2773 = vmatprep.mubr.f32.mxu0 0.0
    %2774 = vmatmul.mubr.f32.gmra.mxu0 %v2701
    %v2775 = vpop.f32.mrf.mxu0
    %v2776 = vadd.f32 %v232, %v2775
    %v2777 = vpop.f32.mrf.mxu0
    %2778 = vmatprep.mubr.f32.mxu0 0.0
    %2779 = vmatmul.mubr.f32.gmra.mxu0 %v2703
    %v2780 = vpop.f32.mrf.mxu0
    %v2781 = vadd.f32 %v233, %v2780
    %v2782 = vpop.f32.mrf.mxu0
    %2783 = vdwg.mxu0
    %v2784 = vsel %vm453, %v2519, 0
    %v2786 = vsel %vm453, %v2521, 0
    %v2788 = vsel %vm453, %v2551, 0
    %v2790 = vsel %vm453, %v2553, 0
    %2792 = vmatprep.subr.mxu0 0.0
    %2793 = vmatpush1.xpose.msra.mxu0 0.0
    %2794 = vmatprep.subr.mxu0 0.0
    %2795 = vmatpush1.xpose.msra.mxu0 0.0
    %2796 = vmatprep.subr.mxu0 0.0
    %2797 = vmatpush1.xpose.msra.mxu0 0.0
    %2798 = vmatprep.subr.mxu0 0.0
    %2799 = vmatpush1.xpose.msra.mxu0 0.0
    %2800 = vmatprep.subr.mxu0 0.0
    %2801 = vmatpush1.xpose.msra.mxu0 0.0
    %2802 = vmatprep.subr.mxu0 0.0
    %2803 = vmatpush1.xpose.msra.mxu0 0.0
    %2804 = vmatprep.subr.mxu0 0.0
    %2805 = vmatpush1.xpose.msra.mxu0 0.0
    %2806 = vmatprep.subr.mxu0 0.0
    %2807 = vmatpush1.xpose.msra.mxu0 0.0
    %2808 = vmatprep.subr.mxu0 0.0
    %2809 = vmatpush1.xpose.msra.mxu0 0.0
    %2810 = vmatprep.subr.mxu0 0.0
    %2811 = vmatpush1.xpose.msra.mxu0 0.0
    %2812 = vmatprep.subr.mxu0 0.0
    %2813 = vmatpush1.xpose.msra.mxu0 0.0
    %2814 = vmatprep.subr.mxu0 0.0
    %2815 = vmatpush1.xpose.msra.mxu0 0.0
    %2816 = vmatprep.subr.mxu0 0.0
    %2817 = vmatpush1.xpose.msra.mxu0 0.0
    %2818 = vmatprep.subr.mxu0 0.0
    %2819 = vmatpush1.xpose.msra.mxu0 0.0
    %2820 = vmatprep.subr.mxu0 0.0
    %2821 = vmatpush1.xpose.msra.mxu0 %v2790
    %2822 = vmatprep.subr.mxu0 0.0
    %2823 = vmatpush1.xpose.msra.mxu0 %v2788
    %2824 = vmatprep.subr.mxu0 0.0
    %2825 = vmatpush2.xpose.msra.mxu0 0.0
    %2826 = vmatprep.subr.mxu0 0.0
    %2827 = vmatpush2.xpose.msra.mxu0 0.0
    %2828 = vmatprep.subr.mxu0 0.0
    %2829 = vmatpush2.xpose.msra.mxu0 0.0
    %2830 = vmatprep.subr.mxu0 0.0
    %2831 = vmatpush2.xpose.msra.mxu0 0.0
    %2832 = vmatprep.subr.mxu0 0.0
    %2833 = vmatpush2.xpose.msra.mxu0 0.0
    %2834 = vmatprep.subr.mxu0 0.0
    %2835 = vmatpush2.xpose.msra.mxu0 0.0
    %2836 = vmatprep.subr.mxu0 0.0
    %2837 = vmatpush2.xpose.msra.mxu0 0.0
    %2838 = vmatprep.subr.mxu0 0.0
    %2839 = vmatpush2.xpose.msra.mxu0 0.0
    %2840 = vmatprep.subr.mxu0 0.0
    %2841 = vmatpush2.xpose.msra.mxu0 0.0
    %2842 = vmatprep.subr.mxu0 0.0
    %2843 = vmatpush2.xpose.msra.mxu0 0.0
    %2844 = vmatprep.subr.mxu0 0.0
    %2845 = vmatpush2.xpose.msra.mxu0 0.0
    %2846 = vmatprep.subr.mxu0 0.0
    %2847 = vmatpush2.xpose.msra.mxu0 0.0
    %2848 = vmatprep.subr.mxu0 0.0
    %2849 = vmatpush2.xpose.msra.mxu0 0.0
    %2850 = vmatprep.subr.mxu0 0.0
    %2851 = vmatpush2.xpose.msra.mxu0 0.0
    %2852 = vmatprep.subr.mxu0 0.0
    %2853 = vmatpush2.xpose.msra.mxu0 0.0
    %2854 = vmatprep.subr.mxu0 0.0
    %2855 = vmatpush2.xpose.msra.mxu0 0.0
    %2856 = vmatprep.mubr.f32.mxu0 0.0
    %2857 = vmatmul.mubr.f32.gmra.mxu0 %v2784
    %v2858 = vpop.f32.mrf.mxu0
    %v2859 = vadd.f32 %v232, %v2858
    %v2860 = vpop.f32.mrf.mxu0
    %2861 = vmatprep.mubr.f32.mxu0 0.0
    %2862 = vmatmul.mubr.f32.gmra.mxu0 %v2786
    %v2863 = vpop.f32.mrf.mxu0
    %v2864 = vadd.f32 %v233, %v2863
    %v2865 = vpop.f32.mrf.mxu0
    %2866 = vdwg.mxu0
    %v2867 = vsel %vm453, %v2523, 0
    %v2869 = vsel %vm453, %v2525, 0
    %v2871 = vsel %vm453, %v2555, 0
    %v2873 = vsel %vm453, %v2557, 0
    %2875 = vmatprep.subr.mxu0 0.0
    %2876 = vmatpush1.xpose.msra.mxu0 0.0
    %2877 = vmatprep.subr.mxu0 0.0
    %2878 = vmatpush1.xpose.msra.mxu0 0.0
    %2879 = vmatprep.subr.mxu0 0.0
    %2880 = vmatpush1.xpose.msra.mxu0 0.0
    %2881 = vmatprep.subr.mxu0 0.0
    %2882 = vmatpush1.xpose.msra.mxu0 0.0
    %2883 = vmatprep.subr.mxu0 0.0
    %2884 = vmatpush1.xpose.msra.mxu0 0.0
    %2885 = vmatprep.subr.mxu0 0.0
    %2886 = vmatpush1.xpose.msra.mxu0 0.0
    %2887 = vmatprep.subr.mxu0 0.0
    %2888 = vmatpush1.xpose.msra.mxu0 0.0
    %2889 = vmatprep.subr.mxu0 0.0
    %2890 = vmatpush1.xpose.msra.mxu0 0.0
    %2891 = vmatprep.subr.mxu0 0.0
    %2892 = vmatpush1.xpose.msra.mxu0 0.0
    %2893 = vmatprep.subr.mxu0 0.0
    %2894 = vmatpush1.xpose.msra.mxu0 0.0
    %2895 = vmatprep.subr.mxu0 0.0
    %2896 = vmatpush1.xpose.msra.mxu0 0.0
    %2897 = vmatprep.subr.mxu0 0.0
    %2898 = vmatpush1.xpose.msra.mxu0 0.0
    %2899 = vmatprep.subr.mxu0 0.0
    %2900 = vmatpush1.xpose.msra.mxu0 0.0
    %2901 = vmatprep.subr.mxu0 0.0
    %2902 = vmatpush1.xpose.msra.mxu0 0.0
    %2903 = vmatprep.subr.mxu0 0.0
    %2904 = vmatpush1.xpose.msra.mxu0 %v2873
    %2905 = vmatprep.subr.mxu0 0.0
    %2906 = vmatpush1.xpose.msra.mxu0 %v2871
    %2907 = vmatprep.subr.mxu0 0.0
    %2908 = vmatpush2.xpose.msra.mxu0 0.0
    %2909 = vmatprep.subr.mxu0 0.0
    %2910 = vmatpush2.xpose.msra.mxu0 0.0
    %2911 = vmatprep.subr.mxu0 0.0
    %2912 = vmatpush2.xpose.msra.mxu0 0.0
    %2913 = vmatprep.subr.mxu0 0.0
    %2914 = vmatpush2.xpose.msra.mxu0 0.0
    %2915 = vmatprep.subr.mxu0 0.0
    %2916 = vmatpush2.xpose.msra.mxu0 0.0
    %2917 = vmatprep.subr.mxu0 0.0
    %2918 = vmatpush2.xpose.msra.mxu0 0.0
    %2919 = vmatprep.subr.mxu0 0.0
    %2920 = vmatpush2.xpose.msra.mxu0 0.0
    %2921 = vmatprep.subr.mxu0 0.0
    %2922 = vmatpush2.xpose.msra.mxu0 0.0
    %2923 = vmatprep.subr.mxu0 0.0
    %2924 = vmatpush2.xpose.msra.mxu0 0.0
    %2925 = vmatprep.subr.mxu0 0.0
    %2926 = vmatpush2.xpose.msra.mxu0 0.0
    %2927 = vmatprep.subr.mxu0 0.0
    %2928 = vmatpush2.xpose.msra.mxu0 0.0
    %2929 = vmatprep.subr.mxu0 0.0
    %2930 = vmatpush2.xpose.msra.mxu0 0.0
    %2931 = vmatprep.subr.mxu0 0.0
    %2932 = vmatpush2.xpose.msra.mxu0 0.0
    %2933 = vmatprep.subr.mxu0 0.0
    %2934 = vmatpush2.xpose.msra.mxu0 0.0
    %2935 = vmatprep.subr.mxu0 0.0
    %2936 = vmatpush2.xpose.msra.mxu0 0.0
    %2937 = vmatprep.subr.mxu0 0.0
    %2938 = vmatpush2.xpose.msra.mxu0 0.0
    %2939 = vmatprep.mubr.f32.mxu0 0.0
    %2940 = vmatmul.mubr.f32.gmra.mxu0 %v2867
    %v2941 = vpop.f32.mrf.mxu0
    %v2942 = vadd.f32 %v232, %v2941
    %v2943 = vpop.f32.mrf.mxu0
    %2944 = vmatprep.mubr.f32.mxu0 0.0
    %2945 = vmatmul.mubr.f32.gmra.mxu0 %v2869
    %v2946 = vpop.f32.mrf.mxu0
    %v2947 = vadd.f32 %v233, %v2946
    %v2948 = vpop.f32.mrf.mxu0
    %2949 = vdwg.mxu0
    %v2950 = vsel %vm453, %v2527, 0
    %v2952 = vsel %vm453, %v2529, 0
    %v2954 = vsel %vm453, %v2559, 0
    %v2956 = vsel %vm453, %v2561, 0
    %2958 = vmatprep.subr.mxu0 0.0
    %2959 = vmatpush1.xpose.msra.mxu0 0.0
    %2960 = vmatprep.subr.mxu0 0.0
    %2961 = vmatpush1.xpose.msra.mxu0 0.0
    %2962 = vmatprep.subr.mxu0 0.0
    %2963 = vmatpush1.xpose.msra.mxu0 0.0
    %2964 = vmatprep.subr.mxu0 0.0
    %2965 = vmatpush1.xpose.msra.mxu0 0.0
    %2966 = vmatprep.subr.mxu0 0.0
    %2967 = vmatpush1.xpose.msra.mxu0 0.0
    %2968 = vmatprep.subr.mxu0 0.0
    %2969 = vmatpush1.xpose.msra.mxu0 0.0
    %2970 = vmatprep.subr.mxu0 0.0
    %2971 = vmatpush1.xpose.msra.mxu0 0.0
    %2972 = vmatprep.subr.mxu0 0.0
    %2973 = vmatpush1.xpose.msra.mxu0 0.0
    %2974 = vmatprep.subr.mxu0 0.0
    %2975 = vmatpush1.xpose.msra.mxu0 0.0
    %2976 = vmatprep.subr.mxu0 0.0
    %2977 = vmatpush1.xpose.msra.mxu0 0.0
    %2978 = vmatprep.subr.mxu0 0.0
    %2979 = vmatpush1.xpose.msra.mxu0 0.0
    %2980 = vmatprep.subr.mxu0 0.0
    %2981 = vmatpush1.xpose.msra.mxu0 0.0
    %2982 = vmatprep.subr.mxu0 0.0
    %2983 = vmatpush1.xpose.msra.mxu0 0.0
    %2984 = vmatprep.subr.mxu0 0.0
    %2985 = vmatpush1.xpose.msra.mxu0 0.0
    %2986 = vmatprep.subr.mxu0 0.0
    %2987 = vmatpush1.xpose.msra.mxu0 %v2956
    %2988 = vmatprep.subr.mxu0 0.0
    %2989 = vmatpush1.xpose.msra.mxu0 %v2954
    %2990 = vmatprep.subr.mxu0 0.0
    %2991 = vmatpush2.xpose.msra.mxu0 0.0
    %2992 = vmatprep.subr.mxu0 0.0
    %2993 = vmatpush2.xpose.msra.mxu0 0.0
    %2994 = vmatprep.subr.mxu0 0.0
    %2995 = vmatpush2.xpose.msra.mxu0 0.0
    %2996 = vmatprep.subr.mxu0 0.0
    %2997 = vmatpush2.xpose.msra.mxu0 0.0
    %2998 = vmatprep.subr.mxu0 0.0
    %2999 = vmatpush2.xpose.msra.mxu0 0.0
    %3000 = vmatprep.subr.mxu0 0.0
    %3001 = vmatpush2.xpose.msra.mxu0 0.0
    %3002 = vmatprep.subr.mxu0 0.0
    %3003 = vmatpush2.xpose.msra.mxu0 0.0
    %3004 = vmatprep.subr.mxu0 0.0
    %3005 = vmatpush2.xpose.msra.mxu0 0.0
    %3006 = vmatprep.subr.mxu0 0.0
    %3007 = vmatpush2.xpose.msra.mxu0 0.0
    %3008 = vmatprep.subr.mxu0 0.0
    %3009 = vmatpush2.xpose.msra.mxu0 0.0
    %3010 = vmatprep.subr.mxu0 0.0
    %3011 = vmatpush2.xpose.msra.mxu0 0.0
    %3012 = vmatprep.subr.mxu0 0.0
    %3013 = vmatpush2.xpose.msra.mxu0 0.0
    %3014 = vmatprep.subr.mxu0 0.0
    %3015 = vmatpush2.xpose.msra.mxu0 0.0
    %3016 = vmatprep.subr.mxu0 0.0
    %3017 = vmatpush2.xpose.msra.mxu0 0.0
    %3018 = vmatprep.subr.mxu0 0.0
    %3019 = vmatpush2.xpose.msra.mxu0 0.0
    %3020 = vmatprep.subr.mxu0 0.0
    %3021 = vmatpush2.xpose.msra.mxu0 0.0
    %3022 = vmatprep.mubr.f32.mxu0 0.0
    %3023 = vmatmul.mubr.f32.gmra.mxu0 %v2950
    %v3024 = vpop.f32.mrf.mxu0
    %v3025 = vadd.f32 %v232, %v3024
    %v3026 = vpop.f32.mrf.mxu0
    %3027 = vmatprep.mubr.f32.mxu0 0.0
    %3028 = vmatmul.mubr.f32.gmra.mxu0 %v2952
    %v3029 = vpop.f32.mrf.mxu0
    %v3030 = vadd.f32 %v233, %v3029
    %v3031 = vpop.f32.mrf.mxu0
    %3032 = vdwg.mxu0
    %v3033 = vsel %vm453, %v2531, 0
    %v3035 = vsel %vm453, %v2533, 0
    %v3037 = vsel %vm453, %v2563, 0
    %v3039 = vsel %vm453, %v2565, 0
    %3041 = vmatprep.subr.mxu0 0.0
    %3042 = vmatpush1.xpose.msra.mxu0 0.0
    %3043 = vmatprep.subr.mxu0 0.0
    %3044 = vmatpush1.xpose.msra.mxu0 0.0
    %3045 = vmatprep.subr.mxu0 0.0
    %3046 = vmatpush1.xpose.msra.mxu0 0.0
    %3047 = vmatprep.subr.mxu0 0.0
    %3048 = vmatpush1.xpose.msra.mxu0 0.0
    %3049 = vmatprep.subr.mxu0 0.0
    %3050 = vmatpush1.xpose.msra.mxu0 0.0
    %3051 = vmatprep.subr.mxu0 0.0
    %3052 = vmatpush1.xpose.msra.mxu0 0.0
    %3053 = vmatprep.subr.mxu0 0.0
    %3054 = vmatpush1.xpose.msra.mxu0 0.0
    %3055 = vmatprep.subr.mxu0 0.0
    %3056 = vmatpush1.xpose.msra.mxu0 0.0
    %3057 = vmatprep.subr.mxu0 0.0
    %3058 = vmatpush1.xpose.msra.mxu0 0.0
    %3059 = vmatprep.subr.mxu0 0.0
    %3060 = vmatpush1.xpose.msra.mxu0 0.0
    %3061 = vmatprep.subr.mxu0 0.0
    %3062 = vmatpush1.xpose.msra.mxu0 0.0
    %3063 = vmatprep.subr.mxu0 0.0
    %3064 = vmatpush1.xpose.msra.mxu0 0.0
    %3065 = vmatprep.subr.mxu0 0.0
    %3066 = vmatpush1.xpose.msra.mxu0 0.0
    %3067 = vmatprep.subr.mxu0 0.0
    %3068 = vmatpush1.xpose.msra.mxu0 0.0
    %3069 = vmatprep.subr.mxu0 0.0
    %3070 = vmatpush1.xpose.msra.mxu0 %v3039
    %3071 = vmatprep.subr.mxu0 0.0
    %3072 = vmatpush1.xpose.msra.mxu0 %v3037
    %3073 = vmatprep.subr.mxu0 0.0
    %3074 = vmatpush2.xpose.msra.mxu0 0.0
    %3075 = vmatprep.subr.mxu0 0.0
    %3076 = vmatpush2.xpose.msra.mxu0 0.0
    %3077 = vmatprep.subr.mxu0 0.0
    %3078 = vmatpush2.xpose.msra.mxu0 0.0
    %3079 = vmatprep.subr.mxu0 0.0
    %3080 = vmatpush2.xpose.msra.mxu0 0.0
    %3081 = vmatprep.subr.mxu0 0.0
    %3082 = vmatpush2.xpose.msra.mxu0 0.0
    %3083 = vmatprep.subr.mxu0 0.0
    %3084 = vmatpush2.xpose.msra.mxu0 0.0
    %3085 = vmatprep.subr.mxu0 0.0
    %3086 = vmatpush2.xpose.msra.mxu0 0.0
    %3087 = vmatprep.subr.mxu0 0.0
    %3088 = vmatpush2.xpose.msra.mxu0 0.0
    %3089 = vmatprep.subr.mxu0 0.0
    %3090 = vmatpush2.xpose.msra.mxu0 0.0
    %3091 = vmatprep.subr.mxu0 0.0
    %3092 = vmatpush2.xpose.msra.mxu0 0.0
    %3093 = vmatprep.subr.mxu0 0.0
    %3094 = vmatpush2.xpose.msra.mxu0 0.0
    %3095 = vmatprep.subr.mxu0 0.0
    %3096 = vmatpush2.xpose.msra.mxu0 0.0
    %3097 = vmatprep.subr.mxu0 0.0
    %3098 = vmatpush2.xpose.msra.mxu0 0.0
    %3099 = vmatprep.subr.mxu0 0.0
    %3100 = vmatpush2.xpose.msra.mxu0 0.0
    %3101 = vmatprep.subr.mxu0 0.0
    %3102 = vmatpush2.xpose.msra.mxu0 0.0
    %3103 = vmatprep.subr.mxu0 0.0
    %3104 = vmatpush2.xpose.msra.mxu0 0.0
    %3105 = vmatprep.mubr.f32.mxu0 0.0
    %3106 = vmatmul.mubr.f32.gmra.mxu0 %v3033
    %v3107 = vpop.f32.mrf.mxu0
    %v3108 = vadd.f32 %v232, %v3107
    %v3109 = vpop.f32.mrf.mxu0
    %3110 = vmatprep.mubr.f32.mxu0 0.0
    %3111 = vmatmul.mubr.f32.gmra.mxu0 %v3035
    %v3112 = vpop.f32.mrf.mxu0
    %v3113 = vadd.f32 %v233, %v3112
    %v3114 = vpop.f32.mrf.mxu0
    %3115 = vdwg.mxu0
    %v3116 = vsel %vm453, %v2535, 0
    %v3118 = vsel %vm453, %v2537, 0
    %v3120 = vsel %vm453, %v2567, 0
    %v3122 = vsel %vm453, %v2569, 0
    %3124 = vmatprep.subr.mxu0 0.0
    %3125 = vmatpush1.xpose.msra.mxu0 0.0
    %3126 = vmatprep.subr.mxu0 0.0
    %3127 = vmatpush1.xpose.msra.mxu0 0.0
    %3128 = vmatprep.subr.mxu0 0.0
    %3129 = vmatpush1.xpose.msra.mxu0 0.0
    %3130 = vmatprep.subr.mxu0 0.0
    %3131 = vmatpush1.xpose.msra.mxu0 0.0
    %3132 = vmatprep.subr.mxu0 0.0
    %3133 = vmatpush1.xpose.msra.mxu0 0.0
    %3134 = vmatprep.subr.mxu0 0.0
    %3135 = vmatpush1.xpose.msra.mxu0 0.0
    %3136 = vmatprep.subr.mxu0 0.0
    %3137 = vmatpush1.xpose.msra.mxu0 0.0
    %3138 = vmatprep.subr.mxu0 0.0
    %3139 = vmatpush1.xpose.msra.mxu0 0.0
    %3140 = vmatprep.subr.mxu0 0.0
    %3141 = vmatpush1.xpose.msra.mxu0 0.0
    %3142 = vmatprep.subr.mxu0 0.0
    %3143 = vmatpush1.xpose.msra.mxu0 0.0
    %3144 = vmatprep.subr.mxu0 0.0
    %3145 = vmatpush1.xpose.msra.mxu0 0.0
    %3146 = vmatprep.subr.mxu0 0.0
    %3147 = vmatpush1.xpose.msra.mxu0 0.0
    %3148 = vmatprep.subr.mxu0 0.0
    %3149 = vmatpush1.xpose.msra.mxu0 0.0
    %3150 = vmatprep.subr.mxu0 0.0
    %3151 = vmatpush1.xpose.msra.mxu0 0.0
    %3152 = vmatprep.subr.mxu0 0.0
    %3153 = vmatpush1.xpose.msra.mxu0 %v3122
    %3154 = vmatprep.subr.mxu0 0.0
    %3155 = vmatpush1.xpose.msra.mxu0 %v3120
    %3156 = vmatprep.subr.mxu0 0.0
    %3157 = vmatpush2.xpose.msra.mxu0 0.0
    %3158 = vmatprep.subr.mxu0 0.0
    %3159 = vmatpush2.xpose.msra.mxu0 0.0
    %3160 = vmatprep.subr.mxu0 0.0
    %3161 = vmatpush2.xpose.msra.mxu0 0.0
    %3162 = vmatprep.subr.mxu0 0.0
    %3163 = vmatpush2.xpose.msra.mxu0 0.0
    %3164 = vmatprep.subr.mxu0 0.0
    %3165 = vmatpush2.xpose.msra.mxu0 0.0
    %3166 = vmatprep.subr.mxu0 0.0
    %3167 = vmatpush2.xpose.msra.mxu0 0.0
    %3168 = vmatprep.subr.mxu0 0.0
    %3169 = vmatpush2.xpose.msra.mxu0 0.0
    %3170 = vmatprep.subr.mxu0 0.0
    %3171 = vmatpush2.xpose.msra.mxu0 0.0
    %3172 = vmatprep.subr.mxu0 0.0
    %3173 = vmatpush2.xpose.msra.mxu0 0.0
    %3174 = vmatprep.subr.mxu0 0.0
    %3175 = vmatpush2.xpose.msra.mxu0 0.0
    %3176 = vmatprep.subr.mxu0 0.0
    %3177 = vmatpush2.xpose.msra.mxu0 0.0
    %3178 = vmatprep.subr.mxu0 0.0
    %3179 = vmatpush2.xpose.msra.mxu0 0.0
    %3180 = vmatprep.subr.mxu0 0.0
    %3181 = vmatpush2.xpose.msra.mxu0 0.0
    %3182 = vmatprep.subr.mxu0 0.0
    %3183 = vmatpush2.xpose.msra.mxu0 0.0
    %3184 = vmatprep.subr.mxu0 0.0
    %3185 = vmatpush2.xpose.msra.mxu0 0.0
    %3186 = vmatprep.subr.mxu0 0.0
    %3187 = vmatpush2.xpose.msra.mxu0 0.0
    %3188 = vmatprep.mubr.f32.mxu0 0.0
    %3189 = vmatmul.mubr.f32.gmra.mxu0 %v3116
    %v3190 = vpop.f32.mrf.mxu0
    %v3191 = vadd.f32 %v232, %v3190
    %v3192 = vpop.f32.mrf.mxu0
    %3193 = vmatprep.mubr.f32.mxu0 0.0
    %3194 = vmatmul.mubr.f32.gmra.mxu0 %v3118
    %v3195 = vpop.f32.mrf.mxu0
    %v3196 = vadd.f32 %v233, %v3195
    %v3197 = vpop.f32.mrf.mxu0
    %3198 = vdwg.mxu0
    %v3199 = vsel %vm453, %v2539, 0
    %v3201 = vsel %vm453, %v2541, 0
    %v3203 = vsel %vm453, %v2571, 0
    %v3205 = vsel %vm453, %v2573, 0
    %3207 = vmatprep.subr.mxu0 0.0
    %3208 = vmatpush1.xpose.msra.mxu0 0.0
    %3209 = vmatprep.subr.mxu0 0.0
    %3210 = vmatpush1.xpose.msra.mxu0 0.0
    %3211 = vmatprep.subr.mxu0 0.0
    %3212 = vmatpush1.xpose.msra.mxu0 0.0
    %3213 = vmatprep.subr.mxu0 0.0
    %3214 = vmatpush1.xpose.msra.mxu0 0.0
    %3215 = vmatprep.subr.mxu0 0.0
    %3216 = vmatpush1.xpose.msra.mxu0 0.0
    %3217 = vmatprep.subr.mxu0 0.0
    %3218 = vmatpush1.xpose.msra.mxu0 0.0
    %3219 = vmatprep.subr.mxu0 0.0
    %3220 = vmatpush1.xpose.msra.mxu0 0.0
    %3221 = vmatprep.subr.mxu0 0.0
    %3222 = vmatpush1.xpose.msra.mxu0 0.0
    %3223 = vmatprep.subr.mxu0 0.0
    %3224 = vmatpush1.xpose.msra.mxu0 0.0
    %3225 = vmatprep.subr.mxu0 0.0
    %3226 = vmatpush1.xpose.msra.mxu0 0.0
    %3227 = vmatprep.subr.mxu0 0.0
    %3228 = vmatpush1.xpose.msra.mxu0 0.0
    %3229 = vmatprep.subr.mxu0 0.0
    %3230 = vmatpush1.xpose.msra.mxu0 0.0
    %3231 = vmatprep.subr.mxu0 0.0
    %3232 = vmatpush1.xpose.msra.mxu0 0.0
    %3233 = vmatprep.subr.mxu0 0.0
    %3234 = vmatpush1.xpose.msra.mxu0 0.0
    %3235 = vmatprep.subr.mxu0 0.0
    %3236 = vmatpush1.xpose.msra.mxu0 %v3205
    %3237 = vmatprep.subr.mxu0 0.0
    %3238 = vmatpush1.xpose.msra.mxu0 %v3203
    %3239 = vmatprep.subr.mxu0 0.0
    %3240 = vmatpush2.xpose.msra.mxu0 0.0
    %3241 = vmatprep.subr.mxu0 0.0
    %3242 = vmatpush2.xpose.msra.mxu0 0.0
    %3243 = vmatprep.subr.mxu0 0.0
    %3244 = vmatpush2.xpose.msra.mxu0 0.0
    %3245 = vmatprep.subr.mxu0 0.0
    %3246 = vmatpush2.xpose.msra.mxu0 0.0
    %3247 = vmatprep.subr.mxu0 0.0
    %3248 = vmatpush2.xpose.msra.mxu0 0.0
    %3249 = vmatprep.subr.mxu0 0.0
    %3250 = vmatpush2.xpose.msra.mxu0 0.0
    %3251 = vmatprep.subr.mxu0 0.0
    %3252 = vmatpush2.xpose.msra.mxu0 0.0
    %3253 = vmatprep.subr.mxu0 0.0
    %3254 = vmatpush2.xpose.msra.mxu0 0.0
    %3255 = vmatprep.subr.mxu0 0.0
    %3256 = vmatpush2.xpose.msra.mxu0 0.0
    %3257 = vmatprep.subr.mxu0 0.0
    %3258 = vmatpush2.xpose.msra.mxu0 0.0
    %3259 = vmatprep.subr.mxu0 0.0
    %3260 = vmatpush2.xpose.msra.mxu0 0.0
    %3261 = vmatprep.subr.mxu0 0.0
    %3262 = vmatpush2.xpose.msra.mxu0 0.0
    %3263 = vmatprep.subr.mxu0 0.0
    %3264 = vmatpush2.xpose.msra.mxu0 0.0
    %3265 = vmatprep.subr.mxu0 0.0
    %3266 = vmatpush2.xpose.msra.mxu0 0.0
    %3267 = vmatprep.subr.mxu0 0.0
    %3268 = vmatpush2.xpose.msra.mxu0 0.0
    %3269 = vmatprep.subr.mxu0 0.0
    %3270 = vmatpush2.xpose.msra.mxu0 0.0
    %3271 = vmatprep.mubr.f32.mxu0 0.0
    %3272 = vmatmul.mubr.f32.gmra.mxu0 %v3199
    %v3273 = vpop.f32.mrf.mxu0
    %v3274 = vadd.f32 %v232, %v3273
    %v3275 = vpop.f32.mrf.mxu0
    %3276 = vmatprep.mubr.f32.mxu0 0.0
    %3277 = vmatmul.mubr.f32.gmra.mxu0 %v3201
    %v3278 = vpop.f32.mrf.mxu0
    %v3279 = vadd.f32 %v233, %v3278
    %v3280 = vpop.f32.mrf.mxu0
    %3281 = vdwg.mxu0
    %v3282 = vsel %vm44, %v2693, -inf
    %3283 = vmax.xlane.f32.xlu0 %v3282
    %v3284 = vpop.xlane.xlu0 %3283
    %v3285 = vsel %vm44, %v2698, -inf
    %3286 = vmax.xlane.f32.xlu0 %v3285
    %v3287 = vpop.xlane.xlu0 %3286
    %v3288 = vsel %vm44, %v2776, -inf
    %3289 = vmax.xlane.f32.xlu0 %v3288
    %v3290 = vpop.xlane.xlu0 %3289
    %v3291 = vsel %vm44, %v2781, -inf
    %3292 = vmax.xlane.f32.xlu0 %v3291
    %v3293 = vpop.xlane.xlu0 %3292
    %v3294 = vsel %vm44, %v2859, -inf
    %3295 = vmax.xlane.f32.xlu0 %v3294
    %v3296 = vpop.xlane.xlu0 %3295
    %v3297 = vsel %vm44, %v2864, -inf
    %3298 = vmax.xlane.f32.xlu0 %v3297
    %v3299 = vpop.xlane.xlu0 %3298
    %v3300 = vsel %vm44, %v2942, -inf
    %3301 = vmax.xlane.f32.xlu0 %v3300
    %v3302 = vpop.xlane.xlu0 %3301
    %v3303 = vsel %vm44, %v2947, -inf
    %3304 = vmax.xlane.f32.xlu0 %v3303
    %v3305 = vpop.xlane.xlu0 %3304
    %v3306 = vsel %vm44, %v3025, -inf
    %3307 = vmax.xlane.f32.xlu0 %v3306
    %v3308 = vpop.xlane.xlu0 %3307
    %v3309 = vsel %vm44, %v3030, -inf
    %3310 = vmax.xlane.f32.xlu0 %v3309
    %v3311 = vpop.xlane.xlu0 %3310
    %v3312 = vsel %vm44, %v3108, -inf
    %3313 = vmax.xlane.f32.xlu0 %v3312
    %v3314 = vpop.xlane.xlu0 %3313
    %v3315 = vsel %vm44, %v3113, -inf
    %3316 = vmax.xlane.f32.xlu0 %v3315
    %v3317 = vpop.xlane.xlu0 %3316
    %v3318 = vsel %vm44, %v3191, -inf
    %3319 = vmax.xlane.f32.xlu0 %v3318
    %v3320 = vpop.xlane.xlu0 %3319
    %v3321 = vsel %vm44, %v3196, -inf
    %3322 = vmax.xlane.f32.xlu0 %v3321
    %v3323 = vpop.xlane.xlu0 %3322
    %v3324 = vsel %vm44, %v3274, -inf
    %3325 = vmax.xlane.f32.xlu0 %v3324
    %v3326 = vpop.xlane.xlu0 %3325
    %v3327 = vsel %vm44, %v3279, -inf
    %3328 = vmax.xlane.f32.xlu0 %v3327
    %v3329 = vpop.xlane.xlu0 %3328
    %v3330 = vsub.f32 %v2693, %v3284
    %v3331 = vsub.f32 %v2698, %v3287
    %v3332 = vsub.f32 %v2776, %v3290
    %v3333 = vsub.f32 %v2781, %v3293
    %v3334 = vsub.f32 %v2859, %v3296
    %v3335 = vsub.f32 %v2864, %v3299
    %v3336 = vsub.f32 %v2942, %v3302
    %v3337 = vsub.f32 %v2947, %v3305
    %v3338 = vsub.f32 %v3025, %v3308
    %v3339 = vsub.f32 %v3030, %v3311
    %v3340 = vsub.f32 %v3108, %v3314
    %v3341 = vsub.f32 %v3113, %v3317
    %v3342 = vsub.f32 %v3191, %v3320
    %v3343 = vsub.f32 %v3196, %v3323
    %v3344 = vsub.f32 %v3274, %v3326
    %v3345 = vsub.f32 %v3279, %v3329
    %v3346 = vmul.f32 %v3330, 1.442695
    %v3347 = vpow.pop %v3346
    %v3348 = vmul.f32 %v3331, 1.442695
    %v3349 = vpow.pop %v3348
    %v3350 = vmul.f32 %v3332, 1.442695
    %v3351 = vpow.pop %v3350
    %v3352 = vmul.f32 %v3333, 1.442695
    %v3353 = vpow.pop %v3352
    %v3354 = vmul.f32 %v3334, 1.442695
    %v3355 = vpow.pop %v3354
    %v3356 = vmul.f32 %v3335, 1.442695
    %v3357 = vpow.pop %v3356
    %v3358 = vmul.f32 %v3336, 1.442695
    %v3359 = vpow.pop %v3358
    %v3360 = vmul.f32 %v3337, 1.442695
    %v3361 = vpow.pop %v3360
    %v3362 = vmul.f32 %v3338, 1.442695
    %v3363 = vpow.pop %v3362
    %v3364 = vmul.f32 %v3339, 1.442695
    %v3365 = vpow.pop %v3364
    %v3366 = vmul.f32 %v3340, 1.442695
    %v3367 = vpow.pop %v3366
    %v3368 = vmul.f32 %v3341, 1.442695
    %v3369 = vpow.pop %v3368
    %v3370 = vmul.f32 %v3342, 1.442695
    %v3371 = vpow.pop %v3370
    %v3372 = vmul.f32 %v3343, 1.442695
    %v3373 = vpow.pop %v3372
    %v3374 = vmul.f32 %v3344, 1.442695
    %v3375 = vpow.pop %v3374
    %v3376 = vmul.f32 %v3345, 1.442695
    %v3377 = vpow.pop %v3376
    %v3378 = vsel %vm44, %v3347, 0.0
    %3379 = vadd.xlane.f32.xlu0 %v3378
    %v3380 = vpop.xlane.xlu0 %3379
    %v3381 = vsel %vm44, %v3349, 0.0
    %3382 = vadd.xlane.f32.xlu0 %v3381
    %v3383 = vpop.xlane.xlu0 %3382
    %v3384 = vsel %vm44, %v3351, 0.0
    %3385 = vadd.xlane.f32.xlu0 %v3384
    %v3386 = vpop.xlane.xlu0 %3385
    %v3387 = vsel %vm44, %v3353, 0.0
    %3388 = vadd.xlane.f32.xlu0 %v3387
    %v3389 = vpop.xlane.xlu0 %3388
    %v3390 = vsel %vm44, %v3355, 0.0
    %3391 = vadd.xlane.f32.xlu0 %v3390
    %v3392 = vpop.xlane.xlu0 %3391
    %v3393 = vsel %vm44, %v3357, 0.0
    %3394 = vadd.xlane.f32.xlu0 %v3393
    %v3395 = vpop.xlane.xlu0 %3394
    %v3396 = vsel %vm44, %v3359, 0.0
    %3397 = vadd.xlane.f32.xlu0 %v3396
    %v3398 = vpop.xlane.xlu0 %3397
    %v3399 = vsel %vm44, %v3361, 0.0
    %3400 = vadd.xlane.f32.xlu0 %v3399
    %v3401 = vpop.xlane.xlu0 %3400
    %v3402 = vsel %vm44, %v3363, 0.0
    %3403 = vadd.xlane.f32.xlu0 %v3402
    %v3404 = vpop.xlane.xlu0 %3403
    %v3405 = vsel %vm44, %v3365, 0.0
    %3406 = vadd.xlane.f32.xlu0 %v3405
    %v3407 = vpop.xlane.xlu0 %3406
    %v3408 = vsel %vm44, %v3367, 0.0
    %3409 = vadd.xlane.f32.xlu0 %v3408
    %v3410 = vpop.xlane.xlu0 %3409
    %v3411 = vsel %vm44, %v3369, 0.0
    %3412 = vadd.xlane.f32.xlu0 %v3411
    %v3413 = vpop.xlane.xlu0 %3412
    %v3414 = vsel %vm44, %v3371, 0.0
    %3415 = vadd.xlane.f32.xlu0 %v3414
    %v3416 = vpop.xlane.xlu0 %3415
    %v3417 = vsel %vm44, %v3373, 0.0
    %3418 = vadd.xlane.f32.xlu0 %v3417
    %v3419 = vpop.xlane.xlu0 %3418
    %v3420 = vsel %vm44, %v3375, 0.0
    %3421 = vadd.xlane.f32.xlu0 %v3420
    %v3422 = vpop.xlane.xlu0 %3421
    %v3423 = vsel %vm44, %v3377, 0.0
    %3424 = vadd.xlane.f32.xlu0 %v3423
    %v3425 = vpop.xlane.xlu0 %3424
    %v3426 = vrcp.pop %v3380
    %v3427 = vmul.f32 %v3347, %v3426
    %v3428 = vrcp.pop %v3383
    %v3429 = vmul.f32 %v3349, %v3428
    %v3430 = vrcp.pop %v3386
    %v3431 = vmul.f32 %v3351, %v3430
    %v3432 = vrcp.pop %v3389
    %v3433 = vmul.f32 %v3353, %v3432
    %v3434 = vrcp.pop %v3392
    %v3435 = vmul.f32 %v3355, %v3434
    %v3436 = vrcp.pop %v3395
    %v3437 = vmul.f32 %v3357, %v3436
    %v3438 = vrcp.pop %v3398
    %v3439 = vmul.f32 %v3359, %v3438
    %v3440 = vrcp.pop %v3401
    %v3441 = vmul.f32 %v3361, %v3440
    %v3442 = vrcp.pop %v3404
    %v3443 = vmul.f32 %v3363, %v3442
    %v3444 = vrcp.pop %v3407
    %v3445 = vmul.f32 %v3365, %v3444
    %v3446 = vrcp.pop %v3410
    %v3447 = vmul.f32 %v3367, %v3446
    %v3448 = vrcp.pop %v3413
    %v3449 = vmul.f32 %v3369, %v3448
    %v3450 = vrcp.pop %v3416
    %v3451 = vmul.f32 %v3371, %v3450
    %v3452 = vrcp.pop %v3419
    %v3453 = vmul.f32 %v3373, %v3452
    %v3454 = vrcp.pop %v3422
    %v3455 = vmul.f32 %v3375, %v3454
    %v3456 = vrcp.pop %v3425
    %v3457 = vmul.f32 %v3377, %v3456
    %v3459 = vsel %vm44, %v3427, 0
    %v3462 = vsel %vm44, %v3429, 0
    %3464 = vmatprep.subr.mxu0 0.0
    %3465 = vmatpush1.msra.mxu0 0.0
    %3466 = vmatprep.subr.mxu0 0.0
    %3467 = vmatpush1.msra.mxu0 0.0
    %3468 = vmatprep.subr.mxu0 0.0
    %3469 = vmatpush1.msra.mxu0 0.0
    %3470 = vmatprep.subr.mxu0 0.0
    %3471 = vmatpush1.msra.mxu0 0.0
    %3472 = vmatprep.subr.mxu0 0.0
    %3473 = vmatpush1.msra.mxu0 0.0
    %3474 = vmatprep.subr.mxu0 0.0
    %3475 = vmatpush1.msra.mxu0 0.0
    %3476 = vmatprep.subr.mxu0 0.0
    %3477 = vmatpush1.msra.mxu0 0.0
    %3478 = vmatprep.subr.mxu0 0.0
    %3479 = vmatpush1.msra.mxu0 0.0
    %3480 = vmatprep.subr.mxu0 0.0
    %3481 = vmatpush1.msra.mxu0 0.0
    %3482 = vmatprep.subr.mxu0 0.0
    %3483 = vmatpush1.msra.mxu0 0.0
    %3484 = vmatprep.subr.mxu0 0.0
    %3485 = vmatpush1.msra.mxu0 0.0
    %3486 = vmatprep.subr.mxu0 0.0
    %3487 = vmatpush1.msra.mxu0 0.0
    %3488 = vmatprep.subr.mxu0 0.0
    %3489 = vmatpush1.msra.mxu0 0.0
    %3490 = vmatprep.subr.mxu0 0.0
    %3491 = vmatpush1.msra.mxu0 0.0
    %3492 = vmatprep.subr.mxu0 0.0
    %3493 = vmatpush1.msra.mxu0 %v2510
    %3494 = vmatprep.subr.mxu0 0.0
    %3495 = vmatpush1.msra.mxu0 %v2504
    %3496 = vmatprep.subr.mxu0 0.0
    %3497 = vmatpush2.msra.mxu0 0.0
    %3498 = vmatprep.subr.mxu0 0.0
    %3499 = vmatpush2.msra.mxu0 0.0
    %3500 = vmatprep.subr.mxu0 0.0
    %3501 = vmatpush2.msra.mxu0 0.0
    %3502 = vmatprep.subr.mxu0 0.0
    %3503 = vmatpush2.msra.mxu0 0.0
    %3504 = vmatprep.subr.mxu0 0.0
    %3505 = vmatpush2.msra.mxu0 0.0
    %3506 = vmatprep.subr.mxu0 0.0
    %3507 = vmatpush2.msra.mxu0 0.0
    %3508 = vmatprep.subr.mxu0 0.0
    %3509 = vmatpush2.msra.mxu0 0.0
    %3510 = vmatprep.subr.mxu0 0.0
    %3511 = vmatpush2.msra.mxu0 0.0
    %3512 = vmatprep.subr.mxu0 0.0
    %3513 = vmatpush2.msra.mxu0 0.0
    %3514 = vmatprep.subr.mxu0 0.0
    %3515 = vmatpush2.msra.mxu0 0.0
    %3516 = vmatprep.subr.mxu0 0.0
    %3517 = vmatpush2.msra.mxu0 0.0
    %3518 = vmatprep.subr.mxu0 0.0
    %3519 = vmatpush2.msra.mxu0 0.0
    %3520 = vmatprep.subr.mxu0 0.0
    %3521 = vmatpush2.msra.mxu0 0.0
    %3522 = vmatprep.subr.mxu0 0.0
    %3523 = vmatpush2.msra.mxu0 0.0
    %3524 = vmatprep.subr.mxu0 0.0
    %3525 = vmatpush2.msra.mxu0 0.0
    %3526 = vmatprep.subr.mxu0 0.0
    %3527 = vmatpush2.msra.mxu0 0.0
    %3528 = vmatprep.mubr.f32.mxu0 0.0
    %3529 = vmatmul.mubr.f32.gmra.mxu0 %v3459
    %v3530 = vpop.f32.mrf.mxu0
    %v3531 = vadd.f32 0.0, %v3530
    %v3532 = vpop.f32.mrf.mxu0
    %3533 = vmatprep.mubr.f32.mxu0 0.0
    %3534 = vmatmul.mubr.f32.gmra.mxu0 %v3462
    %v3535 = vpop.f32.mrf.mxu0
    %v3536 = vadd.f32 0.0, %v3535
    %v3537 = vpop.f32.mrf.mxu0
    %3538 = vdwg.mxu0
    %v3540 = vsel %vm44, %v3431, 0
    %v3543 = vsel %vm44, %v3433, 0
    %3545 = vmatprep.subr.mxu0 0.0
    %3546 = vmatpush1.msra.mxu0 0.0
    %3547 = vmatprep.subr.mxu0 0.0
    %3548 = vmatpush1.msra.mxu0 0.0
    %3549 = vmatprep.subr.mxu0 0.0
    %3550 = vmatpush1.msra.mxu0 0.0
    %3551 = vmatprep.subr.mxu0 0.0
    %3552 = vmatpush1.msra.mxu0 0.0
    %3553 = vmatprep.subr.mxu0 0.0
    %3554 = vmatpush1.msra.mxu0 0.0
    %3555 = vmatprep.subr.mxu0 0.0
    %3556 = vmatpush1.msra.mxu0 0.0
    %3557 = vmatprep.subr.mxu0 0.0
    %3558 = vmatpush1.msra.mxu0 0.0
    %3559 = vmatprep.subr.mxu0 0.0
    %3560 = vmatpush1.msra.mxu0 0.0
    %3561 = vmatprep.subr.mxu0 0.0
    %3562 = vmatpush1.msra.mxu0 0.0
    %3563 = vmatprep.subr.mxu0 0.0
    %3564 = vmatpush1.msra.mxu0 0.0
    %3565 = vmatprep.subr.mxu0 0.0
    %3566 = vmatpush1.msra.mxu0 0.0
    %3567 = vmatprep.subr.mxu0 0.0
    %3568 = vmatpush1.msra.mxu0 0.0
    %3569 = vmatprep.subr.mxu0 0.0
    %3570 = vmatpush1.msra.mxu0 0.0
    %3571 = vmatprep.subr.mxu0 0.0
    %3572 = vmatpush1.msra.mxu0 0.0
    %3573 = vmatprep.subr.mxu0 0.0
    %3574 = vmatpush1.msra.mxu0 %v2579
    %3575 = vmatprep.subr.mxu0 0.0
    %3576 = vmatpush1.msra.mxu0 %v2577
    %3577 = vmatprep.subr.mxu0 0.0
    %3578 = vmatpush2.msra.mxu0 0.0
    %3579 = vmatprep.subr.mxu0 0.0
    %3580 = vmatpush2.msra.mxu0 0.0
    %3581 = vmatprep.subr.mxu0 0.0
    %3582 = vmatpush2.msra.mxu0 0.0
    %3583 = vmatprep.subr.mxu0 0.0
    %3584 = vmatpush2.msra.mxu0 0.0
    %3585 = vmatprep.subr.mxu0 0.0
    %3586 = vmatpush2.msra.mxu0 0.0
    %3587 = vmatprep.subr.mxu0 0.0
    %3588 = vmatpush2.msra.mxu0 0.0
    %3589 = vmatprep.subr.mxu0 0.0
    %3590 = vmatpush2.msra.mxu0 0.0
    %3591 = vmatprep.subr.mxu0 0.0
    %3592 = vmatpush2.msra.mxu0 0.0
    %3593 = vmatprep.subr.mxu0 0.0
    %3594 = vmatpush2.msra.mxu0 0.0
    %3595 = vmatprep.subr.mxu0 0.0
    %3596 = vmatpush2.msra.mxu0 0.0
    %3597 = vmatprep.subr.mxu0 0.0
    %3598 = vmatpush2.msra.mxu0 0.0
    %3599 = vmatprep.subr.mxu0 0.0
    %3600 = vmatpush2.msra.mxu0 0.0
    %3601 = vmatprep.subr.mxu0 0.0
    %3602 = vmatpush2.msra.mxu0 0.0
    %3603 = vmatprep.subr.mxu0 0.0
    %3604 = vmatpush2.msra.mxu0 0.0
    %3605 = vmatprep.subr.mxu0 0.0
    %3606 = vmatpush2.msra.mxu0 0.0
    %3607 = vmatprep.subr.mxu0 0.0
    %3608 = vmatpush2.msra.mxu0 0.0
    %3609 = vmatprep.mubr.f32.mxu0 0.0
    %3610 = vmatmul.mubr.f32.gmra.mxu0 %v3540
    %v3611 = vpop.f32.mrf.mxu0
    %v3612 = vadd.f32 0.0, %v3611
    %v3613 = vpop.f32.mrf.mxu0
    %3614 = vmatprep.mubr.f32.mxu0 0.0
    %3615 = vmatmul.mubr.f32.gmra.mxu0 %v3543
    %v3616 = vpop.f32.mrf.mxu0
    %v3617 = vadd.f32 0.0, %v3616
    %v3618 = vpop.f32.mrf.mxu0
    %3619 = vdwg.mxu0
    %v3621 = vsel %vm44, %v3435, 0
    %v3624 = vsel %vm44, %v3437, 0
    %3626 = vmatprep.subr.mxu0 0.0
    %3627 = vmatpush1.msra.mxu0 0.0
    %3628 = vmatprep.subr.mxu0 0.0
    %3629 = vmatpush1.msra.mxu0 0.0
    %3630 = vmatprep.subr.mxu0 0.0
    %3631 = vmatpush1.msra.mxu0 0.0
    %3632 = vmatprep.subr.mxu0 0.0
    %3633 = vmatpush1.msra.mxu0 0.0
    %3634 = vmatprep.subr.mxu0 0.0
    %3635 = vmatpush1.msra.mxu0 0.0
    %3636 = vmatprep.subr.mxu0 0.0
    %3637 = vmatpush1.msra.mxu0 0.0
    %3638 = vmatprep.subr.mxu0 0.0
    %3639 = vmatpush1.msra.mxu0 0.0
    %3640 = vmatprep.subr.mxu0 0.0
    %3641 = vmatpush1.msra.mxu0 0.0
    %3642 = vmatprep.subr.mxu0 0.0
    %3643 = vmatpush1.msra.mxu0 0.0
    %3644 = vmatprep.subr.mxu0 0.0
    %3645 = vmatpush1.msra.mxu0 0.0
    %3646 = vmatprep.subr.mxu0 0.0
    %3647 = vmatpush1.msra.mxu0 0.0
    %3648 = vmatprep.subr.mxu0 0.0
    %3649 = vmatpush1.msra.mxu0 0.0
    %3650 = vmatprep.subr.mxu0 0.0
    %3651 = vmatpush1.msra.mxu0 0.0
    %3652 = vmatprep.subr.mxu0 0.0
    %3653 = vmatpush1.msra.mxu0 0.0
    %3654 = vmatprep.subr.mxu0 0.0
    %3655 = vmatpush1.msra.mxu0 %v2585
    %3656 = vmatprep.subr.mxu0 0.0
    %3657 = vmatpush1.msra.mxu0 %v2583
    %3658 = vmatprep.subr.mxu0 0.0
    %3659 = vmatpush2.msra.mxu0 0.0
    %3660 = vmatprep.subr.mxu0 0.0
    %3661 = vmatpush2.msra.mxu0 0.0
    %3662 = vmatprep.subr.mxu0 0.0
    %3663 = vmatpush2.msra.mxu0 0.0
    %3664 = vmatprep.subr.mxu0 0.0
    %3665 = vmatpush2.msra.mxu0 0.0
    %3666 = vmatprep.subr.mxu0 0.0
    %3667 = vmatpush2.msra.mxu0 0.0
    %3668 = vmatprep.subr.mxu0 0.0
    %3669 = vmatpush2.msra.mxu0 0.0
    %3670 = vmatprep.subr.mxu0 0.0
    %3671 = vmatpush2.msra.mxu0 0.0
    %3672 = vmatprep.subr.mxu0 0.0
    %3673 = vmatpush2.msra.mxu0 0.0
    %3674 = vmatprep.subr.mxu0 0.0
    %3675 = vmatpush2.msra.mxu0 0.0
    %3676 = vmatprep.subr.mxu0 0.0
    %3677 = vmatpush2.msra.mxu0 0.0
    %3678 = vmatprep.subr.mxu0 0.0
    %3679 = vmatpush2.msra.mxu0 0.0
    %3680 = vmatprep.subr.mxu0 0.0
    %3681 = vmatpush2.msra.mxu0 0.0
    %3682 = vmatprep.subr.mxu0 0.0
    %3683 = vmatpush2.msra.mxu0 0.0
    %3684 = vmatprep.subr.mxu0 0.0
    %3685 = vmatpush2.msra.mxu0 0.0
    %3686 = vmatprep.subr.mxu0 0.0
    %3687 = vmatpush2.msra.mxu0 0.0
    %3688 = vmatprep.subr.mxu0 0.0
    %3689 = vmatpush2.msra.mxu0 0.0
    %3690 = vmatprep.mubr.f32.mxu0 0.0
    %3691 = vmatmul.mubr.f32.gmra.mxu0 %v3621
    %v3692 = vpop.f32.mrf.mxu0
    %v3693 = vadd.f32 0.0, %v3692
    %v3694 = vpop.f32.mrf.mxu0
    %3695 = vmatprep.mubr.f32.mxu0 0.0
    %3696 = vmatmul.mubr.f32.gmra.mxu0 %v3624
    %v3697 = vpop.f32.mrf.mxu0
    %v3698 = vadd.f32 0.0, %v3697
    %v3699 = vpop.f32.mrf.mxu0
    %3700 = vdwg.mxu0
    %v3702 = vsel %vm44, %v3439, 0
    %v3705 = vsel %vm44, %v3441, 0
    %3707 = vmatprep.subr.mxu0 0.0
    %3708 = vmatpush1.msra.mxu0 0.0
    %3709 = vmatprep.subr.mxu0 0.0
    %3710 = vmatpush1.msra.mxu0 0.0
    %3711 = vmatprep.subr.mxu0 0.0
    %3712 = vmatpush1.msra.mxu0 0.0
    %3713 = vmatprep.subr.mxu0 0.0
    %3714 = vmatpush1.msra.mxu0 0.0
    %3715 = vmatprep.subr.mxu0 0.0
    %3716 = vmatpush1.msra.mxu0 0.0
    %3717 = vmatprep.subr.mxu0 0.0
    %3718 = vmatpush1.msra.mxu0 0.0
    %3719 = vmatprep.subr.mxu0 0.0
    %3720 = vmatpush1.msra.mxu0 0.0
    %3721 = vmatprep.subr.mxu0 0.0
    %3722 = vmatpush1.msra.mxu0 0.0
    %3723 = vmatprep.subr.mxu0 0.0
    %3724 = vmatpush1.msra.mxu0 0.0
    %3725 = vmatprep.subr.mxu0 0.0
    %3726 = vmatpush1.msra.mxu0 0.0
    %3727 = vmatprep.subr.mxu0 0.0
    %3728 = vmatpush1.msra.mxu0 0.0
    %3729 = vmatprep.subr.mxu0 0.0
    %3730 = vmatpush1.msra.mxu0 0.0
    %3731 = vmatprep.subr.mxu0 0.0
    %3732 = vmatpush1.msra.mxu0 0.0
    %3733 = vmatprep.subr.mxu0 0.0
    %3734 = vmatpush1.msra.mxu0 0.0
    %3735 = vmatprep.subr.mxu0 0.0
    %3736 = vmatpush1.msra.mxu0 %v2591
    %3737 = vmatprep.subr.mxu0 0.0
    %3738 = vmatpush1.msra.mxu0 %v2589
    %3739 = vmatprep.subr.mxu0 0.0
    %3740 = vmatpush2.msra.mxu0 0.0
    %3741 = vmatprep.subr.mxu0 0.0
    %3742 = vmatpush2.msra.mxu0 0.0
    %3743 = vmatprep.subr.mxu0 0.0
    %3744 = vmatpush2.msra.mxu0 0.0
    %3745 = vmatprep.subr.mxu0 0.0
    %3746 = vmatpush2.msra.mxu0 0.0
    %3747 = vmatprep.subr.mxu0 0.0
    %3748 = vmatpush2.msra.mxu0 0.0
    %3749 = vmatprep.subr.mxu0 0.0
    %3750 = vmatpush2.msra.mxu0 0.0
    %3751 = vmatprep.subr.mxu0 0.0
    %3752 = vmatpush2.msra.mxu0 0.0
    %3753 = vmatprep.subr.mxu0 0.0
    %3754 = vmatpush2.msra.mxu0 0.0
    %3755 = vmatprep.subr.mxu0 0.0
    %3756 = vmatpush2.msra.mxu0 0.0
    %3757 = vmatprep.subr.mxu0 0.0
    %3758 = vmatpush2.msra.mxu0 0.0
    %3759 = vmatprep.subr.mxu0 0.0
    %3760 = vmatpush2.msra.mxu0 0.0
    %3761 = vmatprep.subr.mxu0 0.0
    %3762 = vmatpush2.msra.mxu0 0.0
    %3763 = vmatprep.subr.mxu0 0.0
    %3764 = vmatpush2.msra.mxu0 0.0
    %3765 = vmatprep.subr.mxu0 0.0
    %3766 = vmatpush2.msra.mxu0 0.0
    %3767 = vmatprep.subr.mxu0 0.0
    %3768 = vmatpush2.msra.mxu0 0.0
    %3769 = vmatprep.subr.mxu0 0.0
    %3770 = vmatpush2.msra.mxu0 0.0
    %3771 = vmatprep.mubr.f32.mxu0 0.0
    %3772 = vmatmul.mubr.f32.gmra.mxu0 %v3702
    %v3773 = vpop.f32.mrf.mxu0
    %v3774 = vadd.f32 0.0, %v3773
    %v3775 = vpop.f32.mrf.mxu0
    %3776 = vmatprep.mubr.f32.mxu0 0.0
    %3777 = vmatmul.mubr.f32.gmra.mxu0 %v3705
    %v3778 = vpop.f32.mrf.mxu0
    %v3779 = vadd.f32 0.0, %v3778
    %v3780 = vpop.f32.mrf.mxu0
    %3781 = vdwg.mxu0
    %v3783 = vsel %vm44, %v3443, 0
    %v3786 = vsel %vm44, %v3445, 0
    %3788 = vmatprep.subr.mxu0 0.0
    %3789 = vmatpush1.msra.mxu0 0.0
    %3790 = vmatprep.subr.mxu0 0.0
    %3791 = vmatpush1.msra.mxu0 0.0
    %3792 = vmatprep.subr.mxu0 0.0
    %3793 = vmatpush1.msra.mxu0 0.0
    %3794 = vmatprep.subr.mxu0 0.0
    %3795 = vmatpush1.msra.mxu0 0.0
    %3796 = vmatprep.subr.mxu0 0.0
    %3797 = vmatpush1.msra.mxu0 0.0
    %3798 = vmatprep.subr.mxu0 0.0
    %3799 = vmatpush1.msra.mxu0 0.0
    %3800 = vmatprep.subr.mxu0 0.0
    %3801 = vmatpush1.msra.mxu0 0.0
    %3802 = vmatprep.subr.mxu0 0.0
    %3803 = vmatpush1.msra.mxu0 0.0
    %3804 = vmatprep.subr.mxu0 0.0
    %3805 = vmatpush1.msra.mxu0 0.0
    %3806 = vmatprep.subr.mxu0 0.0
    %3807 = vmatpush1.msra.mxu0 0.0
    %3808 = vmatprep.subr.mxu0 0.0
    %3809 = vmatpush1.msra.mxu0 0.0
    %3810 = vmatprep.subr.mxu0 0.0
    %3811 = vmatpush1.msra.mxu0 0.0
    %3812 = vmatprep.subr.mxu0 0.0
    %3813 = vmatpush1.msra.mxu0 0.0
    %3814 = vmatprep.subr.mxu0 0.0
    %3815 = vmatpush1.msra.mxu0 0.0
    %3816 = vmatprep.subr.mxu0 0.0
    %3817 = vmatpush1.msra.mxu0 %v2597
    %3818 = vmatprep.subr.mxu0 0.0
    %3819 = vmatpush1.msra.mxu0 %v2595
    %3820 = vmatprep.subr.mxu0 0.0
    %3821 = vmatpush2.msra.mxu0 0.0
    %3822 = vmatprep.subr.mxu0 0.0
    %3823 = vmatpush2.msra.mxu0 0.0
    %3824 = vmatprep.subr.mxu0 0.0
    %3825 = vmatpush2.msra.mxu0 0.0
    %3826 = vmatprep.subr.mxu0 0.0
    %3827 = vmatpush2.msra.mxu0 0.0
    %3828 = vmatprep.subr.mxu0 0.0
    %3829 = vmatpush2.msra.mxu0 0.0
    %3830 = vmatprep.subr.mxu0 0.0
    %3831 = vmatpush2.msra.mxu0 0.0
    %3832 = vmatprep.subr.mxu0 0.0
    %3833 = vmatpush2.msra.mxu0 0.0
    %3834 = vmatprep.subr.mxu0 0.0
    %3835 = vmatpush2.msra.mxu0 0.0
    %3836 = vmatprep.subr.mxu0 0.0
    %3837 = vmatpush2.msra.mxu0 0.0
    %3838 = vmatprep.subr.mxu0 0.0
    %3839 = vmatpush2.msra.mxu0 0.0
    %3840 = vmatprep.subr.mxu0 0.0
    %3841 = vmatpush2.msra.mxu0 0.0
    %3842 = vmatprep.subr.mxu0 0.0
    %3843 = vmatpush2.msra.mxu0 0.0
    %3844 = vmatprep.subr.mxu0 0.0
    %3845 = vmatpush2.msra.mxu0 0.0
    %3846 = vmatprep.subr.mxu0 0.0
    %3847 = vmatpush2.msra.mxu0 0.0
    %3848 = vmatprep.subr.mxu0 0.0
    %3849 = vmatpush2.msra.mxu0 0.0
    %3850 = vmatprep.subr.mxu0 0.0
    %3851 = vmatpush2.msra.mxu0 0.0
    %3852 = vmatprep.mubr.f32.mxu0 0.0
    %3853 = vmatmul.mubr.f32.gmra.mxu0 %v3783
    %v3854 = vpop.f32.mrf.mxu0
    %v3855 = vadd.f32 0.0, %v3854
    %v3856 = vpop.f32.mrf.mxu0
    %3857 = vmatprep.mubr.f32.mxu0 0.0
    %3858 = vmatmul.mubr.f32.gmra.mxu0 %v3786
    %v3859 = vpop.f32.mrf.mxu0
    %v3860 = vadd.f32 0.0, %v3859
    %v3861 = vpop.f32.mrf.mxu0
    %3862 = vdwg.mxu0
    %v3864 = vsel %vm44, %v3447, 0
    %v3867 = vsel %vm44, %v3449, 0
    %3869 = vmatprep.subr.mxu0 0.0
    %3870 = vmatpush1.msra.mxu0 0.0
    %3871 = vmatprep.subr.mxu0 0.0
    %3872 = vmatpush1.msra.mxu0 0.0
    %3873 = vmatprep.subr.mxu0 0.0
    %3874 = vmatpush1.msra.mxu0 0.0
    %3875 = vmatprep.subr.mxu0 0.0
    %3876 = vmatpush1.msra.mxu0 0.0
    %3877 = vmatprep.subr.mxu0 0.0
    %3878 = vmatpush1.msra.mxu0 0.0
    %3879 = vmatprep.subr.mxu0 0.0
    %3880 = vmatpush1.msra.mxu0 0.0
    %3881 = vmatprep.subr.mxu0 0.0
    %3882 = vmatpush1.msra.mxu0 0.0
    %3883 = vmatprep.subr.mxu0 0.0
    %3884 = vmatpush1.msra.mxu0 0.0
    %3885 = vmatprep.subr.mxu0 0.0
    %3886 = vmatpush1.msra.mxu0 0.0
    %3887 = vmatprep.subr.mxu0 0.0
    %3888 = vmatpush1.msra.mxu0 0.0
    %3889 = vmatprep.subr.mxu0 0.0
    %3890 = vmatpush1.msra.mxu0 0.0
    %3891 = vmatprep.subr.mxu0 0.0
    %3892 = vmatpush1.msra.mxu0 0.0
    %3893 = vmatprep.subr.mxu0 0.0
    %3894 = vmatpush1.msra.mxu0 0.0
    %3895 = vmatprep.subr.mxu0 0.0
    %3896 = vmatpush1.msra.mxu0 0.0
    %3897 = vmatprep.subr.mxu0 0.0
    %3898 = vmatpush1.msra.mxu0 %v2603
    %3899 = vmatprep.subr.mxu0 0.0
    %3900 = vmatpush1.msra.mxu0 %v2601
    %3901 = vmatprep.subr.mxu0 0.0
    %3902 = vmatpush2.msra.mxu0 0.0
    %3903 = vmatprep.subr.mxu0 0.0
    %3904 = vmatpush2.msra.mxu0 0.0
    %3905 = vmatprep.subr.mxu0 0.0
    %3906 = vmatpush2.msra.mxu0 0.0
    %3907 = vmatprep.subr.mxu0 0.0
    %3908 = vmatpush2.msra.mxu0 0.0
    %3909 = vmatprep.subr.mxu0 0.0
    %3910 = vmatpush2.msra.mxu0 0.0
    %3911 = vmatprep.subr.mxu0 0.0
    %3912 = vmatpush2.msra.mxu0 0.0
    %3913 = vmatprep.subr.mxu0 0.0
    %3914 = vmatpush2.msra.mxu0 0.0
    %3915 = vmatprep.subr.mxu0 0.0
    %3916 = vmatpush2.msra.mxu0 0.0
    %3917 = vmatprep.subr.mxu0 0.0
    %3918 = vmatpush2.msra.mxu0 0.0
    %3919 = vmatprep.subr.mxu0 0.0
    %3920 = vmatpush2.msra.mxu0 0.0
    %3921 = vmatprep.subr.mxu0 0.0
    %3922 = vmatpush2.msra.mxu0 0.0
    %3923 = vmatprep.subr.mxu0 0.0
    %3924 = vmatpush2.msra.mxu0 0.0
    %3925 = vmatprep.subr.mxu0 0.0
    %3926 = vmatpush2.msra.mxu0 0.0
    %3927 = vmatprep.subr.mxu0 0.0
    %3928 = vmatpush2.msra.mxu0 0.0
    %3929 = vmatprep.subr.mxu0 0.0
    %3930 = vmatpush2.msra.mxu0 0.0
    %3931 = vmatprep.subr.mxu0 0.0
    %3932 = vmatpush2.msra.mxu0 0.0
    %3933 = vmatprep.mubr.f32.mxu0 0.0
    %3934 = vmatmul.mubr.f32.gmra.mxu0 %v3864
    %v3935 = vpop.f32.mrf.mxu0
    %v3936 = vadd.f32 0.0, %v3935
    %v3937 = vpop.f32.mrf.mxu0
    %3938 = vmatprep.mubr.f32.mxu0 0.0
    %3939 = vmatmul.mubr.f32.gmra.mxu0 %v3867
    %v3940 = vpop.f32.mrf.mxu0
    %v3941 = vadd.f32 0.0, %v3940
    %v3942 = vpop.f32.mrf.mxu0
    %3943 = vdwg.mxu0
    %v3945 = vsel %vm44, %v3451, 0
    %v3948 = vsel %vm44, %v3453, 0
    %3950 = vmatprep.subr.mxu0 0.0
    %3951 = vmatpush1.msra.mxu0 0.0
    %3952 = vmatprep.subr.mxu0 0.0
    %3953 = vmatpush1.msra.mxu0 0.0
    %3954 = vmatprep.subr.mxu0 0.0
    %3955 = vmatpush1.msra.mxu0 0.0
    %3956 = vmatprep.subr.mxu0 0.0
    %3957 = vmatpush1.msra.mxu0 0.0
    %3958 = vmatprep.subr.mxu0 0.0
    %3959 = vmatpush1.msra.mxu0 0.0
    %3960 = vmatprep.subr.mxu0 0.0
    %3961 = vmatpush1.msra.mxu0 0.0
    %3962 = vmatprep.subr.mxu0 0.0
    %3963 = vmatpush1.msra.mxu0 0.0
    %3964 = vmatprep.subr.mxu0 0.0
    %3965 = vmatpush1.msra.mxu0 0.0
    %3966 = vmatprep.subr.mxu0 0.0
    %3967 = vmatpush1.msra.mxu0 0.0
    %3968 = vmatprep.subr.mxu0 0.0
    %3969 = vmatpush1.msra.mxu0 0.0
    %3970 = vmatprep.subr.mxu0 0.0
    %3971 = vmatpush1.msra.mxu0 0.0
    %3972 = vmatprep.subr.mxu0 0.0
    %3973 = vmatpush1.msra.mxu0 0.0
    %3974 = vmatprep.subr.mxu0 0.0
    %3975 = vmatpush1.msra.mxu0 0.0
    %3976 = vmatprep.subr.mxu0 0.0
    %3977 = vmatpush1.msra.mxu0 0.0
    %3978 = vmatprep.subr.mxu0 0.0
    %3979 = vmatpush1.msra.mxu0 %v2609
    %3980 = vmatprep.subr.mxu0 0.0
    %3981 = vmatpush1.msra.mxu0 %v2607
    %3982 = vmatprep.subr.mxu0 0.0
    %3983 = vmatpush2.msra.mxu0 0.0
    %3984 = vmatprep.subr.mxu0 0.0
    %3985 = vmatpush2.msra.mxu0 0.0
    %3986 = vmatprep.subr.mxu0 0.0
    %3987 = vmatpush2.msra.mxu0 0.0
    %3988 = vmatprep.subr.mxu0 0.0
    %3989 = vmatpush2.msra.mxu0 0.0
    %3990 = vmatprep.subr.mxu0 0.0
    %3991 = vmatpush2.msra.mxu0 0.0
    %3992 = vmatprep.subr.mxu0 0.0
    %3993 = vmatpush2.msra.mxu0 0.0
    %3994 = vmatprep.subr.mxu0 0.0
    %3995 = vmatpush2.msra.mxu0 0.0
    %3996 = vmatprep.subr.mxu0 0.0
    %3997 = vmatpush2.msra.mxu0 0.0
    %3998 = vmatprep.subr.mxu0 0.0
    %3999 = vmatpush2.msra.mxu0 0.0
    %4000 = vmatprep.subr.mxu0 0.0
    %4001 = vmatpush2.msra.mxu0 0.0
    %4002 = vmatprep.subr.mxu0 0.0
    %4003 = vmatpush2.msra.mxu0 0.0
    %4004 = vmatprep.subr.mxu0 0.0
    %4005 = vmatpush2.msra.mxu0 0.0
    %4006 = vmatprep.subr.mxu0 0.0
    %4007 = vmatpush2.msra.mxu0 0.0
    %4008 = vmatprep.subr.mxu0 0.0
    %4009 = vmatpush2.msra.mxu0 0.0
    %4010 = vmatprep.subr.mxu0 0.0
    %4011 = vmatpush2.msra.mxu0 0.0
    %4012 = vmatprep.subr.mxu0 0.0
    %4013 = vmatpush2.msra.mxu0 0.0
    %4014 = vmatprep.mubr.f32.mxu0 0.0
    %4015 = vmatmul.mubr.f32.gmra.mxu0 %v3945
    %v4016 = vpop.f32.mrf.mxu0
    %v4017 = vadd.f32 0.0, %v4016
    %v4018 = vpop.f32.mrf.mxu0
    %4019 = vmatprep.mubr.f32.mxu0 0.0
    %4020 = vmatmul.mubr.f32.gmra.mxu0 %v3948
    %v4021 = vpop.f32.mrf.mxu0
    %v4022 = vadd.f32 0.0, %v4021
    %v4023 = vpop.f32.mrf.mxu0
    %4024 = vdwg.mxu0
    %v4026 = vsel %vm44, %v3455, 0
    %v4029 = vsel %vm44, %v3457, 0
    %4031 = vmatprep.subr.mxu0 0.0
    %4032 = vmatpush1.msra.mxu0 0.0
    %4033 = vmatprep.subr.mxu0 0.0
    %4034 = vmatpush1.msra.mxu0 0.0
    %4035 = vmatprep.subr.mxu0 0.0
    %4036 = vmatpush1.msra.mxu0 0.0
    %4037 = vmatprep.subr.mxu0 0.0
    %4038 = vmatpush1.msra.mxu0 0.0
    %4039 = vmatprep.subr.mxu0 0.0
    %4040 = vmatpush1.msra.mxu0 0.0
    %4041 = vmatprep.subr.mxu0 0.0
    %4042 = vmatpush1.msra.mxu0 0.0
    %4043 = vmatprep.subr.mxu0 0.0
    %4044 = vmatpush1.msra.mxu0 0.0
    %4045 = vmatprep.subr.mxu0 0.0
    %4046 = vmatpush1.msra.mxu0 0.0
    %4047 = vmatprep.subr.mxu0 0.0
    %4048 = vmatpush1.msra.mxu0 0.0
    %4049 = vmatprep.subr.mxu0 0.0
    %4050 = vmatpush1.msra.mxu0 0.0
    %4051 = vmatprep.subr.mxu0 0.0
    %4052 = vmatpush1.msra.mxu0 0.0
    %4053 = vmatprep.subr.mxu0 0.0
    %4054 = vmatpush1.msra.mxu0 0.0
    %4055 = vmatprep.subr.mxu0 0.0
    %4056 = vmatpush1.msra.mxu0 0.0
    %4057 = vmatprep.subr.mxu0 0.0
    %4058 = vmatpush1.msra.mxu0 0.0
    %4059 = vmatprep.subr.mxu0 0.0
    %4060 = vmatpush1.msra.mxu0 %v2615
    %4061 = vmatprep.subr.mxu0 0.0
    %4062 = vmatpush1.msra.mxu0 %v2613
    %4063 = vmatprep.subr.mxu0 0.0
    %4064 = vmatpush2.msra.mxu0 0.0
    %4065 = vmatprep.subr.mxu0 0.0
    %4066 = vmatpush2.msra.mxu0 0.0
    %4067 = vmatprep.subr.mxu0 0.0
    %4068 = vmatpush2.msra.mxu0 0.0
    %4069 = vmatprep.subr.mxu0 0.0
    %4070 = vmatpush2.msra.mxu0 0.0
    %4071 = vmatprep.subr.mxu0 0.0
    %4072 = vmatpush2.msra.mxu0 0.0
    %4073 = vmatprep.subr.mxu0 0.0
    %4074 = vmatpush2.msra.mxu0 0.0
    %4075 = vmatprep.subr.mxu0 0.0
    %4076 = vmatpush2.msra.mxu0 0.0
    %4077 = vmatprep.subr.mxu0 0.0
    %4078 = vmatpush2.msra.mxu0 0.0
    %4079 = vmatprep.subr.mxu0 0.0
    %4080 = vmatpush2.msra.mxu0 0.0
    %4081 = vmatprep.subr.mxu0 0.0
    %4082 = vmatpush2.msra.mxu0 0.0
    %4083 = vmatprep.subr.mxu0 0.0
    %4084 = vmatpush2.msra.mxu0 0.0
    %4085 = vmatprep.subr.mxu0 0.0
    %4086 = vmatpush2.msra.mxu0 0.0
    %4087 = vmatprep.subr.mxu0 0.0
    %4088 = vmatpush2.msra.mxu0 0.0
    %4089 = vmatprep.subr.mxu0 0.0
    %4090 = vmatpush2.msra.mxu0 0.0
    %4091 = vmatprep.subr.mxu0 0.0
    %4092 = vmatpush2.msra.mxu0 0.0
    %4093 = vmatprep.subr.mxu0 0.0
    %4094 = vmatpush2.msra.mxu0 0.0
    %4095 = vmatprep.mubr.f32.mxu0 0.0
    %4096 = vmatmul.mubr.f32.gmra.mxu0 %v4026
    %v4097 = vpop.f32.mrf.mxu0
    %v4098 = vadd.f32 0.0, %v4097
    %v4099 = vpop.f32.mrf.mxu0
    %4100 = vmatprep.mubr.f32.mxu0 0.0
    %4101 = vmatmul.mubr.f32.gmra.mxu0 %v4029
    %v4102 = vpop.f32.mrf.mxu0
    %v4103 = vadd.f32 0.0, %v4102
    %v4104 = vpop.f32.mrf.mxu0
    %4105 = vdwg.mxu0
    %4108 = vrot.lane.b32.xlu0 %v3612, 8
    %v4109 = vpop.permute.xlu0 %4108
    %4110 = vrot.lane.b32.xlu0 %v3617, 8
    %v4111 = vpop.permute.xlu0 %4110
    %4116 = vrot.lane.b32.xlu0 %v3693, 16
    %v4117 = vpop.permute.xlu0 %4116
    %4118 = vrot.lane.b32.xlu0 %v3698, 16
    %v4119 = vpop.permute.xlu0 %4118
    %4124 = vrot.lane.b32.xlu0 %v3774, 24
    %v4125 = vpop.permute.xlu0 %4124
    %4126 = vrot.lane.b32.xlu0 %v3779, 24
    %v4127 = vpop.permute.xlu0 %4126
    %4132 = vrot.lane.b32.xlu0 %v3855, 32
    %v4133 = vpop.permute.xlu0 %4132
    %4134 = vrot.lane.b32.xlu0 %v3860, 32
    %v4135 = vpop.permute.xlu0 %4134
    %4140 = vrot.lane.b32.xlu0 %v3936, 40
    %v4141 = vpop.permute.xlu0 %4140
    %4142 = vrot.lane.b32.xlu0 %v3941, 40
    %v4143 = vpop.permute.xlu0 %4142
    %4148 = vrot.lane.b32.xlu0 %v4017, 48
    %v4149 = vpop.permute.xlu0 %4148
    %4150 = vrot.lane.b32.xlu0 %v4022, 48
    %v4151 = vpop.permute.xlu0 %4150
    %4156 = vrot.lane.b32.xlu0 %v4098, 56
    %v4157 = vpop.permute.xlu0 %4156
    %4158 = vrot.lane.b32.xlu0 %v4103, 56
    %v4159 = vpop.permute.xlu0 %4158
    %v4162 = vsel %vm453, %v3531, %v4109
    %v4163 = vsel %vm453, %v3536, %v4111
    %v4164 = vsel %vm44, %v4162, %v4117
    %v4165 = vsel %vm44, %v4163, %v4119
    %v4166 = vsel %vm2002, %v4164, %v4125
    %v4167 = vsel %vm2002, %v4165, %v4127
    %v4168 = vsel %vm2005, %v4166, %v4133
    %v4169 = vsel %vm2005, %v4167, %v4135
    %v4170 = vsel %vm2008, %v4168, %v4141
    %v4171 = vsel %vm2008, %v4169, %v4143
    %v4172 = vsel %vm2011, %v4170, %v4149
    %v4173 = vsel %vm2011, %v4171, %v4151
    %v4174 = vsel %vm2014, %v4172, %v4157
    %v4175 = vsel %vm2014, %v4173, %v4159
    %v4176 = vld [vmem:[#allocation2 + $0x420] sm:$0xff]
    %v4177 = vld [vmem:[#allocation2 + $0x430] sm:$0xff]
    %v4178 = vld [vmem:[#allocation2 + $0x440] sm:$0xff]
    %v4179 = vld [vmem:[#allocation2 + $0x450] sm:$0xff]
    %v4180 = vld [vmem:[#allocation2 + $0x460] sm:$0xff]
    %v4181 = vld [vmem:[#allocation2 + $0x470] sm:$0xff]
    %v4182 = vld [vmem:[#allocation2 + $0x480] sm:$0xff]
    %v4183 = vld [vmem:[#allocation2 + $0x490] sm:$0xff]
    %v4184 = vld [vmem:[#allocation2 + $0x7b2] ss:$0 sm:$0xff]
    %v4186 = vsel %vm263, %v4174, 0
    %v4189 = vsel %vm263, %v4175, 0
    %4191 = vmatprep.subr.mxu0 0.0
    %4192 = vmatpush1.msra.mxu0 0.0
    %4193 = vmatprep.subr.mxu0 0.0
    %4194 = vmatpush1.msra.mxu0 0.0
    %4195 = vmatprep.subr.mxu0 0.0
    %4196 = vmatpush1.msra.mxu0 0.0
    %4197 = vmatprep.subr.mxu0 0.0
    %4198 = vmatpush1.msra.mxu0 0.0
    %4199 = vmatprep.subr.mxu0 0.0
    %4200 = vmatpush1.msra.mxu0 0.0
    %4201 = vmatprep.subr.mxu0 0.0
    %4202 = vmatpush1.msra.mxu0 0.0
    %4203 = vmatprep.subr.mxu0 0.0
    %4204 = vmatpush1.msra.mxu0 0.0
    %4205 = vmatprep.subr.mxu0 0.0
    %4206 = vmatpush1.msra.mxu0 0.0
    %4207 = vmatprep.subr.mxu0 0.0
    %4208 = vmatpush1.msra.mxu0 %v4183
    %4209 = vmatprep.subr.mxu0 0.0
    %4210 = vmatpush1.msra.mxu0 %v4182
    %4211 = vmatprep.subr.mxu0 0.0
    %4212 = vmatpush1.msra.mxu0 %v4181
    %4213 = vmatprep.subr.mxu0 0.0
    %4214 = vmatpush1.msra.mxu0 %v4180
    %4215 = vmatprep.subr.mxu0 0.0
    %4216 = vmatpush1.msra.mxu0 %v4179
    %4217 = vmatprep.subr.mxu0 0.0
    %4218 = vmatpush1.msra.mxu0 %v4178
    %4219 = vmatprep.subr.mxu0 0.0
    %4220 = vmatpush1.msra.mxu0 %v4177
    %4221 = vmatprep.subr.mxu0 0.0
    %4222 = vmatpush1.msra.mxu0 %v4176
    %4223 = vmatprep.subr.mxu0 0.0
    %4224 = vmatpush2.msra.mxu0 0.0
    %4225 = vmatprep.subr.mxu0 0.0
    %4226 = vmatpush2.msra.mxu0 0.0
    %4227 = vmatprep.subr.mxu0 0.0
    %4228 = vmatpush2.msra.mxu0 0.0
    %4229 = vmatprep.subr.mxu0 0.0
    %4230 = vmatpush2.msra.mxu0 0.0
    %4231 = vmatprep.subr.mxu0 0.0
    %4232 = vmatpush2.msra.mxu0 0.0
    %4233 = vmatprep.subr.mxu0 0.0
    %4234 = vmatpush2.msra.mxu0 0.0
    %4235 = vmatprep.subr.mxu0 0.0
    %4236 = vmatpush2.msra.mxu0 0.0
    %4237 = vmatprep.subr.mxu0 0.0
    %4238 = vmatpush2.msra.mxu0 0.0
    %4239 = vmatprep.subr.mxu0 0.0
    %4240 = vmatpush2.msra.mxu0 0.0
    %4241 = vmatprep.subr.mxu0 0.0
    %4242 = vmatpush2.msra.mxu0 0.0
    %4243 = vmatprep.subr.mxu0 0.0
    %4244 = vmatpush2.msra.mxu0 0.0
    %4245 = vmatprep.subr.mxu0 0.0
    %4246 = vmatpush2.msra.mxu0 0.0
    %4247 = vmatprep.subr.mxu0 0.0
    %4248 = vmatpush2.msra.mxu0 0.0
    %4249 = vmatprep.subr.mxu0 0.0
    %4250 = vmatpush2.msra.mxu0 0.0
    %4251 = vmatprep.subr.mxu0 0.0
    %4252 = vmatpush2.msra.mxu0 0.0
    %4253 = vmatprep.subr.mxu0 0.0
    %4254 = vmatpush2.msra.mxu0 0.0
    %4255 = vmatprep.mubr.f32.mxu0 0.0
    %4256 = vmatmul.mubr.f32.gmra.mxu0 %v4186
    %v4257 = vpop.f32.mrf.mxu0
    %v4258 = vadd.f32 %v4184, %v4257
    %v4259 = vpop.f32.mrf.mxu0
    %4260 = vmatprep.mubr.f32.mxu0 0.0
    %4261 = vmatmul.mubr.f32.gmra.mxu0 %v4189
    %v4262 = vpop.f32.mrf.mxu0
    %v4263 = vadd.f32 %v4184, %v4262
    %v4264 = vpop.f32.mrf.mxu0
    %4265 = vdwg.mxu0
    %v4266 = vadd.f32 %v2398, %v4258
    %v4267 = vadd.f32 %v2399, %v4263
    %v4268 = vld [vmem:[#allocation2 + $0x7b3] ss:$0 sm:$0xff]
    %v4269 = vld [vmem:[#allocation2 + $0x7b4] ss:$0 sm:$0xff]
    %v4270 = vsel %vm263, %v4266, 0.0
    %4271 = vadd.xlane.f32.xlu0 %v4270
    %v4272 = vpop.xlane.xlu0 %4271
    %v4273 = vsel %vm263, %v4267, 0.0
    %4274 = vadd.xlane.f32.xlu0 %v4273
    %v4275 = vpop.xlane.xlu0 %4274
    %v4276 = vmul.f32 %v4272, %v2117
    %v4277 = vmul.f32 %v4275, %v2117
    %v4278 = vsub.f32 %v4266, %v4276
    %v4279 = vsub.f32 %v4267, %v4277
    %v4280 = vmul.f32 %v4278, %v4278
    %v4281 = vmul.f32 %v4279, %v4279
    %v4282 = vsel %vm263, %v4280, 0.0
    %4283 = vadd.xlane.f32.xlu0 %v4282
    %v4284 = vpop.xlane.xlu0 %4283
    %v4285 = vsel %vm263, %v4281, 0.0
    %4286 = vadd.xlane.f32.xlu0 %v4285
    %v4287 = vpop.xlane.xlu0 %4286
    %v4288 = vmul.f32 %v4284, %v2117
    %v4289 = vmul.f32 %v4287, %v2117
    %v4290 = vadd.f32 %v4288, 1e-05
    %v4291 = vadd.f32 %v4289, 1e-05
    %v4292 = vrsqrt.pop %v4290
    %v4293 = vrsqrt.pop %v4291
    %v4294 = vmul.f32 %v4278, %v4292
    %v4295 = vmul.f32 %v4279, %v4293
    %v4296 = vmul.f32 %v4294, %v4268
    %v4297 = vmul.f32 %v4295, %v4268
    %v4298 = vadd.f32 %v4296, %v4269
    %v4299 = vadd.f32 %v4297, %v4269
    %v4300 = vld [vmem:[#allocation2 + $0x4a0] sm:$0xff]
    %v4301 = vld [vmem:[#allocation2 + $0x4a8] sm:$0xff]
    %v4302 = vld [vmem:[#allocation2 + $0x4b0] sm:$0xff]
    %v4303 = vld [vmem:[#allocation2 + $0x4b8] sm:$0xff]
    %v4304 = vld [vmem:[#allocation2 + $0x4c0] sm:$0xff]
    %v4305 = vld [vmem:[#allocation2 + $0x4c8] sm:$0xff]
    %v4306 = vld [vmem:[#allocation2 + $0x4d0] sm:$0xff]
    %v4307 = vld [vmem:[#allocation2 + $0x4d8] sm:$0xff]
    %v4308 = vld [vmem:[#allocation2 + $0x4e0] sm:$0xff]
    %v4309 = vld [vmem:[#allocation2 + $0x4e8] sm:$0xff]
    %v4310 = vld [vmem:[#allocation2 + $0x4f0] sm:$0xff]
    %v4311 = vld [vmem:[#allocation2 + $0x4f8] sm:$0xff]
    %v4312 = vld [vmem:[#allocation2 + $0x500] sm:$0xff]
    %v4313 = vld [vmem:[#allocation2 + $0x508] sm:$0xff]
    %v4314 = vld [vmem:[#allocation2 + $0x510] sm:$0xff]
    %v4315 = vld [vmem:[#allocation2 + $0x518] sm:$0xff]
    %s4316 = scalar_lea.vmem [#allocation2], 1969
    %v4317 = vld [vmem:[%s4316] ss:$8 sm:$0x3]
    %v4319 = vlaneseq
    %v4320 = vshrl.u32 %v4319, 7
    %v4321 = vsub.s32 0, %v4320
    %v4322 = vrot.slane %v4317, %v4321
    %v4323 = vlaneseq
    %v4324 = vshrl.u32 %v4323, 7
    %v4325 = vsub.s32 1, %v4324
    %v4326 = vrot.slane %v4317, %v4325
    %v4330 = vsel %vm263, %v4298, 0
    %v4333 = vsel %vm263, %v4299, 0
    %4335 = vmatprep.subr.mxu0 0.0
    %4336 = vmatpush1.msra.mxu0 0.0
    %4337 = vmatprep.subr.mxu0 0.0
    %4338 = vmatpush1.msra.mxu0 0.0
    %4339 = vmatprep.subr.mxu0 0.0
    %4340 = vmatpush1.msra.mxu0 0.0
    %4341 = vmatprep.subr.mxu0 0.0
    %4342 = vmatpush1.msra.mxu0 0.0
    %4343 = vmatprep.subr.mxu0 0.0
    %4344 = vmatpush1.msra.mxu0 0.0
    %4345 = vmatprep.subr.mxu0 0.0
    %4346 = vmatpush1.msra.mxu0 0.0
    %4347 = vmatprep.subr.mxu0 0.0
    %4348 = vmatpush1.msra.mxu0 0.0
    %4349 = vmatprep.subr.mxu0 0.0
    %4350 = vmatpush1.msra.mxu0 0.0
    %4351 = vmatprep.subr.mxu0 %v4315
    %4352 = vmatpush1.msra.mxu0 %v4314
    %4353 = vmatprep.subr.mxu0 %v4313
    %4354 = vmatpush1.msra.mxu0 %v4312
    %4355 = vmatprep.subr.mxu0 %v4311
    %4356 = vmatpush1.msra.mxu0 %v4310
    %4357 = vmatprep.subr.mxu0 %v4309
    %4358 = vmatpush1.msra.mxu0 %v4308
    %4359 = vmatprep.subr.mxu0 %v4307
    %4360 = vmatpush1.msra.mxu0 %v4306
    %4361 = vmatprep.subr.mxu0 %v4305
    %4362 = vmatpush1.msra.mxu0 %v4304
    %4363 = vmatprep.subr.mxu0 %v4303
    %4364 = vmatpush1.msra.mxu0 %v4302
    %4365 = vmatprep.subr.mxu0 %v4301
    %4366 = vmatpush1.msra.mxu0 %v4300
    %4367 = vmatprep.subr.mxu0 0.0
    %4368 = vmatpush2.msra.mxu0 0.0
    %4369 = vmatprep.subr.mxu0 0.0
    %4370 = vmatpush2.msra.mxu0 0.0
    %4371 = vmatprep.subr.mxu0 0.0
    %4372 = vmatpush2.msra.mxu0 0.0
    %4373 = vmatprep.subr.mxu0 0.0
    %4374 = vmatpush2.msra.mxu0 0.0
    %4375 = vmatprep.subr.mxu0 0.0
    %4376 = vmatpush2.msra.mxu0 0.0
    %4377 = vmatprep.subr.mxu0 0.0
    %4378 = vmatpush2.msra.mxu0 0.0
    %4379 = vmatprep.subr.mxu0 0.0
    %4380 = vmatpush2.msra.mxu0 0.0
    %4381 = vmatprep.subr.mxu0 0.0
    %4382 = vmatpush2.msra.mxu0 0.0
    %4383 = vmatprep.subr.mxu0 0.0
    %4384 = vmatpush2.msra.mxu0 0.0
    %4385 = vmatprep.subr.mxu0 0.0
    %4386 = vmatpush2.msra.mxu0 0.0
    %4387 = vmatprep.subr.mxu0 0.0
    %4388 = vmatpush2.msra.mxu0 0.0
    %4389 = vmatprep.subr.mxu0 0.0
    %4390 = vmatpush2.msra.mxu0 0.0
    %4391 = vmatprep.subr.mxu0 0.0
    %4392 = vmatpush2.msra.mxu0 0.0
    %4393 = vmatprep.subr.mxu0 0.0
    %4394 = vmatpush2.msra.mxu0 0.0
    %4395 = vmatprep.subr.mxu0 0.0
    %4396 = vmatpush2.msra.mxu0 0.0
    %4397 = vmatprep.subr.mxu0 0.0
    %4398 = vmatpush2.msra.mxu0 0.0
    %4399 = vmatprep.mubr.f32.mxu0 0.0
    %4400 = vmatmul.mubr.f32.gmra.mxu0 %v4330
    %v4401 = vpop.f32.mrf.mxu0
    %v4402 = vadd.f32 %v4322, %v4401
    %v4403 = vpop.f32.mrf.mxu0
    %v4404 = vadd.f32 %v4326, %v4403
    %4405 = vmatprep.mubr.f32.mxu0 0.0
    %4406 = vmatmul.mubr.f32.gmra.mxu0 %v4333
    %v4407 = vpop.f32.mrf.mxu0
    %v4408 = vadd.f32 %v4322, %v4407
    %v4409 = vpop.f32.mrf.mxu0
    %v4410 = vadd.f32 %v4326, %v4409
    %4411 = vdwg.mxu0
    %v4412 = vmax.f32 %v4402, 0.0
    %v4413 = vmax.f32 %v4404, 0.0
    %v4414 = vmax.f32 %v4408, 0.0
    %v4415 = vmax.f32 %v4410, 0.0
    %v4416 = vld [vmem:[#allocation2 + $0x520] sm:$0xff]
    %v4417 = vld [vmem:[#allocation2 + $0x530] sm:$0xff]
    %v4418 = vld [vmem:[#allocation2 + $0x540] sm:$0xff]
    %v4419 = vld [vmem:[#allocation2 + $0x550] sm:$0xff]
    %v4420 = vld [vmem:[#allocation2 + $0x560] sm:$0xff]
    %v4421 = vld [vmem:[#allocation2 + $0x570] sm:$0xff]
    %v4422 = vld [vmem:[#allocation2 + $0x580] sm:$0xff]
    %v4423 = vld [vmem:[#allocation2 + $0x590] sm:$0xff]
    %v4424 = vld [vmem:[#allocation2 + $0x5a0] sm:$0xff]
    %v4425 = vld [vmem:[#allocation2 + $0x5b0] sm:$0xff]
    %v4426 = vld [vmem:[#allocation2 + $0x5c0] sm:$0xff]
    %v4427 = vld [vmem:[#allocation2 + $0x5d0] sm:$0xff]
    %v4428 = vld [vmem:[#allocation2 + $0x5e0] sm:$0xff]
    %v4429 = vld [vmem:[#allocation2 + $0x5f0] sm:$0xff]
    %v4430 = vld [vmem:[#allocation2 + $0x600] sm:$0xff]
    %v4431 = vld [vmem:[#allocation2 + $0x610] sm:$0xff]
    %v4432 = vld [vmem:[#allocation2 + $0x620] sm:$0xff]
    %v4433 = vld [vmem:[#allocation2 + $0x630] sm:$0xff]
    %v4434 = vld [vmem:[#allocation2 + $0x640] sm:$0xff]
    %v4435 = vld [vmem:[#allocation2 + $0x650] sm:$0xff]
    %v4436 = vld [vmem:[#allocation2 + $0x660] sm:$0xff]
    %v4437 = vld [vmem:[#allocation2 + $0x670] sm:$0xff]
    %v4438 = vld [vmem:[#allocation2 + $0x680] sm:$0xff]
    %v4439 = vld [vmem:[#allocation2 + $0x690] sm:$0xff]
    %v4440 = vld [vmem:[#allocation2 + $0x6a0] sm:$0xff]
    %v4441 = vld [vmem:[#allocation2 + $0x6b0] sm:$0xff]
    %v4442 = vld [vmem:[#allocation2 + $0x6c0] sm:$0xff]
    %v4443 = vld [vmem:[#allocation2 + $0x6d0] sm:$0xff]
    %v4444 = vld [vmem:[#allocation2 + $0x6e0] sm:$0xff]
    %v4445 = vld [vmem:[#allocation2 + $0x6f0] sm:$0xff]
    %v4446 = vld [vmem:[#allocation2 + $0x700] sm:$0xff]
    %v4447 = vld [vmem:[#allocation2 + $0x710] sm:$0xff]
    %v4448 = vld [vmem:[#allocation2 + $0x7b5] ss:$0 sm:$0xff]
    %4449 = vmatprep.subr.mxu0 0.0
    %4450 = vmatpush1.msra.mxu0 %v4431
    %4451 = vmatprep.subr.mxu0 0.0
    %4452 = vmatpush1.msra.mxu0 %v4430
    %4453 = vmatprep.subr.mxu0 0.0
    %4454 = vmatpush1.msra.mxu0 %v4429
    %4455 = vmatprep.subr.mxu0 0.0
    %4456 = vmatpush1.msra.mxu0 %v4428
    %4457 = vmatprep.subr.mxu0 0.0
    %4458 = vmatpush1.msra.mxu0 %v4427
    %4459 = vmatprep.subr.mxu0 0.0
    %4460 = vmatpush1.msra.mxu0 %v4426
    %4461 = vmatprep.subr.mxu0 0.0
    %4462 = vmatpush1.msra.mxu0 %v4425
    %4463 = vmatprep.subr.mxu0 0.0
    %4464 = vmatpush1.msra.mxu0 %v4424
    %4465 = vmatprep.subr.mxu0 0.0
    %4466 = vmatpush1.msra.mxu0 %v4423
    %4467 = vmatprep.subr.mxu0 0.0
    %4468 = vmatpush1.msra.mxu0 %v4422
    %4469 = vmatprep.subr.mxu0 0.0
    %4470 = vmatpush1.msra.mxu0 %v4421
    %4471 = vmatprep.subr.mxu0 0.0
    %4472 = vmatpush1.msra.mxu0 %v4420
    %4473 = vmatprep.subr.mxu0 0.0
    %4474 = vmatpush1.msra.mxu0 %v4419
    %4475 = vmatprep.subr.mxu0 0.0
    %4476 = vmatpush1.msra.mxu0 %v4418
    %4477 = vmatprep.subr.mxu0 0.0
    %4478 = vmatpush1.msra.mxu0 %v4417
    %4479 = vmatprep.subr.mxu0 0.0
    %4480 = vmatpush1.msra.mxu0 %v4416
    %4481 = vmatprep.subr.mxu0 0.0
    %4482 = vmatpush2.msra.mxu0 %v4447
    %4483 = vmatprep.subr.mxu0 0.0
    %4484 = vmatpush2.msra.mxu0 %v4446
    %4485 = vmatprep.subr.mxu0 0.0
    %4486 = vmatpush2.msra.mxu0 %v4445
    %4487 = vmatprep.subr.mxu0 0.0
    %4488 = vmatpush2.msra.mxu0 %v4444
    %4489 = vmatprep.subr.mxu0 0.0
    %4490 = vmatpush2.msra.mxu0 %v4443
    %4491 = vmatprep.subr.mxu0 0.0
    %4492 = vmatpush2.msra.mxu0 %v4442
    %4493 = vmatprep.subr.mxu0 0.0
    %4494 = vmatpush2.msra.mxu0 %v4441
    %4495 = vmatprep.subr.mxu0 0.0
    %4496 = vmatpush2.msra.mxu0 %v4440
    %4497 = vmatprep.subr.mxu0 0.0
    %4498 = vmatpush2.msra.mxu0 %v4439
    %4499 = vmatprep.subr.mxu0 0.0
    %4500 = vmatpush2.msra.mxu0 %v4438
    %4501 = vmatprep.subr.mxu0 0.0
    %4502 = vmatpush2.msra.mxu0 %v4437
    %4503 = vmatprep.subr.mxu0 0.0
    %4504 = vmatpush2.msra.mxu0 %v4436
    %4505 = vmatprep.subr.mxu0 0.0
    %4506 = vmatpush2.msra.mxu0 %v4435
    %4507 = vmatprep.subr.mxu0 0.0
    %4508 = vmatpush2.msra.mxu0 %v4434
    %4509 = vmatprep.subr.mxu0 0.0
    %4510 = vmatpush2.msra.mxu0 %v4433
    %4511 = vmatprep.subr.mxu0 0.0
    %4512 = vmatpush2.msra.mxu0 %v4432
    %4513 = vmatprep.mubr.f32.mxu0 %v4413
    %4514 = vmatmul.mubr.f32.gmra.mxu0 %v4412
    %v4515 = vpop.f32.mrf.mxu0
    %v4516 = vadd.f32 %v4448, %v4515
    %v4517 = vpop.f32.mrf.mxu0
    %4518 = vmatprep.mubr.f32.mxu0 %v4415
    %4519 = vmatmul.mubr.f32.gmra.mxu0 %v4414
    %v4520 = vpop.f32.mrf.mxu0
    %v4521 = vadd.f32 %v4448, %v4520
    %v4522 = vpop.f32.mrf.mxu0
    %4523 = vdwg.mxu0
    %v4524 = vadd.f32 %v4298, %v4516
    %v4525 = vadd.f32 %v4299, %v4521
    %v4526 = vld [vmem:[#allocation2 + $0x7b6] ss:$0 sm:$0xff]
    %v4527 = vld [vmem:[#allocation2 + $0x7b7] ss:$0 sm:$0xff]
    %v4528 = vsel %vm263, %v4524, 0.0
    %4529 = vadd.xlane.f32.xlu0 %v4528
    %v4530 = vpop.xlane.xlu0 %4529
    %v4531 = vsel %vm263, %v4525, 0.0
    %4532 = vadd.xlane.f32.xlu0 %v4531
    %v4533 = vpop.xlane.xlu0 %4532
    %v4534 = vmul.f32 %v4530, %v2117
    %v4535 = vmul.f32 %v4533, %v2117
    %v4536 = vsub.f32 %v4524, %v4534
    %v4537 = vsub.f32 %v4525, %v4535
    %v4538 = vmul.f32 %v4536, %v4536
    %v4539 = vmul.f32 %v4537, %v4537
    %v4540 = vsel %vm263, %v4538, 0.0
    %4541 = vadd.xlane.f32.xlu0 %v4540
    %v4542 = vpop.xlane.xlu0 %4541
    %v4543 = vsel %vm263, %v4539, 0.0
    %4544 = vadd.xlane.f32.xlu0 %v4543
    %v4545 = vpop.xlane.xlu0 %4544
    %v4546 = vmul.f32 %v4542, %v2117
    %v4547 = vmul.f32 %v4545, %v2117
    %v4548 = vadd.f32 %v4546, 1e-05
    %v4549 = vadd.f32 %v4547, 1e-05
    %v4550 = vrsqrt.pop %v4548
    %v4551 = vrsqrt.pop %v4549
    %v4552 = vmul.f32 %v4536, %v4550
    %v4553 = vmul.f32 %v4537, %v4551
    %v4554 = vmul.f32 %v4552, %v4526
    %v4555 = vmul.f32 %v4553, %v4526
    %v4556 = vadd.f32 %v4554, %v4527
    %v4557 = vadd.f32 %v4555, %v4527
    %vm4558 = vcmp.eq.f32.partialorder %v221, %v212
    %v4559 = vsel %vm4558, 1, 0
    %v4560 = vcvt.s32.f32 %v4559
    %v4561 = vmul.f32 %v4560, %v207
    %vm4562 = vcmask 123904
    %v4563 = vsel %vm4562, %v4561, 0.0
    %4564 = vadd.xlane.f32.xlu0 %v4563
    %v4565 = vpop.xlane.xlu0 %4564
    %v4567 = vsel %vm44, %v4561, 0
    %4569 = vmatprep.subr.mxu0 0.0
    %4570 = vmatpush1.msra.mxu0 0.0
    %4571 = vmatprep.subr.mxu0 0.0
    %4572 = vmatpush1.msra.mxu0 0.0
    %4573 = vmatprep.subr.mxu0 0.0
    %4574 = vmatpush1.msra.mxu0 0.0
    %4575 = vmatprep.subr.mxu0 0.0
    %4576 = vmatpush1.msra.mxu0 0.0
    %4577 = vmatprep.subr.mxu0 0.0
    %4578 = vmatpush1.msra.mxu0 0.0
    %4579 = vmatprep.subr.mxu0 0.0
    %4580 = vmatpush1.msra.mxu0 0.0
    %4581 = vmatprep.subr.mxu0 0.0
    %4582 = vmatpush1.msra.mxu0 0.0
    %4583 = vmatprep.subr.mxu0 0.0
    %4584 = vmatpush1.msra.mxu0 0.0
    %4585 = vmatprep.subr.mxu0 0.0
    %4586 = vmatpush1.msra.mxu0 0.0
    %4587 = vmatprep.subr.mxu0 0.0
    %4588 = vmatpush1.msra.mxu0 0.0
    %4589 = vmatprep.subr.mxu0 0.0
    %4590 = vmatpush1.msra.mxu0 0.0
    %4591 = vmatprep.subr.mxu0 0.0
    %4592 = vmatpush1.msra.mxu0 0.0
    %4593 = vmatprep.subr.mxu0 0.0
    %4594 = vmatpush1.msra.mxu0 0.0
    %4595 = vmatprep.subr.mxu0 0.0
    %4596 = vmatpush1.msra.mxu0 0.0
    %4597 = vmatprep.subr.mxu0 0.0
    %4598 = vmatpush1.msra.mxu0 %v4557
    %4599 = vmatprep.subr.mxu0 0.0
    %4600 = vmatpush1.msra.mxu0 %v4556
    %4601 = vmatprep.subr.mxu0 0.0
    %4602 = vmatpush2.msra.mxu0 0.0
    %4603 = vmatprep.subr.mxu0 0.0
    %4604 = vmatpush2.msra.mxu0 0.0
    %4605 = vmatprep.subr.mxu0 0.0
    %4606 = vmatpush2.msra.mxu0 0.0
    %4607 = vmatprep.subr.mxu0 0.0
    %4608 = vmatpush2.msra.mxu0 0.0
    %4609 = vmatprep.subr.mxu0 0.0
    %4610 = vmatpush2.msra.mxu0 0.0
    %4611 = vmatprep.subr.mxu0 0.0
    %4612 = vmatpush2.msra.mxu0 0.0
    %4613 = vmatprep.subr.mxu0 0.0
    %4614 = vmatpush2.msra.mxu0 0.0
    %4615 = vmatprep.subr.mxu0 0.0
    %4616 = vmatpush2.msra.mxu0 0.0
    %4617 = vmatprep.subr.mxu0 0.0
    %4618 = vmatpush2.msra.mxu0 0.0
    %4619 = vmatprep.subr.mxu0 0.0
    %4620 = vmatpush2.msra.mxu0 0.0
    %4621 = vmatprep.subr.mxu0 0.0
    %4622 = vmatpush2.msra.mxu0 0.0
    %4623 = vmatprep.subr.mxu0 0.0
    %4624 = vmatpush2.msra.mxu0 0.0
    %4625 = vmatprep.subr.mxu0 0.0
    %4626 = vmatpush2.msra.mxu0 0.0
    %4627 = vmatprep.subr.mxu0 0.0
    %4628 = vmatpush2.msra.mxu0 0.0
    %4629 = vmatprep.subr.mxu0 0.0
    %4630 = vmatpush2.msra.mxu0 0.0
    %4631 = vmatprep.subr.mxu0 0.0
    %4632 = vmatpush2.msra.mxu0 0.0
    %4633 = vmatprep.mubr.f32.mxu0 0.0
    %4634 = vmatmul.mubr.f32.gmra.mxu0 %v4567
    %v4635 = vpop.f32.mrf.mxu0
    %v4636 = vadd.f32 0.0, %v4635
    %v4637 = vpop.f32.mrf.mxu0
    %4638 = vdwg.mxu0
    %v4639 = vadd.f32 %v4565, 1e-09
    %v4640 = vrcp.pop %v4639
    %v4641 = vmul.f32 %v4636, %v4640
    %v4642 = vld [vmem:[#allocation2 + $0x720] sm:$0xff]
    %v4643 = vld [vmem:[#allocation2 + $0x730] sm:$0xff]
    %v4644 = vld [vmem:[#allocation2 + $0x740] sm:$0xff]
    %v4645 = vld [vmem:[#allocation2 + $0x750] sm:$0xff]
    %v4646 = vld [vmem:[#allocation2 + $0x760] sm:$0xff]
    %v4647 = vld [vmem:[#allocation2 + $0x770] sm:$0xff]
    %v4648 = vld [vmem:[#allocation2 + $0x780] sm:$0xff]
    %v4649 = vld [vmem:[#allocation2 + $0x790] sm:$0xff]
    %v4650 = vld [vmem:[#allocation2 + $0x7c0] ss:$0 sm:$0xff]
    %v4652 = vsel %vm263, %v4641, 0
    %4654 = vmatprep.subr.mxu0 0.0
    %4655 = vmatpush1.msra.mxu0 0.0
    %4656 = vmatprep.subr.mxu0 0.0
    %4657 = vmatpush1.msra.mxu0 0.0
    %4658 = vmatprep.subr.mxu0 0.0
    %4659 = vmatpush1.msra.mxu0 0.0
    %4660 = vmatprep.subr.mxu0 0.0
    %4661 = vmatpush1.msra.mxu0 0.0
    %4662 = vmatprep.subr.mxu0 0.0
    %4663 = vmatpush1.msra.mxu0 0.0
    %4664 = vmatprep.subr.mxu0 0.0
    %4665 = vmatpush1.msra.mxu0 0.0
    %4666 = vmatprep.subr.mxu0 0.0
    %4667 = vmatpush1.msra.mxu0 0.0
    %4668 = vmatprep.subr.mxu0 0.0
    %4669 = vmatpush1.msra.mxu0 0.0
    %4670 = vmatprep.subr.mxu0 0.0
    %4671 = vmatpush1.msra.mxu0 %v4649
    %4672 = vmatprep.subr.mxu0 0.0
    %4673 = vmatpush1.msra.mxu0 %v4648
    %4674 = vmatprep.subr.mxu0 0.0
    %4675 = vmatpush1.msra.mxu0 %v4647
    %4676 = vmatprep.subr.mxu0 0.0
    %4677 = vmatpush1.msra.mxu0 %v4646
    %4678 = vmatprep.subr.mxu0 0.0
    %4679 = vmatpush1.msra.mxu0 %v4645
    %4680 = vmatprep.subr.mxu0 0.0
    %4681 = vmatpush1.msra.mxu0 %v4644
    %4682 = vmatprep.subr.mxu0 0.0
    %4683 = vmatpush1.msra.mxu0 %v4643
    %4684 = vmatprep.subr.mxu0 0.0
    %4685 = vmatpush1.msra.mxu0 %v4642
    %4686 = vmatprep.subr.mxu0 0.0
    %4687 = vmatpush2.msra.mxu0 0.0
    %4688 = vmatprep.subr.mxu0 0.0
    %4689 = vmatpush2.msra.mxu0 0.0
    %4690 = vmatprep.subr.mxu0 0.0
    %4691 = vmatpush2.msra.mxu0 0.0
    %4692 = vmatprep.subr.mxu0 0.0
    %4693 = vmatpush2.msra.mxu0 0.0
    %4694 = vmatprep.subr.mxu0 0.0
    %4695 = vmatpush2.msra.mxu0 0.0
    %4696 = vmatprep.subr.mxu0 0.0
    %4697 = vmatpush2.msra.mxu0 0.0
    %4698 = vmatprep.subr.mxu0 0.0
    %4699 = vmatpush2.msra.mxu0 0.0
    %4700 = vmatprep.subr.mxu0 0.0
    %4701 = vmatpush2.msra.mxu0 0.0
    %4702 = vmatprep.subr.mxu0 0.0
    %4703 = vmatpush2.msra.mxu0 0.0
    %4704 = vmatprep.subr.mxu0 0.0
    %4705 = vmatpush2.msra.mxu0 0.0
    %4706 = vmatprep.subr.mxu0 0.0
    %4707 = vmatpush2.msra.mxu0 0.0
    %4708 = vmatprep.subr.mxu0 0.0
    %4709 = vmatpush2.msra.mxu0 0.0
    %4710 = vmatprep.subr.mxu0 0.0
    %4711 = vmatpush2.msra.mxu0 0.0
    %4712 = vmatprep.subr.mxu0 0.0
    %4713 = vmatpush2.msra.mxu0 0.0
    %4714 = vmatprep.subr.mxu0 0.0
    %4715 = vmatpush2.msra.mxu0 0.0
    %4716 = vmatprep.subr.mxu0 0.0
    %4717 = vmatpush2.msra.mxu0 0.0
    %4718 = vmatprep.mubr.f32.mxu0 0.0
    %4719 = vmatmul.mubr.f32.gmra.mxu0 %v4652
    %v4720 = vpop.f32.mrf.mxu0
    %v4721 = vadd.f32 %v4650, %v4720
    %v4722 = vpop.f32.mrf.mxu0
    %4723 = vdwg.mxu0
    %4724 = vst [vmem:[#allocation5] sm:$0x3] %v4721
    // Predicated region
    $region14: #{model_forward.1} parent=1 // pred_check
      _
    $region15: #{model_forward.1} parent=1 // pred_check_branch
      %4726 = sbr.rel (0) target = $region17
    $region16: #{model_forward.1} parent=1 // pred_region
      %s4728 = ssub.s32 32, 32
      %4729 = vsyncadd [#allocation4], %s4728
      %s4731 = sshll.u32 [#allocation5], 4
      %s4732 = int_to_ptr.vmem [resolvable:$true] %s4731
      %4734 = dma.vmem_to_hbm [thread:$0]  %s4732, 32, %s2, [#allocation4]
    $region17: #{model_forward.1} parent=1 // pred_fallthru
      _
    // Predicated region
    $region18: #{model_forward.1} parent=1 // pred_check
      _
    $region19: #{model_forward.1} parent=1 // pred_check_branch
      %4736 = sbr.rel (0) target = $region21
    $region20: #{model_forward.1} parent=1 // pred_region
      %4737 = dma.done [#allocation4], 32
    $region21: #{model_forward.1} parent=1 // pred_fallthru
      _
    %4738 = vsyncpa [#allocation3], 1
    %4739 = vsyncpa [#allocation4], 1

</llo_original>
